<compile_context>
chip_gen: v7x
topology: tpu7x:2x2x1
jax: 0.10.0
libtpu: 0.0.40
codegen_flags: <defaults>
</compile_context>

<pallas_src>
import functools

import jax
import jax.numpy as jnp
from jax.experimental import pallas as pl
from jax.experimental.pallas import tpu as pltpu


def _copy_attn_kernel(
    cb_ref,        # (BB, LpP, E)   bf16  padded body embeddings
    xprev_ref,     # (BB*TP, E)     bf16  embedding(names[i-1]) per decode step
    w1s_ref,       # (W1*E, K1)     bf16  conv1 taps stacked (im2col weights)
    w2s_ref,       # (W2*K1, K2)    bf16  conv2 taps stacked
    wih_ref,       # (E, 3*K2)      bf16  fused GRU input weights (r|z|n)
    whead_ref,     # (3*W3, K2)     f32   head conv weights (alpha|kappa|lambda)
    et_ref,        # (E, V)         bf16  output projection (embedding^T)
    biasv_ref,     # (1, V)         f32   vocab bias
    pbias_ref,     # (7, KW)        f32   b1|b2|b_r|b_z|b_in|b_hn|[prelu,ba,bk,bl]
    out_logp_ref,  # (BB*TP, V)     f32
    out_aux_ref,   # (BB*TP, AUXW)  f32   [kappa | lambda | zero pad]
    *, W1, W2, W3, L1P, L2P, BL, TP,
):
    f32, bf16 = jnp.float32, jnp.bfloat16
    BB, _, E = cb_ref.shape
    K1 = w1s_ref.shape[1]
    K2 = w2s_ref.shape[1]
    AUXW = out_aux_ref.shape[-1]

    cb = cb_ref[...]                                               # (BB, LpP, E)

    # ---- conv1: all W1 taps folded into one im2col matmul, M = BB*L1P -------
    c1 = jnp.concatenate([cb[:, dw:dw + L1P, :] for dw in range(W1)], axis=-1)
    c1 = c1.reshape(BB * L1P, W1 * E)            # L1P % 8 == 0 -> tile-aligned
    l1 = jnp.dot(c1, w1s_ref[...], preferred_element_type=f32) + pbias_ref[0:1, :K1]
    prelu = pbias_ref[6:7, 0:1]
    l1 = jnp.where(l1 >= 0.0, l1, prelu * l1).astype(bf16)         # PReLU
    l1 = l1.reshape(BB, L1P, K1)

    # ---- conv2: same im2col trick, M = BB*L2P -------------------------------
    c2 = jnp.concatenate([l1[:, dw:dw + L2P, :] for dw in range(W2)], axis=-1)
    c2 = c2.reshape(BB * L2P, W2 * K1)
    l2 = jnp.dot(c2, w2s_ref[...], preferred_element_type=f32) + pbias_ref[1:2, :K2]
    l2 = l2.reshape(BB, L2P, K2)                                   # f32

    # ---- single GRU step from h0 = 0, all decode steps at once (M = BB*TP) --
    gates = jnp.dot(xprev_ref[...], wih_ref[...], preferred_element_type=f32)
    r = jax.nn.sigmoid(gates[:, 0 * K2:1 * K2] + pbias_ref[2:3, :K2])
    z = jax.nn.sigmoid(gates[:, 1 * K2:2 * K2] + pbias_ref[3:4, :K2])
    n_g = jnp.tanh(gates[:, 2 * K2:3 * K2] + pbias_ref[4:5, :K2]
                   + r * pbias_ref[5:6, :K2])
    h = ((1.0 - z) * n_g).reshape(BB, TP, K2)                      # f32

    # ---- gating + L2 normalization folded into matmuls (feature tensor never
    #      materialized): g = 1 / max(||l2_pre * h||, 1e-12) -----------------
    ss = jnp.einsum('btk,bqk->btq', h * h, l2 * l2, preferred_element_type=f32)
    g = jax.lax.rsqrt(jnp.maximum(ss, 1e-24))                      # (BB, TP, L2P)

    # ---- all 3 heads x W3 taps in a single batched matmul (kept f32: tiny,
    #      feeds the softmax / normalization chain) ---------------------------
    whead = whead_ref[...]                                         # (3*W3, K2)
    hx = jnp.concatenate([h * whead[j:j + 1, :] for j in range(3 * W3)], axis=1)
    m_all = jnp.einsum('bjk,bqk->bjq', hx, l2, preferred_element_type=f32)

    def head_scores(hidx, bias_col):
        acc = jnp.zeros((BB, TP, BL), f32)
        for dw in range(W3):
            j = hidx * W3 + dw
            acc = acc + (m_all[:, j * TP:(j + 1) * TP, dw:dw + BL]
                         * g[:, :, dw:dw + BL])
        return acc + pbias_ref[6:7, bias_col:bias_col + 1]

    s_a = head_scores(0, 1)                                        # alpha scores
    s_k = head_scores(1, 2)                                        # kappa scores
    s_l = head_scores(2, 3)                                        # lambda scores

    # ---- attention weights: softmax / log-softmax / max-pooled sigmoid ------
    e_a = jnp.exp(s_a - jnp.max(s_a, axis=-1, keepdims=True))
    alpha = e_a / jnp.sum(e_a, axis=-1, keepdims=True)             # exact recip

    m_k = jnp.max(s_k, axis=-1, keepdims=True)
    kappa = (s_k - m_k) - jnp.log(jnp.sum(jnp.exp(s_k - m_k),
                                          axis=-1, keepdims=True))
    lam = jnp.max(jax.nn.sigmoid(s_l), axis=-1, keepdims=True)     # (BB, TP, 1)

    # ---- copy distribution -> vocab logits -> log-softmax (bf16 MXU, f32 acc)
    embody = cb[:, :BL, :]                                         # (BB, BL, E)
    n_hat = jnp.einsum('btp,bpe->bte', alpha.astype(bf16), embody,
                       preferred_element_type=f32)
    n_hat = n_hat.reshape(BB * TP, E).astype(bf16)
    n = jnp.dot(n_hat, et_ref[...], preferred_element_type=f32) + biasv_ref[...]
    m_n = jnp.max(n, axis=-1, keepdims=True)
    out_logp_ref[...] = (n - m_n) - jnp.log(
        jnp.sum(jnp.exp(n - m_n), axis=-1, keepdims=True))

    # ---- kappa / lambda packed into one lane-dense slab ---------------------
    pieces = [kappa, lam]
    pad_w = AUXW - BL - 1
    if pad_w > 0:
        pieces.append(jnp.zeros((BB, TP, pad_w), f32))
    out_aux_ref[...] = jnp.concatenate(pieces, axis=-1).reshape(BB * TP, AUXW)


def _pick_block_b(batch, tp):
    """Batch elements per grid step: aim for BB*TP >= ~128 MXU rows while
    keeping >= 2 grid steps so v7x can shard blocks over both TensorCores."""
    target = max(1, pl.cdiv(128, tp))
    divisors = [d for d in range(1, batch + 1) if batch % d == 0]
    multi = [d for d in divisors if batch // d >= 2]
    pool = multi if multi else divisors
    under = [d for d in pool if d <= target]
    return max(under) if under else min(pool)


def init_params(key, vocab, E, K1, K2, W1, W2, W3, pad_idx):
    ks = jax.random.split(key, 14)

    def nrm(k, shape, scale=0.1):
        return (scale * jax.random.normal(k, shape)).astype(jnp.float32)

    emb = nrm(ks[0], (vocab, E), 0.5)
    emb = emb.at[pad_idx].set(0.0)            # padding_idx row is zero
    return dict(
        embedding=emb,
        out_proj=emb.T.astype(jnp.bfloat16),  # owned (E, V) projection, bf16
        w1=nrm(ks[1], (W1, E, K1)), b1=nrm(ks[2], (1, K1)),
        prelu=jnp.full((1, 1), 0.25, jnp.float32),
        w2=nrm(ks[3], (W2, K1, K2)), b2=nrm(ks[4], (1, K2)),
        # GRU: only W_ih / b_ih / b_hh matter because h0 == 0 (gate order r,z,n)
        wih=nrm(ks[5], (E, 3 * K2)), bih=nrm(ks[6], (1, 3 * K2)),
        bhh=nrm(ks[7], (1, 3 * K2)),
        wa=nrm(ks[8], (W3, K2)), ba=nrm(ks[9], (1, 1)),
        wk=nrm(ks[10], (W3, K2)), bk=nrm(ks[11], (1, 1)),
        wl=nrm(ks[12], (W3, K2)), bl=nrm(ks[13], (1, 1)),
        bias=jnp.ones((1, vocab), jnp.float32),
    )


def copy_attention_forward(params, bodies, names, *, pad_idx, W1, W2, W3):
    # TODO(synk): the stochastic teacher-forcing branch (random.random() < tf
    # -> feed back argmax) has no clean in-kernel equivalent; the eval-mode
    # tf = 0 path (always feed names[i-1]) is implemented.
    body_len, batch = bodies.shape
    name_len = names.shape[0]
    emb = params["embedding"]
    vocab, E = emb.shape
    K1 = params["w1"].shape[2]
    K2 = params["w2"].shape[2]

    n_pad = W1 + W2 + W3 - 3
    Lp = body_len + n_pad
    L1LEN = Lp - W1 + 1
    L2LEN = L1LEN - W2 + 1
    BL = L2LEN - W3 + 1
    assert BL == body_len
    T = name_len - 1
    if T <= 0:
        return (jnp.zeros((name_len, batch, vocab), jnp.float32),
                jnp.zeros((name_len, batch, BL), jnp.float32),
                jnp.zeros((name_len, batch), jnp.float32))

    # Padded geometry: sublane-dim sizes that are multiples of 8 keep every
    # in-kernel (BB, X, .) <-> (BB*X, .) reshape tile-aligned.  Extra rows are
    # pad_idx tokens / zero embeddings and never reach a valid output.
    rup = lambda v: 8 * pl.cdiv(v, 8)
    TP = rup(T)
    L2P = rup(L2LEN)
    L1P = rup(max(L1LEN, L2P + W2 - 1))
    LpP = max(Lp, L1P + W1 - 1)

    BB = _pick_block_b(batch, TP)
    n_blocks = batch // BB
    AUXW = 128 * pl.cdiv(BL + 1, 128)
    TBB = BB * TP

    # ---- XLA glue: embedding lookups, padding, layout, parameter packing ----
    # TODO(synk): at large E, move the token-id gathers in-kernel via scalar
    # prefetch instead of materializing the embedded bodies/names in HBM.
    emb_bf = emb.astype(jnp.bfloat16)
    pad_rows = jnp.full((LpP - body_len, batch), pad_idx, bodies.dtype)
    bodies_p = jnp.concatenate([bodies, pad_rows], axis=0)            # (LpP, B)
    cb = jnp.swapaxes(jnp.take(emb_bf, bodies_p, axis=0), 0, 1)       # (B, LpP, E)

    xprev = jnp.swapaxes(jnp.take(emb_bf, names[:T], axis=0), 0, 1)   # (B, T, E)
    xprev = jnp.pad(xprev, ((0, 0), (0, TP - T), (0, 0)))             # (B, TP, E)
    xprev = xprev.reshape(batch * TP, E)

    w1s = params["w1"].reshape(W1 * E, K1).astype(jnp.bfloat16)
    w2s = params["w2"].reshape(W2 * K1, K2).astype(jnp.bfloat16)
    wih = params["wih"].astype(jnp.bfloat16)
    whead = jnp.concatenate([params["wa"], params["wk"], params["wl"]],
                            axis=0).astype(jnp.float32)               # (3*W3, K2)
    et = params.get("out_proj")
    if et is None:                    # normally owned / precomputed at init
        et = emb.T.astype(jnp.bfloat16)
    biasv = params["bias"].astype(jnp.float32)

    # one small f32 array holds every tiny bias / scalar (single DMA stream)
    KW = max(K1, K2, 4)

    def _row(v):
        v = jnp.asarray(v, jnp.float32).reshape(1, -1)
        return jnp.pad(v, ((0, 0), (0, KW - v.shape[1])))

    bih, bhh = params["bih"], params["bhh"]
    pbias = jnp.concatenate([
        _row(params["b1"]),
        _row(params["b2"]),
        _row(bih[:, :K2] + bhh[:, :K2]),                   # b_r = b_ir + b_hr
        _row(bih[:, K2:2 * K2] + bhh[:, K2:2 * K2]),       # b_z
        _row(bih[:, 2 * K2:]),                             # b_in
        _row(bhh[:, 2 * K2:]),                             # b_hn (gated by r)
        _row(jnp.stack([params["prelu"].reshape(()), params["ba"].reshape(()),
                        params["bk"].reshape(()), params["bl"].reshape(())])),
    ], axis=0)                                             # (7, KW)

    kernel = functools.partial(_copy_attn_kernel, W1=W1, W2=W2, W3=W3,
                               L1P=L1P, L2P=L2P, BL=BL, TP=TP)

    def full_spec(a):
        nd = a.ndim
        return pl.BlockSpec(a.shape, lambda i, _n=nd: (0,) * _n)

    in_arrays = (cb, xprev, w1s, w2s, wih, whead, et, biasv, pbias)
    in_specs = ([pl.BlockSpec((BB, LpP, E), lambda i: (i, 0, 0)),
                 pl.BlockSpec((TBB, E), lambda i: (i, 0))]
                + [full_spec(a) for a in in_arrays[2:]])

    # TODO(synk): for production-scale vocab, add a second ("arbitrary") grid
    # axis over V with an online log-softmax and (E, 2k-8k) lane-dense et
    # tiles; size the tiles / vmem_limit_bytes for v7x's 64 MiB VMEM.
    out_shapes = (jax.ShapeDtypeStruct((batch * TP, vocab), jnp.float32),
                  jax.ShapeDtypeStruct((batch * TP, AUXW), jnp.float32))
    out_specs = [pl.BlockSpec((TBB, vocab), lambda i: (i, 0)),
                 pl.BlockSpec((TBB, AUXW), lambda i: (i, 0))]

    logp_f, aux_f = pl.pallas_call(
        kernel,
        out_shape=out_shapes,
        grid_spec=pltpu.PrefetchScalarGridSpec(
            num_scalar_prefetch=0, grid=(n_blocks,),
            in_specs=in_specs, out_specs=out_specs),
        compiler_params=pltpu.CompilerParams(
            dimension_semantics=("parallel",),       # v7x: blocks over 2 TCs
            vmem_limit_bytes=32 * 1024 * 1024),      # explicit (v5e default 16M)
    )(*in_arrays)

    logp = logp_f.reshape(batch, TP, vocab)[:, :T, :]
    aux = aux_f.reshape(batch, TP, AUXW)[:, :T, :]
    kappa = aux[:, :, :BL]
    lam = aux[:, :, BL]

    # the torch decode loop never writes step 0 -> it stays zero
    outputs = jnp.concatenate(
        [jnp.zeros((1, batch, vocab), jnp.float32),
         jnp.transpose(logp, (1, 0, 2))], axis=0)
    kappas = jnp.concatenate(
        [jnp.zeros((1, batch, BL), jnp.float32),
         jnp.transpose(kappa, (1, 0, 2))], axis=0)
    lambdas = jnp.concatenate(
        [jnp.zeros((1, batch), jnp.float32),
         jnp.transpose(lam, (1, 0))], axis=0)
    return outputs, kappas, lambdas


if __name__ == "__main__":
    vocab, E, K1, K2 = 256, 32, 16, 16
    W1 = W2 = W3 = 3
    pad_idx = 0
    body_len, name_len, batch = 16, 8, 16

    key = jax.random.PRNGKey(0)
    kp, kb, kn = jax.random.split(key, 3)
    params = init_params(kp, vocab, E, K1, K2, W1, W2, W3, pad_idx)
    bodies = jax.random.randint(kb, (body_len, batch), 1, vocab, dtype=jnp.int32)
    names = jax.random.randint(kn, (name_len, batch), 1, vocab, dtype=jnp.int32)

    outputs, kappas, lambdas = jax.block_until_ready(
        copy_attention_forward(params, bodies, names,
                               pad_idx=pad_idx, W1=W1, W2=W2, W3=W3))

    assert outputs.shape == (name_len, batch, vocab)
    assert kappas.shape == (name_len, batch, body_len)
    assert lambdas.shape == (name_len, batch)
    assert bool(jnp.all(jnp.isfinite(outputs)))
    assert bool(jnp.all(jnp.isfinite(kappas)))
    assert bool(jnp.all(jnp.isfinite(lambdas)))
    # log-softmax rows (steps >= 1) must exponentiate to probability 1
    assert bool(jnp.allclose(jnp.exp(outputs[1:]).sum(-1), 1.0, atol=1e-3))
    assert bool(jnp.allclose(jnp.exp(kappas[1:]).sum(-1), 1.0, atol=1e-3))
    assert bool(jnp.all((lambdas >= 0.0) & (lambdas <= 1.0)))
    print("KERNEL_OK")
</pallas_src>

<mosaic_0001>
module attributes {stable_mosaic.version = 11 : i64} {
  func.func @_copy_attn_kernel(%arg0: i32, %arg1: memref<8x34x32xbf16, #tpu.memory_space<vmem>>, %arg2: memref<64x32xbf16, #tpu.memory_space<vmem>>, %arg3: memref<96x16xbf16, #tpu.memory_space<vmem>>, %arg4: memref<48x16xbf16, #tpu.memory_space<vmem>>, %arg5: memref<32x48xbf16, #tpu.memory_space<vmem>>, %arg6: memref<9x16xf32, #tpu.memory_space<vmem>>, %arg7: memref<32x256xbf16, #tpu.memory_space<vmem>>, %arg8: memref<1x256xf32, #tpu.memory_space<vmem>>, %arg9: memref<7x16xf32, #tpu.memory_space<vmem>>, %arg10: memref<64x256xf32, #tpu.memory_space<vmem>>, %arg11: memref<64x128xf32, #tpu.memory_space<vmem>>) attributes {dimension_semantics = [#tpu.dimension_semantics<parallel>], iteration_bounds = array<i64: 2>, scalar_prefetch = 0 : i64, scratch_operands = 0 : i64, tpu.core_type = #tpu.core_type<tc>, window_params = [{transform_indices = @transform_0, window_bounds = array<i64: 8, 34, 32>}, {transform_indices = @transform_1, window_bounds = array<i64: 64, 32>}, {pipeline_mode = #tpu.pipeline_mode<synchronous>, transform_indices = @transform_2, window_bounds = array<i64: 96, 16>}, {pipeline_mode = #tpu.pipeline_mode<synchronous>, transform_indices = @transform_3, window_bounds = array<i64: 48, 16>}, {pipeline_mode = #tpu.pipeline_mode<synchronous>, transform_indices = @transform_4, window_bounds = array<i64: 32, 48>}, {pipeline_mode = #tpu.pipeline_mode<synchronous>, transform_indices = @transform_5, window_bounds = array<i64: 9, 16>}, {pipeline_mode = #tpu.pipeline_mode<synchronous>, transform_indices = @transform_6, window_bounds = array<i64: 32, 256>}, {pipeline_mode = #tpu.pipeline_mode<synchronous>, transform_indices = @transform_7, window_bounds = array<i64: 1, 256>}, {pipeline_mode = #tpu.pipeline_mode<synchronous>, transform_indices = @transform_8, window_bounds = array<i64: 7, 16>}, {transform_indices = @transform_9, window_bounds = array<i64: 64, 256>}, {transform_indices = @transform_10, window_bounds = array<i64: 64, 128>}]} {
    %c0 = arith.constant 0 : index
    %c0_0 = arith.constant 0 : index
    %c0_1 = arith.constant 0 : index
    %0 = vector.load %arg1[%c0, %c0_0, %c0_1] : memref<8x34x32xbf16, #tpu.memory_space<vmem>>, vector<8x34x32xbf16>
    %1 = vector.extract_strided_slice %0 {offsets = [0, 0, 0], sizes = [8, 32, 32], strides = [1, 1, 1]} : vector<8x34x32xbf16> to vector<8x32x32xbf16>
    %2 = vector.extract_strided_slice %0 {offsets = [0, 1, 0], sizes = [8, 32, 32], strides = [1, 1, 1]} : vector<8x34x32xbf16> to vector<8x32x32xbf16>
    %3 = vector.extract_strided_slice %0 {offsets = [0, 2, 0], sizes = [8, 32, 32], strides = [1, 1, 1]} : vector<8x34x32xbf16> to vector<8x32x32xbf16>
    %4 = tpu.concatenate %1, %2, %3 in 2 : vector<8x32x32xbf16>, vector<8x32x32xbf16>, vector<8x32x32xbf16> -> vector<8x32x96xbf16>
    %5 = vector.shape_cast %4 : vector<8x32x96xbf16> to vector<256x96xbf16>
    %c0_2 = arith.constant 0 : index
    %c0_3 = arith.constant 0 : index
    %6 = vector.load %arg3[%c0_2, %c0_3] : memref<96x16xbf16, #tpu.memory_space<vmem>>, vector<96x16xbf16>
    %cst = arith.constant dense<0.000000e+00> : vector<256x16xf32>
    %7 = tpu.matmul %5, %6, %cst {dimension_numbers = #tpu.dot_dimension_numbers<[1], [0], [0], [1], [0, 0, 1, 1], [], []>} : vector<256x96xbf16>, vector<96x16xbf16>, vector<256x16xf32> -> vector<256x16xf32>
    %c0_4 = arith.constant 0 : index
    %c0_5 = arith.constant 0 : index
    %8 = vector.load %arg9[%c0_4, %c0_5] : memref<7x16xf32, #tpu.memory_space<vmem>>, vector<1x16xf32>
    %9 = vector.broadcast %8 : vector<1x16xf32> to vector<256x16xf32>
    %10 = arith.addf %7, %9 : vector<256x16xf32>
    %c6 = arith.constant 6 : index
    %c0_6 = arith.constant 0 : index
    %11 = vector.load %arg9[%c6, %c0_6] : memref<7x16xf32, #tpu.memory_space<vmem>>, vector<1x1xf32>
    %cst_7 = arith.constant 0.000000e+00 : f32
    %12 = vector.broadcast %cst_7 : f32 to vector<256x16xf32>
    %13 = arith.cmpf oge, %10, %12 : vector<256x16xf32>
    %14 = vector.broadcast %11 : vector<1x1xf32> to vector<256x16xf32>
    %15 = arith.mulf %14, %10 : vector<256x16xf32>
    %16 = arith.select %13, %10, %15 : vector<256x16xi1>, vector<256x16xf32>
    %17 = arith.truncf %16 : vector<256x16xf32> to vector<256x16xbf16>
    %18 = vector.shape_cast %17 : vector<256x16xbf16> to vector<8x32x16xbf16>
    %19 = vector.extract_strided_slice %18 {offsets = [0, 0, 0], sizes = [8, 24, 16], strides = [1, 1, 1]} : vector<8x32x16xbf16> to vector<8x24x16xbf16>
    %20 = vector.extract_strided_slice %18 {offsets = [0, 1, 0], sizes = [8, 24, 16], strides = [1, 1, 1]} : vector<8x32x16xbf16> to vector<8x24x16xbf16>
    %21 = vector.extract_strided_slice %18 {offsets = [0, 2, 0], sizes = [8, 24, 16], strides = [1, 1, 1]} : vector<8x32x16xbf16> to vector<8x24x16xbf16>
    %22 = tpu.concatenate %19, %20, %21 in 2 : vector<8x24x16xbf16>, vector<8x24x16xbf16>, vector<8x24x16xbf16> -> vector<8x24x48xbf16>
    %23 = vector.shape_cast %22 : vector<8x24x48xbf16> to vector<192x48xbf16>
    %c0_8 = arith.constant 0 : index
    %c0_9 = arith.constant 0 : index
    %24 = vector.load %arg4[%c0_8, %c0_9] : memref<48x16xbf16, #tpu.memory_space<vmem>>, vector<48x16xbf16>
    %cst_10 = arith.constant dense<0.000000e+00> : vector<192x16xf32>
    %25 = tpu.matmul %23, %24, %cst_10 {dimension_numbers = #tpu.dot_dimension_numbers<[1], [0], [0], [1], [0, 0, 1, 1], [], []>} : vector<192x48xbf16>, vector<48x16xbf16>, vector<192x16xf32> -> vector<192x16xf32>
    %c1 = arith.constant 1 : index
    %c0_11 = arith.constant 0 : index
    %26 = vector.load %arg9[%c1, %c0_11] : memref<7x16xf32, #tpu.memory_space<vmem>>, vector<1x16xf32>
    %27 = vector.broadcast %26 : vector<1x16xf32> to vector<192x16xf32>
    %28 = arith.addf %25, %27 : vector<192x16xf32>
    %29 = vector.shape_cast %28 : vector<192x16xf32> to vector<8x24x16xf32>
    %c0_12 = arith.constant 0 : index
    %c0_13 = arith.constant 0 : index
    %30 = vector.load %arg2[%c0_12, %c0_13] : memref<64x32xbf16, #tpu.memory_space<vmem>>, vector<64x32xbf16>
    %c0_14 = arith.constant 0 : index
    %c0_15 = arith.constant 0 : index
    %31 = vector.load %arg5[%c0_14, %c0_15] : memref<32x48xbf16, #tpu.memory_space<vmem>>, vector<32x48xbf16>
    %cst_16 = arith.constant dense<0.000000e+00> : vector<64x48xf32>
    %32 = tpu.matmul %30, %31, %cst_16 {dimension_numbers = #tpu.dot_dimension_numbers<[1], [0], [0], [1], [0, 0, 1, 1], [], []>} : vector<64x32xbf16>, vector<32x48xbf16>, vector<64x48xf32> -> vector<64x48xf32>
    %33 = vector.extract_strided_slice %32 {offsets = [0, 0], sizes = [64, 16], strides = [1, 1]} : vector<64x48xf32> to vector<64x16xf32>
    %c2 = arith.constant 2 : index
    %c0_17 = arith.constant 0 : index
    %34 = vector.load %arg9[%c2, %c0_17] : memref<7x16xf32, #tpu.memory_space<vmem>>, vector<1x16xf32>
    %35 = vector.broadcast %34 : vector<1x16xf32> to vector<64x16xf32>
    %36 = arith.addf %33, %35 : vector<64x16xf32>
    %37 = arith.negf %36 : vector<64x16xf32>
    %38 = math.exp %37 : vector<64x16xf32>
    %cst_18 = arith.constant 1.000000e+00 : f32
    %39 = vector.broadcast %cst_18 : f32 to vector<64x16xf32>
    %40 = arith.addf %39, %38 : vector<64x16xf32>
    %41 = arith.divf %39, %40 : vector<64x16xf32>
    %42 = vector.extract_strided_slice %32 {offsets = [0, 16], sizes = [64, 16], strides = [1, 1]} : vector<64x48xf32> to vector<64x16xf32>
    %c3 = arith.constant 3 : index
    %c0_19 = arith.constant 0 : index
    %43 = vector.load %arg9[%c3, %c0_19] : memref<7x16xf32, #tpu.memory_space<vmem>>, vector<1x16xf32>
    %44 = vector.broadcast %43 : vector<1x16xf32> to vector<64x16xf32>
    %45 = arith.addf %42, %44 : vector<64x16xf32>
    %46 = arith.negf %45 : vector<64x16xf32>
    %47 = math.exp %46 : vector<64x16xf32>
    %cst_20 = arith.constant 1.000000e+00 : f32
    %48 = vector.broadcast %cst_20 : f32 to vector<64x16xf32>
    %49 = arith.addf %48, %47 : vector<64x16xf32>
    %50 = arith.divf %48, %49 : vector<64x16xf32>
    %51 = vector.extract_strided_slice %32 {offsets = [0, 32], sizes = [64, 16], strides = [1, 1]} : vector<64x48xf32> to vector<64x16xf32>
    %c4 = arith.constant 4 : index
    %c0_21 = arith.constant 0 : index
    %52 = vector.load %arg9[%c4, %c0_21] : memref<7x16xf32, #tpu.memory_space<vmem>>, vector<1x16xf32>
    %53 = vector.broadcast %52 : vector<1x16xf32> to vector<64x16xf32>
    %54 = arith.addf %51, %53 : vector<64x16xf32>
    %c5 = arith.constant 5 : index
    %c0_22 = arith.constant 0 : index
    %55 = vector.load %arg9[%c5, %c0_22] : memref<7x16xf32, #tpu.memory_space<vmem>>, vector<1x16xf32>
    %56 = vector.broadcast %55 : vector<1x16xf32> to vector<64x16xf32>
    %57 = arith.mulf %41, %56 : vector<64x16xf32>
    %58 = arith.addf %54, %57 : vector<64x16xf32>
    %59 = math.tanh %58 : vector<64x16xf32>
    %cst_23 = arith.constant 1.000000e+00 : f32
    %60 = vector.broadcast %cst_23 : f32 to vector<64x16xf32>
    %61 = arith.subf %60, %50 : vector<64x16xf32>
    %62 = arith.mulf %61, %59 : vector<64x16xf32>
    %63 = vector.shape_cast %62 : vector<64x16xf32> to vector<8x8x16xf32>
    %64 = arith.mulf %63, %63 : vector<8x8x16xf32>
    %65 = arith.mulf %29, %29 : vector<8x24x16xf32>
    "tpu.trace_start"() <{level = 10 : i32, message = "btk,bqk->btq"}> : () -> ()
    %cst_24 = arith.constant dense<0.000000e+00> : vector<8x8x24xf32>
    %66 = tpu.matmul %64, %65, %cst_24 {dimension_numbers = #tpu.dot_dimension_numbers<[2], [2], [1], [1], [0, 0, 0, 1, 1, 1], [0], [0]>} : vector<8x8x16xf32>, vector<8x24x16xf32>, vector<8x8x24xf32> -> vector<8x8x24xf32>
    "tpu.trace_stop"() : () -> ()
    %cst_25 = arith.constant 1.000000e-24 : f32
    %67 = vector.broadcast %cst_25 : f32 to vector<8x8x24xf32>
    %68 = arith.maximumf %66, %67 : vector<8x8x24xf32>
    %69 = math.rsqrt %68 : vector<8x8x24xf32>
    %c0_26 = arith.constant 0 : index
    %c0_27 = arith.constant 0 : index
    %70 = vector.load %arg6[%c0_26, %c0_27] : memref<9x16xf32, #tpu.memory_space<vmem>>, vector<9x16xf32>
    %71 = vector.extract_strided_slice %70 {offsets = [0, 0], sizes = [1, 16], strides = [1, 1]} : vector<9x16xf32> to vector<1x16xf32>
    %72 = vector.shape_cast %71 : vector<1x16xf32> to vector<1x1x16xf32>
    %73 = vector.broadcast %72 : vector<1x1x16xf32> to vector<8x8x16xf32>
    %74 = arith.mulf %63, %73 : vector<8x8x16xf32>
    %75 = vector.extract_strided_slice %70 {offsets = [1, 0], sizes = [1, 16], strides = [1, 1]} : vector<9x16xf32> to vector<1x16xf32>
    %76 = vector.shape_cast %75 : vector<1x16xf32> to vector<1x1x16xf32>
    %77 = vector.broadcast %76 : vector<1x1x16xf32> to vector<8x8x16xf32>
    %78 = arith.mulf %63, %77 : vector<8x8x16xf32>
    %79 = vector.extract_strided_slice %70 {offsets = [2, 0], sizes = [1, 16], strides = [1, 1]} : vector<9x16xf32> to vector<1x16xf32>
    %80 = vector.shape_cast %79 : vector<1x16xf32> to vector<1x1x16xf32>
    %81 = vector.broadcast %80 : vector<1x1x16xf32> to vector<8x8x16xf32>
    %82 = arith.mulf %63, %81 : vector<8x8x16xf32>
    %83 = vector.extract_strided_slice %70 {offsets = [3, 0], sizes = [1, 16], strides = [1, 1]} : vector<9x16xf32> to vector<1x16xf32>
    %84 = vector.shape_cast %83 : vector<1x16xf32> to vector<1x1x16xf32>
    %85 = vector.broadcast %84 : vector<1x1x16xf32> to vector<8x8x16xf32>
    %86 = arith.mulf %63, %85 : vector<8x8x16xf32>
    %87 = vector.extract_strided_slice %70 {offsets = [4, 0], sizes = [1, 16], strides = [1, 1]} : vector<9x16xf32> to vector<1x16xf32>
    %88 = vector.shape_cast %87 : vector<1x16xf32> to vector<1x1x16xf32>
    %89 = vector.broadcast %88 : vector<1x1x16xf32> to vector<8x8x16xf32>
    %90 = arith.mulf %63, %89 : vector<8x8x16xf32>
    %91 = vector.extract_strided_slice %70 {offsets = [5, 0], sizes = [1, 16], strides = [1, 1]} : vector<9x16xf32> to vector<1x16xf32>
    %92 = vector.shape_cast %91 : vector<1x16xf32> to vector<1x1x16xf32>
    %93 = vector.broadcast %92 : vector<1x1x16xf32> to vector<8x8x16xf32>
    %94 = arith.mulf %63, %93 : vector<8x8x16xf32>
    %95 = vector.extract_strided_slice %70 {offsets = [6, 0], sizes = [1, 16], strides = [1, 1]} : vector<9x16xf32> to vector<1x16xf32>
    %96 = vector.shape_cast %95 : vector<1x16xf32> to vector<1x1x16xf32>
    %97 = vector.broadcast %96 : vector<1x1x16xf32> to vector<8x8x16xf32>
    %98 = arith.mulf %63, %97 : vector<8x8x16xf32>
    %99 = vector.extract_strided_slice %70 {offsets = [7, 0], sizes = [1, 16], strides = [1, 1]} : vector<9x16xf32> to vector<1x16xf32>
    %100 = vector.shape_cast %99 : vector<1x16xf32> to vector<1x1x16xf32>
    %101 = vector.broadcast %100 : vector<1x1x16xf32> to vector<8x8x16xf32>
    %102 = arith.mulf %63, %101 : vector<8x8x16xf32>
    %103 = vector.extract_strided_slice %70 {offsets = [8, 0], sizes = [1, 16], strides = [1, 1]} : vector<9x16xf32> to vector<1x16xf32>
    %104 = vector.shape_cast %103 : vector<1x16xf32> to vector<1x1x16xf32>
    %105 = vector.broadcast %104 : vector<1x1x16xf32> to vector<8x8x16xf32>
    %106 = arith.mulf %63, %105 : vector<8x8x16xf32>
    %107 = tpu.concatenate %74, %78, %82, %86, %90, %94, %98, %102, %106 in 1 : vector<8x8x16xf32>, vector<8x8x16xf32>, vector<8x8x16xf32>, vector<8x8x16xf32>, vector<8x8x16xf32>, vector<8x8x16xf32>, vector<8x8x16xf32>, vector<8x8x16xf32>, vector<8x8x16xf32> -> vector<8x72x16xf32>
    "tpu.trace_start"() <{level = 10 : i32, message = "bjk,bqk->bjq"}> : () -> ()
    %cst_28 = arith.constant dense<0.000000e+00> : vector<8x72x24xf32>
    %108 = tpu.matmul %107, %29, %cst_28 {dimension_numbers = #tpu.dot_dimension_numbers<[2], [2], [1], [1], [0, 0, 0, 1, 1, 1], [0], [0]>} : vector<8x72x16xf32>, vector<8x24x16xf32>, vector<8x72x24xf32> -> vector<8x72x24xf32>
    %cst_29 = arith.constant 0.000000e+00 : f32
    "tpu.trace_stop"() : () -> ()
    %109 = vector.broadcast %cst_29 : f32 to vector<8x8x16xf32>
    %110 = vector.extract_strided_slice %108 {offsets = [0, 0, 0], sizes = [8, 8, 16], strides = [1, 1, 1]} : vector<8x72x24xf32> to vector<8x8x16xf32>
    %111 = vector.extract_strided_slice %69 {offsets = [0, 0, 0], sizes = [8, 8, 16], strides = [1, 1, 1]} : vector<8x8x24xf32> to vector<8x8x16xf32>
    %112 = arith.mulf %110, %111 : vector<8x8x16xf32>
    %113 = arith.addf %109, %112 : vector<8x8x16xf32>
    %114 = vector.extract_strided_slice %108 {offsets = [0, 8, 1], sizes = [8, 8, 16], strides = [1, 1, 1]} : vector<8x72x24xf32> to vector<8x8x16xf32>
    %115 = vector.extract_strided_slice %69 {offsets = [0, 0, 1], sizes = [8, 8, 16], strides = [1, 1, 1]} : vector<8x8x24xf32> to vector<8x8x16xf32>
    %116 = arith.mulf %114, %115 : vector<8x8x16xf32>
    %117 = arith.addf %113, %116 : vector<8x8x16xf32>
    %118 = vector.extract_strided_slice %108 {offsets = [0, 16, 2], sizes = [8, 8, 16], strides = [1, 1, 1]} : vector<8x72x24xf32> to vector<8x8x16xf32>
    %119 = vector.extract_strided_slice %69 {offsets = [0, 0, 2], sizes = [8, 8, 16], strides = [1, 1, 1]} : vector<8x8x24xf32> to vector<8x8x16xf32>
    %120 = arith.mulf %118, %119 : vector<8x8x16xf32>
    %121 = arith.addf %117, %120 : vector<8x8x16xf32>
    %c6_30 = arith.constant 6 : index
    %c1_31 = arith.constant 1 : index
    %122 = vector.load %arg9[%c6_30, %c1_31] : memref<7x16xf32, #tpu.memory_space<vmem>>, vector<1x1xf32>
    %123 = vector.shape_cast %122 : vector<1x1xf32> to vector<1x1x1xf32>
    %124 = vector.broadcast %123 : vector<1x1x1xf32> to vector<8x8x16xf32>
    %125 = arith.addf %121, %124 : vector<8x8x16xf32>
    %cst_32 = arith.constant 0.000000e+00 : f32
    %126 = vector.broadcast %cst_32 : f32 to vector<8x8x16xf32>
    %127 = vector.extract_strided_slice %108 {offsets = [0, 24, 0], sizes = [8, 8, 16], strides = [1, 1, 1]} : vector<8x72x24xf32> to vector<8x8x16xf32>
    %128 = vector.extract_strided_slice %69 {offsets = [0, 0, 0], sizes = [8, 8, 16], strides = [1, 1, 1]} : vector<8x8x24xf32> to vector<8x8x16xf32>
    %129 = arith.mulf %127, %128 : vector<8x8x16xf32>
    %130 = arith.addf %126, %129 : vector<8x8x16xf32>
    %131 = vector.extract_strided_slice %108 {offsets = [0, 32, 1], sizes = [8, 8, 16], strides = [1, 1, 1]} : vector<8x72x24xf32> to vector<8x8x16xf32>
    %132 = vector.extract_strided_slice %69 {offsets = [0, 0, 1], sizes = [8, 8, 16], strides = [1, 1, 1]} : vector<8x8x24xf32> to vector<8x8x16xf32>
    %133 = arith.mulf %131, %132 : vector<8x8x16xf32>
    %134 = arith.addf %130, %133 : vector<8x8x16xf32>
    %135 = vector.extract_strided_slice %108 {offsets = [0, 40, 2], sizes = [8, 8, 16], strides = [1, 1, 1]} : vector<8x72x24xf32> to vector<8x8x16xf32>
    %136 = vector.extract_strided_slice %69 {offsets = [0, 0, 2], sizes = [8, 8, 16], strides = [1, 1, 1]} : vector<8x8x24xf32> to vector<8x8x16xf32>
    %137 = arith.mulf %135, %136 : vector<8x8x16xf32>
    %138 = arith.addf %134, %137 : vector<8x8x16xf32>
    %c6_33 = arith.constant 6 : index
    %c2_34 = arith.constant 2 : index
    %139 = vector.load %arg9[%c6_33, %c2_34] : memref<7x16xf32, #tpu.memory_space<vmem>>, vector<1x1xf32>
    %140 = vector.shape_cast %139 : vector<1x1xf32> to vector<1x1x1xf32>
    %141 = vector.broadcast %140 : vector<1x1x1xf32> to vector<8x8x16xf32>
    %142 = arith.addf %138, %141 : vector<8x8x16xf32>
    %cst_35 = arith.constant 0.000000e+00 : f32
    %143 = vector.broadcast %cst_35 : f32 to vector<8x8x16xf32>
    %144 = vector.extract_strided_slice %108 {offsets = [0, 48, 0], sizes = [8, 8, 16], strides = [1, 1, 1]} : vector<8x72x24xf32> to vector<8x8x16xf32>
    %145 = vector.extract_strided_slice %69 {offsets = [0, 0, 0], sizes = [8, 8, 16], strides = [1, 1, 1]} : vector<8x8x24xf32> to vector<8x8x16xf32>
    %146 = arith.mulf %144, %145 : vector<8x8x16xf32>
    %147 = arith.addf %143, %146 : vector<8x8x16xf32>
    %148 = vector.extract_strided_slice %108 {offsets = [0, 56, 1], sizes = [8, 8, 16], strides = [1, 1, 1]} : vector<8x72x24xf32> to vector<8x8x16xf32>
    %149 = vector.extract_strided_slice %69 {offsets = [0, 0, 1], sizes = [8, 8, 16], strides = [1, 1, 1]} : vector<8x8x24xf32> to vector<8x8x16xf32>
    %150 = arith.mulf %148, %149 : vector<8x8x16xf32>
    %151 = arith.addf %147, %150 : vector<8x8x16xf32>
    %152 = vector.extract_strided_slice %108 {offsets = [0, 64, 2], sizes = [8, 8, 16], strides = [1, 1, 1]} : vector<8x72x24xf32> to vector<8x8x16xf32>
    %153 = vector.extract_strided_slice %69 {offsets = [0, 0, 2], sizes = [8, 8, 16], strides = [1, 1, 1]} : vector<8x8x24xf32> to vector<8x8x16xf32>
    %154 = arith.mulf %152, %153 : vector<8x8x16xf32>
    %155 = arith.addf %151, %154 : vector<8x8x16xf32>
    %c6_36 = arith.constant 6 : index
    %c3_37 = arith.constant 3 : index
    %156 = vector.load %arg9[%c6_36, %c3_37] : memref<7x16xf32, #tpu.memory_space<vmem>>, vector<1x1xf32>
    %157 = vector.shape_cast %156 : vector<1x1xf32> to vector<1x1x1xf32>
    %158 = vector.broadcast %157 : vector<1x1x1xf32> to vector<8x8x16xf32>
    %159 = arith.addf %155, %158 : vector<8x8x16xf32>
    %cst_38 = arith.constant dense<0xFF800000> : vector<8x8xf32>
    %160 = vector.multi_reduction <maximumf>, %125, %cst_38 [2] : vector<8x8x16xf32> to vector<8x8xf32>
    %161 = vector.shape_cast %160 : vector<8x8xf32> to vector<8x8x1xf32>
    %162 = vector.broadcast %161 : vector<8x8x1xf32> to vector<8x8x16xf32>
    %163 = arith.subf %125, %162 : vector<8x8x16xf32>
    %164 = math.exp %163 : vector<8x8x16xf32>
    %cst_39 = arith.constant dense<0.000000e+00> : vector<8x8xf32>
    %165 = vector.multi_reduction <add>, %164, %cst_39 [2] : vector<8x8x16xf32> to vector<8x8xf32>
    %166 = vector.shape_cast %165 : vector<8x8xf32> to vector<8x8x1xf32>
    %167 = vector.broadcast %166 : vector<8x8x1xf32> to vector<8x8x16xf32>
    %168 = arith.divf %164, %167 : vector<8x8x16xf32>
    %cst_40 = arith.constant dense<0xFF800000> : vector<8x8xf32>
    %169 = vector.multi_reduction <maximumf>, %142, %cst_40 [2] : vector<8x8x16xf32> to vector<8x8xf32>
    %170 = vector.shape_cast %169 : vector<8x8xf32> to vector<8x8x1xf32>
    %171 = vector.broadcast %170 : vector<8x8x1xf32> to vector<8x8x16xf32>
    %172 = arith.subf %142, %171 : vector<8x8x16xf32>
    %173 = vector.broadcast %170 : vector<8x8x1xf32> to vector<8x8x16xf32>
    %174 = arith.subf %142, %173 : vector<8x8x16xf32>
    %175 = math.exp %174 : vector<8x8x16xf32>
    %cst_41 = arith.constant dense<0.000000e+00> : vector<8x8xf32>
    %176 = vector.multi_reduction <add>, %175, %cst_41 [2] : vector<8x8x16xf32> to vector<8x8xf32>
    %177 = vector.shape_cast %176 : vector<8x8xf32> to vector<8x8x1xf32>
    %178 = math.log %177 : vector<8x8x1xf32>
    %179 = vector.broadcast %178 : vector<8x8x1xf32> to vector<8x8x16xf32>
    %180 = arith.subf %172, %179 : vector<8x8x16xf32>
    %181 = arith.negf %159 : vector<8x8x16xf32>
    %182 = math.exp %181 : vector<8x8x16xf32>
    %cst_42 = arith.constant 1.000000e+00 : f32
    %183 = vector.broadcast %cst_42 : f32 to vector<8x8x16xf32>
    %184 = arith.addf %183, %182 : vector<8x8x16xf32>
    %185 = arith.divf %183, %184 : vector<8x8x16xf32>
    %cst_43 = arith.constant dense<0xFF800000> : vector<8x8xf32>
    %186 = vector.multi_reduction <maximumf>, %185, %cst_43 [2] : vector<8x8x16xf32> to vector<8x8xf32>
    %187 = vector.shape_cast %186 : vector<8x8xf32> to vector<8x8x1xf32>
    %188 = vector.extract_strided_slice %0 {offsets = [0, 0, 0], sizes = [8, 16, 32], strides = [1, 1, 1]} : vector<8x34x32xbf16> to vector<8x16x32xbf16>
    %189 = arith.truncf %168 : vector<8x8x16xf32> to vector<8x8x16xbf16>
    "tpu.trace_start"() <{level = 10 : i32, message = "btp,bpe->bte"}> : () -> ()
    %cst_44 = arith.constant dense<0.000000e+00> : vector<8x8x32xf32>
    %190 = tpu.matmul %189, %188, %cst_44 {dimension_numbers = #tpu.dot_dimension_numbers<[2], [1], [1], [2], [0, 0, 0, 1, 1, 2], [0], [0]>} : vector<8x8x16xbf16>, vector<8x16x32xbf16>, vector<8x8x32xf32> -> vector<8x8x32xf32>
    "tpu.trace_stop"() : () -> ()
    %191 = vector.shape_cast %190 : vector<8x8x32xf32> to vector<64x32xf32>
    %192 = arith.truncf %191 : vector<64x32xf32> to vector<64x32xbf16>
    %c0_45 = arith.constant 0 : index
    %c0_46 = arith.constant 0 : index
    %193 = vector.load %arg7[%c0_45, %c0_46] : memref<32x256xbf16, #tpu.memory_space<vmem>>, vector<32x256xbf16>
    %cst_47 = arith.constant dense<0.000000e+00> : vector<64x256xf32>
    %194 = tpu.matmul %192, %193, %cst_47 {dimension_numbers = #tpu.dot_dimension_numbers<[1], [0], [0], [1], [0, 0, 1, 1], [], []>} : vector<64x32xbf16>, vector<32x256xbf16>, vector<64x256xf32> -> vector<64x256xf32>
    %c0_48 = arith.constant 0 : index
    %c0_49 = arith.constant 0 : index
    %195 = vector.load %arg8[%c0_48, %c0_49] : memref<1x256xf32, #tpu.memory_space<vmem>>, vector<1x256xf32>
    %196 = vector.broadcast %195 : vector<1x256xf32> to vector<64x256xf32>
    %197 = arith.addf %194, %196 : vector<64x256xf32>
    %cst_50 = arith.constant dense<0xFF800000> : vector<64xf32>
    %198 = vector.multi_reduction <maximumf>, %197, %cst_50 [1] : vector<64x256xf32> to vector<64xf32>
    %199 = vector.shape_cast %198 : vector<64xf32> to vector<64x1xf32>
    %200 = vector.broadcast %199 : vector<64x1xf32> to vector<64x256xf32>
    %201 = arith.subf %197, %200 : vector<64x256xf32>
    %202 = vector.broadcast %199 : vector<64x1xf32> to vector<64x256xf32>
    %203 = arith.subf %197, %202 : vector<64x256xf32>
    %204 = math.exp %203 : vector<64x256xf32>
    %cst_51 = arith.constant dense<0.000000e+00> : vector<64xf32>
    %205 = vector.multi_reduction <add>, %204, %cst_51 [1] : vector<64x256xf32> to vector<64xf32>
    %206 = vector.shape_cast %205 : vector<64xf32> to vector<64x1xf32>
    %207 = math.log %206 : vector<64x1xf32>
    %208 = vector.broadcast %207 : vector<64x1xf32> to vector<64x256xf32>
    %209 = arith.subf %201, %208 : vector<64x256xf32>
    %c0_52 = arith.constant 0 : index
    %c0_53 = arith.constant 0 : index
    %210 = vector.load %arg10[%c0_52, %c0_53] : memref<64x256xf32, #tpu.memory_space<vmem>>, vector<64x256xf32>
    tpu.vector_store %arg10[%c0_52, %c0_53], %209 {strides = array<i32>} : memref<64x256xf32, #tpu.memory_space<vmem>>, vector<64x256xf32>,
    %cst_54 = arith.constant 0.000000e+00 : f32
    %211 = vector.broadcast %cst_54 : f32 to vector<8x8x111xf32>
    %212 = tpu.concatenate %180, %187, %211 in 2 : vector<8x8x16xf32>, vector<8x8x1xf32>, vector<8x8x111xf32> -> vector<8x8x128xf32>
    %213 = vector.shape_cast %212 : vector<8x8x128xf32> to vector<64x128xf32>
    %c0_55 = arith.constant 0 : index
    %c0_56 = arith.constant 0 : index
    %214 = vector.load %arg11[%c0_55, %c0_56] : memref<64x128xf32, #tpu.memory_space<vmem>>, vector<64x128xf32>
    tpu.vector_store %arg11[%c0_55, %c0_56], %213 {strides = array<i32>} : memref<64x128xf32, #tpu.memory_space<vmem>>, vector<64x128xf32>,
    return
  }
  func.func @transform_0(%arg0: i32) -> (i32, i32, i32) {
    %c0_i32 = arith.constant 0 : i32
    %c0_i32_0 = arith.constant 0 : i32
    %c0_i32_1 = arith.constant 0 : i32
    return %arg0, %c0_i32, %c0_i32_0 : i32, i32, i32
  }
  func.func @transform_1(%arg0: i32) -> (i32, i32) {
    %c0_i32 = arith.constant 0 : i32
    %c0_i32_0 = arith.constant 0 : i32
    return %arg0, %c0_i32 : i32, i32
  }
  func.func @transform_2(%arg0: i32) -> (i32, i32) {
    %c0_i32 = arith.constant 0 : i32
    %c0_i32_0 = arith.constant 0 : i32
    %c0_i32_1 = arith.constant 0 : i32
    return %c0_i32, %c0_i32_0 : i32, i32
  }
  func.func @transform_3(%arg0: i32) -> (i32, i32) {
    %c0_i32 = arith.constant 0 : i32
    %c0_i32_0 = arith.constant 0 : i32
    %c0_i32_1 = arith.constant 0 : i32
    return %c0_i32, %c0_i32_0 : i32, i32
  }
  func.func @transform_4(%arg0: i32) -> (i32, i32) {
    %c0_i32 = arith.constant 0 : i32
    %c0_i32_0 = arith.constant 0 : i32
    %c0_i32_1 = arith.constant 0 : i32
    return %c0_i32, %c0_i32_0 : i32, i32
  }
  func.func @transform_5(%arg0: i32) -> (i32, i32) {
    %c0_i32 = arith.constant 0 : i32
    %c0_i32_0 = arith.constant 0 : i32
    %c0_i32_1 = arith.constant 0 : i32
    return %c0_i32, %c0_i32_0 : i32, i32
  }
  func.func @transform_6(%arg0: i32) -> (i32, i32) {
    %c0_i32 = arith.constant 0 : i32
    %c0_i32_0 = arith.constant 0 : i32
    %c0_i32_1 = arith.constant 0 : i32
    return %c0_i32, %c0_i32_0 : i32, i32
  }
  func.func @transform_7(%arg0: i32) -> (i32, i32) {
    %c0_i32 = arith.constant 0 : i32
    %c0_i32_0 = arith.constant 0 : i32
    %c0_i32_1 = arith.constant 0 : i32
    return %c0_i32, %c0_i32_0 : i32, i32
  }
  func.func @transform_8(%arg0: i32) -> (i32, i32) {
    %c0_i32 = arith.constant 0 : i32
    %c0_i32_0 = arith.constant 0 : i32
    %c0_i32_1 = arith.constant 0 : i32
    return %c0_i32, %c0_i32_0 : i32, i32
  }
  func.func @transform_9(%arg0: i32) -> (i32, i32) {
    %c0_i32 = arith.constant 0 : i32
    %c0_i32_0 = arith.constant 0 : i32
    return %arg0, %c0_i32 : i32, i32
  }
  func.func @transform_10(%arg0: i32) -> (i32, i32) {
    %c0_i32 = arith.constant 0 : i32
    %c0_i32_0 = arith.constant 0 : i32
    return %arg0, %c0_i32 : i32, i32
  }
}

</mosaic_0001>

<llo_original>
// kernel: tpu_custom_call.1
$region0: #{tpu_custom_call.1}
  #allocation0 [shape = 'u32[]', space=smem, size = 0x4, offset = 0x4, fixed_abs, tag = 'smem constant byte address 0x4 - core index']
  #allocation1 [shape = 'u32[144,128]{1,0:T(1,128)}', space=vmem, size = 0x12000, scoped, tag = 'internal scratch']
  %s0 = inlined_call_operand.vmem [shape: bf16[16,34,32], index: 0, kind: input, shape index: {}]
  %s1 = inlined_call_operand.vmem [shape: bf16[128,32], index: 1, kind: input, shape index: {}]
  %s2 = inlined_call_operand.vmem [shape: bf16[96,16], index: 2, kind: input, shape index: {}]
  %s3 = inlined_call_operand.vmem [shape: bf16[48,16], index: 3, kind: input, shape index: {}]
  %s4 = inlined_call_operand.vmem [shape: bf16[32,48], index: 4, kind: input, shape index: {}]
  %s5 = inlined_call_operand.vmem [shape: f32[9,16], index: 5, kind: input, shape index: {}]
  %s6 = inlined_call_operand.vmem [shape: bf16[32,256], index: 6, kind: input, shape index: {}]
  %s7 = inlined_call_operand.vmem [shape: f32[1,256], index: 7, kind: input, shape index: {}]
  %s8 = inlined_call_operand.vmem [shape: f32[7,16], index: 8, kind: input, shape index: {}]
  %s9 = inlined_call_operand.hbm [shape: f32[128,256], index: 9, kind: output, shape index: {0}]
  %s10 = inlined_call_operand.hbm [shape: f32[128,128], index: 10, kind: output, shape index: {1}]
  %11 = xla_tuple %s9, %s10
  %s12 = sld [smem:[#allocation0]]
  $region77: #{tpu_custom_call.1} parent=0
    _
  %s14 = ssub.s32 1, %s12
  %s15 = scalar_select 0, %s14, %s12
  $region1: #{tpu_custom_call.1} parent=0
    #allocation2 [shape = 'u8[131072]{0}', space=vmem, size = 0x20000, scoped, tag = 'output window, operand 0']
    #allocation3 [shape = 's32[2]{0}', space=sflag, size = 0x8, scoped, tag = 'scoped memory for tpu_custom_call.1']
    #allocation4 [shape = 'u8[65536]{0}', space=vmem, size = 0x10000, scoped, tag = 'output window, operand 1']
    #allocation5 [shape = 's32[2]{0}', space=sflag, size = 0x8, scoped, tag = 'scoped memory for tpu_custom_call.1']
    %16 = vsyncpa [#allocation3], 0
    %s17 = scalar_lea.sflag [#allocation3], 1
    %18 = vsyncpa %s17, 0
    %19 = vsyncpa [#allocation5], 0
    %s20 = scalar_lea.sflag [#allocation5], 1
    %21 = vsyncpa %s20, 0
    loop: start=0, step=1, limit=4
    $region2: #{tpu_custom_call.1} parent=1 // loop_pre_header
      _
    $region3: #{tpu_custom_call.1} parent=1 // loop_header
      %s23 = sphi 0, %s27
      %p24 = scmp.ge.s32.totalorder %s23, 4
      %s33 = sphi 0, %s35
      %s36 = sphi 0, %s33
      %s37 = sphi 0, %s36
      %s53 = sphi 0, %s37
      %s59 = sphi 0, %s61
      %s62 = sphi 0, %s59
      %s63 = sphi 0, %s62
      %s79 = sphi 0, %s63
      %s83 = sphi 0, %s83
      %s85 = sphi 0, %s83
      %s86 = sphi 0, %s85
      %s100 = sphi 0, %s86
      %s104 = sphi 0, %s104
      %s106 = sphi 0, %s104
      %s107 = sphi 0, %s106
      %s121 = sphi 0, %s107
      %s125 = sphi 0, %s125
      %s127 = sphi 0, %s125
      %s128 = sphi 0, %s127
      %s142 = sphi 0, %s128
      %s146 = sphi 0, %s146
      %s148 = sphi 0, %s146
      %s149 = sphi 0, %s148
      %s163 = sphi 0, %s149
      %s167 = sphi 0, %s167
      %s169 = sphi 0, %s167
      %s170 = sphi 0, %s169
      %s184 = sphi 0, %s170
      %s188 = sphi 0, %s188
      %s190 = sphi 0, %s188
      %s191 = sphi 0, %s190
      %s205 = sphi 0, %s191
      %s209 = sphi 0, %s209
      %s211 = sphi 0, %s209
      %s212 = sphi 0, %s211
      %s226 = sphi 0, %s212
      %s232 = sphi 0, %s234
      %s235 = sphi 0, %s232
      %s236 = sphi 0, %s235
      %s252 = sphi 0, %s236
      %s258 = sphi 0, %s260
      %s261 = sphi 0, %s258
      %s262 = sphi 0, %s261
      %s278 = sphi 0, %s262
    $region4: #{tpu_custom_call.1} parent=1 // loop_header_branch
      %26 = sbr.rel (%p24) target = $region8
    $region5: #{tpu_custom_call.1} parent=1 // loop_body
      %s28 = ssub.s32 %s23, 1
      %s29 = ssub.s32 %s23, 2
      %s30 = sadd.s32 %s23, 1
      %s31 = ssub.s32 %s23, %s30
      %p32 = scmp.eq.s32.totalorder %s31, 0
      %s34 = sadd.s32 %s33, 1
      %s35 = scalar_select %p32, %s33, %s34
      %p38 = pneg %p32
      %p39 = scmp.eq.s32.totalorder %s23, 1
      %p40 = por %p38, %p39
      %p41 = scmp.ne.s32.totalorder %s33, %s36
      %p42 = scmp.eq.s32.totalorder %s23, 0
      %p43 = por %p41, %p42
      %p44 = scmp.ne.s32.totalorder %s33, %s36
      %p45 = scmp.eq.s32.totalorder %s28, 1
      %p46 = por %p44, %p45
      %p47 = scmp.ne.s32.totalorder %s36, %s37
      %p48 = scmp.eq.s32.totalorder %s28, 0
      %p49 = por %p47, %p48
      %p50 = scmp.ne.s32.totalorder %s36, %s37
      %p51 = scmp.eq.s32.totalorder %s29, 1
      %p52 = por %p50, %p51
      %p54 = scmp.ne.s32.totalorder %s37, %s53
      %p55 = scmp.eq.s32.totalorder %s29, 0
      %p56 = por %p54, %p55
      %s57 = ssub.s32 %s23, %s30
      %p58 = scmp.eq.s32.totalorder %s57, 0
      %s60 = sadd.s32 %s59, 1
      %s61 = scalar_select %p58, %s59, %s60
      %p64 = pneg %p58
      %p65 = scmp.eq.s32.totalorder %s23, 1
      %p66 = por %p64, %p65
      %p67 = scmp.ne.s32.totalorder %s59, %s62
      %p68 = scmp.eq.s32.totalorder %s23, 0
      %p69 = por %p67, %p68
      %p70 = scmp.ne.s32.totalorder %s59, %s62
      %p71 = scmp.eq.s32.totalorder %s28, 1
      %p72 = por %p70, %p71
      %p73 = scmp.ne.s32.totalorder %s62, %s63
      %p74 = scmp.eq.s32.totalorder %s28, 0
      %p75 = por %p73, %p74
      %p76 = scmp.ne.s32.totalorder %s62, %s63
      %p77 = scmp.eq.s32.totalorder %s29, 1
      %p78 = por %p76, %p77
      %p80 = scmp.ne.s32.totalorder %s63, %s79
      %p81 = scmp.eq.s32.totalorder %s29, 0
      %p82 = por %p80, %p81
      %s84 = sadd.s32 %s83, 1
      %p87 = scmp.eq.s32.totalorder %s23, 1
      %p88 = scmp.ne.s32.totalorder %s83, %s85
      %p89 = scmp.eq.s32.totalorder %s23, 0
      %p90 = por %p88, %p89
      %p91 = scmp.ne.s32.totalorder %s83, %s85
      %p92 = scmp.eq.s32.totalorder %s28, 1
      %p93 = por %p91, %p92
      %p94 = scmp.ne.s32.totalorder %s85, %s86
      %p95 = scmp.eq.s32.totalorder %s28, 0
      %p96 = por %p94, %p95
      %p97 = scmp.ne.s32.totalorder %s85, %s86
      %p98 = scmp.eq.s32.totalorder %s29, 1
      %p99 = por %p97, %p98
      %p101 = scmp.ne.s32.totalorder %s86, %s100
      %p102 = scmp.eq.s32.totalorder %s29, 0
      %p103 = por %p101, %p102
      %s105 = sadd.s32 %s104, 1
      %p108 = scmp.eq.s32.totalorder %s23, 1
      %p109 = scmp.ne.s32.totalorder %s104, %s106
      %p110 = scmp.eq.s32.totalorder %s23, 0
      %p111 = por %p109, %p110
      %p112 = scmp.ne.s32.totalorder %s104, %s106
      %p113 = scmp.eq.s32.totalorder %s28, 1
      %p114 = por %p112, %p113
      %p115 = scmp.ne.s32.totalorder %s106, %s107
      %p116 = scmp.eq.s32.totalorder %s28, 0
      %p117 = por %p115, %p116
      %p118 = scmp.ne.s32.totalorder %s106, %s107
      %p119 = scmp.eq.s32.totalorder %s29, 1
      %p120 = por %p118, %p119
      %p122 = scmp.ne.s32.totalorder %s107, %s121
      %p123 = scmp.eq.s32.totalorder %s29, 0
      %p124 = por %p122, %p123
      %s126 = sadd.s32 %s125, 1
      %p129 = scmp.eq.s32.totalorder %s23, 1
      %p130 = scmp.ne.s32.totalorder %s125, %s127
      %p131 = scmp.eq.s32.totalorder %s23, 0
      %p132 = por %p130, %p131
      %p133 = scmp.ne.s32.totalorder %s125, %s127
      %p134 = scmp.eq.s32.totalorder %s28, 1
      %p135 = por %p133, %p134
      %p136 = scmp.ne.s32.totalorder %s127, %s128
      %p137 = scmp.eq.s32.totalorder %s28, 0
      %p138 = por %p136, %p137
      %p139 = scmp.ne.s32.totalorder %s127, %s128
      %p140 = scmp.eq.s32.totalorder %s29, 1
      %p141 = por %p139, %p140
      %p143 = scmp.ne.s32.totalorder %s128, %s142
      %p144 = scmp.eq.s32.totalorder %s29, 0
      %p145 = por %p143, %p144
      %s147 = sadd.s32 %s146, 1
      %p150 = scmp.eq.s32.totalorder %s23, 1
      %p151 = scmp.ne.s32.totalorder %s146, %s148
      %p152 = scmp.eq.s32.totalorder %s23, 0
      %p153 = por %p151, %p152
      %p154 = scmp.ne.s32.totalorder %s146, %s148
      %p155 = scmp.eq.s32.totalorder %s28, 1
      %p156 = por %p154, %p155
      %p157 = scmp.ne.s32.totalorder %s148, %s149
      %p158 = scmp.eq.s32.totalorder %s28, 0
      %p159 = por %p157, %p158
      %p160 = scmp.ne.s32.totalorder %s148, %s149
      %p161 = scmp.eq.s32.totalorder %s29, 1
      %p162 = por %p160, %p161
      %p164 = scmp.ne.s32.totalorder %s149, %s163
      %p165 = scmp.eq.s32.totalorder %s29, 0
      %p166 = por %p164, %p165
      %s168 = sadd.s32 %s167, 1
      %p171 = scmp.eq.s32.totalorder %s23, 1
      %p172 = scmp.ne.s32.totalorder %s167, %s169
      %p173 = scmp.eq.s32.totalorder %s23, 0
      %p174 = por %p172, %p173
      %p175 = scmp.ne.s32.totalorder %s167, %s169
      %p176 = scmp.eq.s32.totalorder %s28, 1
      %p177 = por %p175, %p176
      %p178 = scmp.ne.s32.totalorder %s169, %s170
      %p179 = scmp.eq.s32.totalorder %s28, 0
      %p180 = por %p178, %p179
      %p181 = scmp.ne.s32.totalorder %s169, %s170
      %p182 = scmp.eq.s32.totalorder %s29, 1
      %p183 = por %p181, %p182
      %p185 = scmp.ne.s32.totalorder %s170, %s184
      %p186 = scmp.eq.s32.totalorder %s29, 0
      %p187 = por %p185, %p186
      %s189 = sadd.s32 %s188, 1
      %p192 = scmp.eq.s32.totalorder %s23, 1
      %p193 = scmp.ne.s32.totalorder %s188, %s190
      %p194 = scmp.eq.s32.totalorder %s23, 0
      %p195 = por %p193, %p194
      %p196 = scmp.ne.s32.totalorder %s188, %s190
      %p197 = scmp.eq.s32.totalorder %s28, 1
      %p198 = por %p196, %p197
      %p199 = scmp.ne.s32.totalorder %s190, %s191
      %p200 = scmp.eq.s32.totalorder %s28, 0
      %p201 = por %p199, %p200
      %p202 = scmp.ne.s32.totalorder %s190, %s191
      %p203 = scmp.eq.s32.totalorder %s29, 1
      %p204 = por %p202, %p203
      %p206 = scmp.ne.s32.totalorder %s191, %s205
      %p207 = scmp.eq.s32.totalorder %s29, 0
      %p208 = por %p206, %p207
      %s210 = sadd.s32 %s209, 1
      %p213 = scmp.eq.s32.totalorder %s23, 1
      %p214 = scmp.ne.s32.totalorder %s209, %s211
      %p215 = scmp.eq.s32.totalorder %s23, 0
      %p216 = por %p214, %p215
      %p217 = scmp.ne.s32.totalorder %s209, %s211
      %p218 = scmp.eq.s32.totalorder %s28, 1
      %p219 = por %p217, %p218
      %p220 = scmp.ne.s32.totalorder %s211, %s212
      %p221 = scmp.eq.s32.totalorder %s28, 0
      %p222 = por %p220, %p221
      %p223 = scmp.ne.s32.totalorder %s211, %s212
      %p224 = scmp.eq.s32.totalorder %s29, 1
      %p225 = por %p223, %p224
      %p227 = scmp.ne.s32.totalorder %s212, %s226
      %p228 = scmp.eq.s32.totalorder %s29, 0
      %p229 = por %p227, %p228
      %s230 = ssub.s32 %s23, %s30
      %p231 = scmp.eq.s32.totalorder %s230, 0
      %s233 = sadd.s32 %s232, 1
      %s234 = scalar_select %p231, %s232, %s233
      %p237 = pneg %p231
      %p238 = scmp.eq.s32.totalorder %s23, 1
      %p239 = por %p237, %p238
      %p240 = scmp.ne.s32.totalorder %s232, %s235
      %p241 = scmp.eq.s32.totalorder %s23, 0
      %p242 = por %p240, %p241
      %p243 = scmp.ne.s32.totalorder %s232, %s235
      %p244 = scmp.eq.s32.totalorder %s28, 1
      %p245 = por %p243, %p244
      %p246 = scmp.ne.s32.totalorder %s235, %s236
      %p247 = scmp.eq.s32.totalorder %s28, 0
      %p248 = por %p246, %p247
      %p249 = scmp.ne.s32.totalorder %s235, %s236
      %p250 = scmp.eq.s32.totalorder %s29, 1
      %p251 = por %p249, %p250
      %p253 = scmp.ne.s32.totalorder %s236, %s252
      %p254 = scmp.eq.s32.totalorder %s29, 0
      %p255 = por %p253, %p254
      %s256 = ssub.s32 %s23, %s30
      %p257 = scmp.eq.s32.totalorder %s256, 0
      %s259 = sadd.s32 %s258, 1
      %s260 = scalar_select %p257, %s258, %s259
      %p263 = pneg %p257
      %p264 = scmp.eq.s32.totalorder %s23, 1
      %p265 = por %p263, %p264
      %p266 = scmp.ne.s32.totalorder %s258, %s261
      %p267 = scmp.eq.s32.totalorder %s23, 0
      %p268 = por %p266, %p267
      %p269 = scmp.ne.s32.totalorder %s258, %s261
      %p270 = scmp.eq.s32.totalorder %s28, 1
      %p271 = por %p269, %p270
      %p272 = scmp.ne.s32.totalorder %s261, %s262
      %p273 = scmp.eq.s32.totalorder %s28, 0
      %p274 = por %p272, %p273
      %p275 = scmp.ne.s32.totalorder %s261, %s262
      %p276 = scmp.eq.s32.totalorder %s29, 1
      %p277 = por %p275, %p276
      %p279 = scmp.ne.s32.totalorder %s262, %s278
      %p280 = scmp.eq.s32.totalorder %s29, 0
      %p281 = por %p279, %p280
      %p282 = scmp.le.s32.totalorder 1, %s23
      %p283 = scmp.lt.s32.totalorder %s23, 3
      %p284 = pnand %p282, %p283
      %p285 = pneg %p284
      // Predicated region
      $region9: #{tpu_custom_call.1} parent=5 // pred_check
        _
      $region10: #{tpu_custom_call.1} parent=5 // pred_check_branch
        %287 = sbr.rel (%p284) target = $region12
      $region11: #{tpu_custom_call.1} parent=5 // pred_region
        %s288 = ssub.s32 %s23, 1
        // Predicated region
        $region13: #{tpu_custom_call.1} parent=11 // pred_check
          %p289 = pneg %p96
        $region14: #{tpu_custom_call.1} parent=11 // pred_check_branch
          %291 = sbr.rel (%p289) target = $region16
        $region15: #{tpu_custom_call.1} parent=11 // pred_region
          _
        $region16: #{tpu_custom_call.1} parent=11 // pred_fallthru
          _
        // Predicated region
        $region17: #{tpu_custom_call.1} parent=11 // pred_check
          %p292 = pneg %p117
        $region18: #{tpu_custom_call.1} parent=11 // pred_check_branch
          %294 = sbr.rel (%p292) target = $region20
        $region19: #{tpu_custom_call.1} parent=11 // pred_region
          _
        $region20: #{tpu_custom_call.1} parent=11 // pred_fallthru
          _
        // Predicated region
        $region21: #{tpu_custom_call.1} parent=11 // pred_check
          %p295 = pneg %p138
        $region22: #{tpu_custom_call.1} parent=11 // pred_check_branch
          %297 = sbr.rel (%p295) target = $region24
        $region23: #{tpu_custom_call.1} parent=11 // pred_region
          _
        $region24: #{tpu_custom_call.1} parent=11 // pred_fallthru
          _
        // Predicated region
        $region25: #{tpu_custom_call.1} parent=11 // pred_check
          %p298 = pneg %p159
        $region26: #{tpu_custom_call.1} parent=11 // pred_check_branch
          %300 = sbr.rel (%p298) target = $region28
        $region27: #{tpu_custom_call.1} parent=11 // pred_region
          _
        $region28: #{tpu_custom_call.1} parent=11 // pred_fallthru
          _
        // Predicated region
        $region29: #{tpu_custom_call.1} parent=11 // pred_check
          %p301 = pneg %p180
        $region30: #{tpu_custom_call.1} parent=11 // pred_check_branch
          %303 = sbr.rel (%p301) target = $region32
        $region31: #{tpu_custom_call.1} parent=11 // pred_region
          _
        $region32: #{tpu_custom_call.1} parent=11 // pred_fallthru
          _
        // Predicated region
        $region33: #{tpu_custom_call.1} parent=11 // pred_check
          %p304 = pneg %p201
        $region34: #{tpu_custom_call.1} parent=11 // pred_check_branch
          %306 = sbr.rel (%p304) target = $region36
        $region35: #{tpu_custom_call.1} parent=11 // pred_region
          _
        $region36: #{tpu_custom_call.1} parent=11 // pred_fallthru
          _
        // Predicated region
        $region37: #{tpu_custom_call.1} parent=11 // pred_check
          %p307 = pneg %p222
        $region38: #{tpu_custom_call.1} parent=11 // pred_check_branch
          %309 = sbr.rel (%p307) target = $region40
        $region39: #{tpu_custom_call.1} parent=11 // pred_region
          _
        $region40: #{tpu_custom_call.1} parent=11 // pred_fallthru
          _
      $region12: #{tpu_custom_call.1} parent=5 // pred_fallthru
        _
      %p310 = scmp.lt.s32.totalorder %s23, 2
      // Predicated region
      $region41: #{tpu_custom_call.1} parent=5 // pred_check
        %p311 = pneg %p310
      $region42: #{tpu_custom_call.1} parent=5 // pred_check_branch
        %313 = sbr.rel (%p311) target = $region44
      $region43: #{tpu_custom_call.1} parent=5 // pred_region
        // Predicated region
        $region45: #{tpu_custom_call.1} parent=43 // pred_check
          %p314 = pneg %p43
        $region46: #{tpu_custom_call.1} parent=43 // pred_check_branch
          %316 = sbr.rel (%p314) target = $region48
        $region47: #{tpu_custom_call.1} parent=43 // pred_region
          %s317 = smul.u32 8, %s23
          %p318 = scmp.lt.s32.totalorder %s317, 15
          %s319 = scalar_select %p318, %s317, 15
          %s320 = smul.addr %s319, 5
          %s321 = smul.addr %s320, 4
          %s322 = scalar_lea.vmem %s0, %s321
          %s323 = smul.u32 8, %s23
        $region48: #{tpu_custom_call.1} parent=43 // pred_fallthru
          _
        // Predicated region
        $region49: #{tpu_custom_call.1} parent=43 // pred_check
          %p324 = pneg %p69
        $region50: #{tpu_custom_call.1} parent=43 // pred_check_branch
          %326 = sbr.rel (%p324) target = $region52
        $region51: #{tpu_custom_call.1} parent=43 // pred_region
          %s327 = smul.u32 8, %s23
          %p328 = scmp.lt.s32.totalorder %s327, 15
          %s329 = scalar_select %p328, %s327, 15
          %s330 = smul.addr %s329, 4
          %s331 = scalar_lea.vmem %s1, %s330
          %s332 = smul.u32 8, %s23
        $region52: #{tpu_custom_call.1} parent=43 // pred_fallthru
          _
      $region44: #{tpu_custom_call.1} parent=5 // pred_fallthru
        _
      %p333 = scmp.le.s32.totalorder 1, %s23
      %p334 = scmp.lt.s32.totalorder %s23, 3
      %p335 = pnand %p333, %p334
      %p336 = pneg %p335
      // Predicated region
      $region53: #{tpu_custom_call.1} parent=5 // pred_check
        _
      $region54: #{tpu_custom_call.1} parent=5 // pred_check_branch
        %338 = sbr.rel (%p335) target = $region56
      $region55: #{tpu_custom_call.1} parent=5 // pred_region
        %s339 = ssub.s32 %s23, 1
        %s340 = smul.u32 8, %s28
        %p341 = scmp.lt.s32.totalorder %s340, 15
        %s342 = scalar_select %p341, %s340, 15
        %s343 = smul.addr %s342, 5
        %s344 = smul.addr %s343, 4
        %s345 = scalar_lea.vmem %s0, %s344
        %p346 = pneg %p49
        %p347 = pneg %p46
        %s348 = smul.u32 8, %s28
        %p349 = scmp.lt.s32.totalorder %s348, 15
        %s350 = scalar_select %p349, %s348, 15
        %s351 = smul.addr %s350, 4
        %s352 = scalar_lea.vmem %s1, %s351
        %p353 = pneg %p75
        %p354 = pneg %p72
        %p355 = pneg %p96
        %p356 = pneg %p93
        %p357 = pneg %p117
        %p358 = pneg %p114
        %p359 = pneg %p138
        %p360 = pneg %p135
        %p361 = pneg %p159
        %p362 = pneg %p156
        %p363 = pneg %p180
        %p364 = pneg %p177
        %p365 = pneg %p201
        %p366 = pneg %p198
        %p367 = pneg %p222
        %p368 = pneg %p219
        %p369 = pneg %p248
        %p370 = pneg %p245
        %s371 = sand.u32 %s235, 1
        %s372 = scalar_lea.sflag [#allocation3], %s371
        %s373 = sand.u32 %s235, 1
        %s374 = smul.addr %s373, 128
        %s375 = scalar_lea.vmem [#allocation2], %s374
        %p376 = pneg %p274
        %p377 = pneg %p271
        %s378 = sand.u32 %s261, 1
        %s379 = scalar_lea.sflag [#allocation5], %s378
        %s380 = sand.u32 %s261, 1
        %s381 = smul.addr %s380, 64
        %s382 = scalar_lea.vmem [#allocation4], %s381
        %s383 = smul.u32 8, %s28
        %p384 = scmp.lt.s32.totalorder %s383, 15
        %s385 = scalar_select %p384, %s383, 15
        %s386 = smul.addr %s385, 5
        %s387 = smul.addr %s386, 4
        %s388 = scalar_lea.vmem %s0, %s387
        %s389 = smul.u32 8, %s28
        %s390 = smul.u32 8, %s28
        %p391 = scmp.lt.s32.totalorder %s390, 15
        %s392 = scalar_select %p391, %s390, 15
        %s393 = smul.addr %s392, 4
        %s394 = scalar_lea.vmem %s1, %s393
        %s395 = smul.u32 8, %s28
        %s396 = smul.u32 8, %s28
        %s397 = smul.u32 8, %s28
        %v399 = vld [vmem:[%s388] sm:$0xf]
        %v400 = vld [vmem:[%s388 + $0x4] sm:$0xf]
        %v401 = vld [vmem:[%s388 + $0x8] sm:$0xf]
        %v402 = vld [vmem:[%s388 + $0xc] sm:$0xf]
        %v403 = vld [vmem:[%s388 + $0x10] sm:$0x1]
        %v404 = vld [vmem:[%s388 + $0x14] sm:$0xf]
        %v405 = vld [vmem:[%s388 + $0x18] sm:$0xf]
        %v406 = vld [vmem:[%s388 + $0x1c] sm:$0xf]
        %v407 = vld [vmem:[%s388 + $0x20] sm:$0xf]
        %v408 = vld [vmem:[%s388 + $0x24] sm:$0x1]
        %v409 = vld [vmem:[%s388 + $0x28] sm:$0xf]
        %v410 = vld [vmem:[%s388 + $0x2c] sm:$0xf]
        %v411 = vld [vmem:[%s388 + $0x30] sm:$0xf]
        %v412 = vld [vmem:[%s388 + $0x34] sm:$0xf]
        %v413 = vld [vmem:[%s388 + $0x38] sm:$0x1]
        %v414 = vld [vmem:[%s388 + $0x3c] sm:$0xf]
        %v415 = vld [vmem:[%s388 + $0x40] sm:$0xf]
        %v416 = vld [vmem:[%s388 + $0x44] sm:$0xf]
        %v417 = vld [vmem:[%s388 + $0x48] sm:$0xf]
        %v418 = vld [vmem:[%s388 + $0x4c] sm:$0x1]
        %v419 = vld [vmem:[%s388 + $0x50] sm:$0xf]
        %v420 = vld [vmem:[%s388 + $0x54] sm:$0xf]
        %v421 = vld [vmem:[%s388 + $0x58] sm:$0xf]
        %v422 = vld [vmem:[%s388 + $0x5c] sm:$0xf]
        %v423 = vld [vmem:[%s388 + $0x60] sm:$0x1]
        %v424 = vld [vmem:[%s388 + $0x64] sm:$0xf]
        %v425 = vld [vmem:[%s388 + $0x68] sm:$0xf]
        %v426 = vld [vmem:[%s388 + $0x6c] sm:$0xf]
        %v427 = vld [vmem:[%s388 + $0x70] sm:$0xf]
        %v428 = vld [vmem:[%s388 + $0x74] sm:$0x1]
        %v429 = vld [vmem:[%s388 + $0x78] sm:$0xf]
        %v430 = vld [vmem:[%s388 + $0x7c] sm:$0xf]
        %v431 = vld [vmem:[%s388 + $0x80] sm:$0xf]
        %v432 = vld [vmem:[%s388 + $0x84] sm:$0xf]
        %v433 = vld [vmem:[%s388 + $0x88] sm:$0x1]
        %v434 = vld [vmem:[%s388 + $0x8c] sm:$0xf]
        %v435 = vld [vmem:[%s388 + $0x90] sm:$0xf]
        %v436 = vld [vmem:[%s388 + $0x94] sm:$0xf]
        %v437 = vld [vmem:[%s388 + $0x98] sm:$0xf]
        %v438 = vld [vmem:[%s388 + $0x9c] sm:$0x1]
        %v471 = vunpack.c.l.b16 %v399
        %v472 = vunpack.c.l.b16 %v400
        %v473 = vunpack.c.l.b16 %v401
        %v474 = vunpack.c.l.b16 %v402
        %v475 = vunpack.c.l.b16 %v404
        %v476 = vunpack.c.l.b16 %v405
        %v477 = vunpack.c.l.b16 %v406
        %v478 = vunpack.c.l.b16 %v407
        %v479 = vunpack.c.l.b16 %v409
        %v480 = vunpack.c.l.b16 %v410
        %v481 = vunpack.c.l.b16 %v411
        %v482 = vunpack.c.l.b16 %v412
        %v483 = vunpack.c.l.b16 %v414
        %v484 = vunpack.c.l.b16 %v415
        %v485 = vunpack.c.l.b16 %v416
        %v486 = vunpack.c.l.b16 %v417
        %v487 = vunpack.c.l.b16 %v419
        %v488 = vunpack.c.l.b16 %v420
        %v489 = vunpack.c.l.b16 %v421
        %v490 = vunpack.c.l.b16 %v422
        %v491 = vunpack.c.l.b16 %v424
        %v492 = vunpack.c.l.b16 %v425
        %v493 = vunpack.c.l.b16 %v426
        %v494 = vunpack.c.l.b16 %v427
        %v495 = vunpack.c.l.b16 %v429
        %v496 = vunpack.c.l.b16 %v430
        %v497 = vunpack.c.l.b16 %v431
        %v498 = vunpack.c.l.b16 %v432
        %v499 = vunpack.c.l.b16 %v434
        %v500 = vunpack.c.l.b16 %v435
        %v501 = vunpack.c.l.b16 %v436
        %v502 = vunpack.c.l.b16 %v437
        %v503 = vpack.c.b16 %v472, %v471
        %v504 = vpack.c.b16 %v474, %v473
        %v505 = vpack.c.b16 %v476, %v475
        %v506 = vpack.c.b16 %v478, %v477
        %v507 = vpack.c.b16 %v480, %v479
        %v508 = vpack.c.b16 %v482, %v481
        %v509 = vpack.c.b16 %v484, %v483
        %v510 = vpack.c.b16 %v486, %v485
        %v511 = vpack.c.b16 %v488, %v487
        %v512 = vpack.c.b16 %v490, %v489
        %v513 = vpack.c.b16 %v492, %v491
        %v514 = vpack.c.b16 %v494, %v493
        %v515 = vpack.c.b16 %v496, %v495
        %v516 = vpack.c.b16 %v498, %v497
        %v517 = vpack.c.b16 %v500, %v499
        %v518 = vpack.c.b16 %v502, %v501
        %v527 = vunpack.c.l.b16 %v403
        %v528 = vunpack.c.l.b16 %v408
        %v529 = vunpack.c.l.b16 %v413
        %v530 = vunpack.c.l.b16 %v418
        %v531 = vunpack.c.l.b16 %v423
        %v532 = vunpack.c.l.b16 %v428
        %v533 = vunpack.c.l.b16 %v433
        %v534 = vunpack.c.l.b16 %v438
        %v535 = vpack.c.b16 %v527, %v527
        %v536 = vpack.c.b16 %v528, %v528
        %v537 = vpack.c.b16 %v529, %v529
        %v538 = vpack.c.b16 %v530, %v530
        %v539 = vpack.c.b16 %v531, %v531
        %v540 = vpack.c.b16 %v532, %v532
        %v541 = vpack.c.b16 %v533, %v533
        %v542 = vpack.c.b16 %v534, %v534
        %vm543 = vsmask.f32 7424
        %v545 = vshrl.u32 %v503, 16
        %v547 = vshll.u32 %v503, 16
        %v549 = vrot.slane %v547, 1
        %v550 = vor.u32 %v545, %v549
        %v552 = vshll.u32 %v504, 16
        %v554 = vrot.slane %v552, 1
        %v555 = vsel %vm543, %v550, %v554
        %v556 = vshrl.u32 %v504, 16
        %v558 = vor.u32 %v556, %v554
        %v560 = vshll.u32 %v535, 16
        %v562 = vrot.slane %v560, 1
        %v563 = vsel %vm543, %v558, %v562
        %v565 = vshrl.u32 %v505, 16
        %v567 = vshll.u32 %v505, 16
        %v569 = vrot.slane %v567, 1
        %v570 = vor.u32 %v565, %v569
        %v572 = vshll.u32 %v506, 16
        %v574 = vrot.slane %v572, 1
        %v575 = vsel %vm543, %v570, %v574
        %v576 = vshrl.u32 %v506, 16
        %v578 = vor.u32 %v576, %v574
        %v580 = vshll.u32 %v536, 16
        %v582 = vrot.slane %v580, 1
        %v583 = vsel %vm543, %v578, %v582
        %v585 = vshrl.u32 %v507, 16
        %v587 = vshll.u32 %v507, 16
        %v589 = vrot.slane %v587, 1
        %v590 = vor.u32 %v585, %v589
        %v592 = vshll.u32 %v508, 16
        %v594 = vrot.slane %v592, 1
        %v595 = vsel %vm543, %v590, %v594
        %v596 = vshrl.u32 %v508, 16
        %v598 = vor.u32 %v596, %v594
        %v600 = vshll.u32 %v537, 16
        %v602 = vrot.slane %v600, 1
        %v603 = vsel %vm543, %v598, %v602
        %v605 = vshrl.u32 %v509, 16
        %v607 = vshll.u32 %v509, 16
        %v609 = vrot.slane %v607, 1
        %v610 = vor.u32 %v605, %v609
        %v612 = vshll.u32 %v510, 16
        %v614 = vrot.slane %v612, 1
        %v615 = vsel %vm543, %v610, %v614
        %v616 = vshrl.u32 %v510, 16
        %v618 = vor.u32 %v616, %v614
        %v620 = vshll.u32 %v538, 16
        %v622 = vrot.slane %v620, 1
        %v623 = vsel %vm543, %v618, %v622
        %v625 = vshrl.u32 %v511, 16
        %v627 = vshll.u32 %v511, 16
        %v629 = vrot.slane %v627, 1
        %v630 = vor.u32 %v625, %v629
        %v632 = vshll.u32 %v512, 16
        %v634 = vrot.slane %v632, 1
        %v635 = vsel %vm543, %v630, %v634
        %v636 = vshrl.u32 %v512, 16
        %v638 = vor.u32 %v636, %v634
        %v640 = vshll.u32 %v539, 16
        %v642 = vrot.slane %v640, 1
        %v643 = vsel %vm543, %v638, %v642
        %v645 = vshrl.u32 %v513, 16
        %v647 = vshll.u32 %v513, 16
        %v649 = vrot.slane %v647, 1
        %v650 = vor.u32 %v645, %v649
        %v652 = vshll.u32 %v514, 16
        %v654 = vrot.slane %v652, 1
        %v655 = vsel %vm543, %v650, %v654
        %v656 = vshrl.u32 %v514, 16
        %v658 = vor.u32 %v656, %v654
        %v660 = vshll.u32 %v540, 16
        %v662 = vrot.slane %v660, 1
        %v663 = vsel %vm543, %v658, %v662
        %v665 = vshrl.u32 %v515, 16
        %v667 = vshll.u32 %v515, 16
        %v669 = vrot.slane %v667, 1
        %v670 = vor.u32 %v665, %v669
        %v672 = vshll.u32 %v516, 16
        %v674 = vrot.slane %v672, 1
        %v675 = vsel %vm543, %v670, %v674
        %v676 = vshrl.u32 %v516, 16
        %v678 = vor.u32 %v676, %v674
        %v680 = vshll.u32 %v541, 16
        %v682 = vrot.slane %v680, 1
        %v683 = vsel %vm543, %v678, %v682
        %v685 = vshrl.u32 %v517, 16
        %v687 = vshll.u32 %v517, 16
        %v689 = vrot.slane %v687, 1
        %v690 = vor.u32 %v685, %v689
        %v692 = vshll.u32 %v518, 16
        %v694 = vrot.slane %v692, 1
        %v695 = vsel %vm543, %v690, %v694
        %v696 = vshrl.u32 %v518, 16
        %v698 = vor.u32 %v696, %v694
        %v700 = vshll.u32 %v542, 16
        %v702 = vrot.slane %v700, 1
        %v703 = vsel %vm543, %v698, %v702
        %704 = vrot.lane.b32.xlu0 %v555, 32
        %v705 = vpop.permute.xlu0 %704
        %706 = vrot.lane.b32.xlu0 %v563, 32
        %v707 = vpop.permute.xlu0 %706
        %708 = vrot.lane.b32.xlu0 %v575, 32
        %v709 = vpop.permute.xlu0 %708
        %710 = vrot.lane.b32.xlu0 %v583, 32
        %v711 = vpop.permute.xlu0 %710
        %712 = vrot.lane.b32.xlu0 %v595, 32
        %v713 = vpop.permute.xlu0 %712
        %714 = vrot.lane.b32.xlu0 %v603, 32
        %v715 = vpop.permute.xlu0 %714
        %716 = vrot.lane.b32.xlu0 %v615, 32
        %v717 = vpop.permute.xlu0 %716
        %718 = vrot.lane.b32.xlu0 %v623, 32
        %v719 = vpop.permute.xlu0 %718
        %720 = vrot.lane.b32.xlu0 %v635, 32
        %v721 = vpop.permute.xlu0 %720
        %722 = vrot.lane.b32.xlu0 %v643, 32
        %v723 = vpop.permute.xlu0 %722
        %724 = vrot.lane.b32.xlu0 %v655, 32
        %v725 = vpop.permute.xlu0 %724
        %726 = vrot.lane.b32.xlu0 %v663, 32
        %v727 = vpop.permute.xlu0 %726
        %728 = vrot.lane.b32.xlu0 %v675, 32
        %v729 = vpop.permute.xlu0 %728
        %730 = vrot.lane.b32.xlu0 %v683, 32
        %v731 = vpop.permute.xlu0 %730
        %732 = vrot.lane.b32.xlu0 %v695, 32
        %v733 = vpop.permute.xlu0 %732
        %734 = vrot.lane.b32.xlu0 %v703, 32
        %v735 = vpop.permute.xlu0 %734
        %vm736 = vcmask 1046528
        %v737 = vrot.slane %v503, 1
        %v738 = vrot.slane %v504, 1
        %v739 = vsel %vm736, %v737, %v738
        %v740 = vrot.slane %v535, 1
        %v741 = vsel %vm736, %v738, %v740
        %v742 = vrot.slane %v505, 1
        %v743 = vrot.slane %v506, 1
        %v744 = vsel %vm736, %v742, %v743
        %v745 = vrot.slane %v536, 1
        %v746 = vsel %vm736, %v743, %v745
        %v747 = vrot.slane %v507, 1
        %v748 = vrot.slane %v508, 1
        %v749 = vsel %vm736, %v747, %v748
        %v750 = vrot.slane %v537, 1
        %v751 = vsel %vm736, %v748, %v750
        %v752 = vrot.slane %v509, 1
        %v753 = vrot.slane %v510, 1
        %v754 = vsel %vm736, %v752, %v753
        %v755 = vrot.slane %v538, 1
        %v756 = vsel %vm736, %v753, %v755
        %v757 = vrot.slane %v511, 1
        %v758 = vrot.slane %v512, 1
        %v759 = vsel %vm736, %v757, %v758
        %v760 = vrot.slane %v539, 1
        %v761 = vsel %vm736, %v758, %v760
        %v762 = vrot.slane %v513, 1
        %v763 = vrot.slane %v514, 1
        %v764 = vsel %vm736, %v762, %v763
        %v765 = vrot.slane %v540, 1
        %v766 = vsel %vm736, %v763, %v765
        %v767 = vrot.slane %v515, 1
        %v768 = vrot.slane %v516, 1
        %v769 = vsel %vm736, %v767, %v768
        %v770 = vrot.slane %v541, 1
        %v771 = vsel %vm736, %v768, %v770
        %v772 = vrot.slane %v517, 1
        %v773 = vrot.slane %v518, 1
        %v774 = vsel %vm736, %v772, %v773
        %v775 = vrot.slane %v542, 1
        %v776 = vsel %vm736, %v773, %v775
        %777 = vrot.lane.b32.xlu0 %v739, 64
        %v778 = vpop.permute.xlu0 %777
        %779 = vrot.lane.b32.xlu0 %v741, 64
        %v780 = vpop.permute.xlu0 %779
        %781 = vrot.lane.b32.xlu0 %v744, 64
        %v782 = vpop.permute.xlu0 %781
        %783 = vrot.lane.b32.xlu0 %v746, 64
        %v784 = vpop.permute.xlu0 %783
        %785 = vrot.lane.b32.xlu0 %v749, 64
        %v786 = vpop.permute.xlu0 %785
        %787 = vrot.lane.b32.xlu0 %v751, 64
        %v788 = vpop.permute.xlu0 %787
        %789 = vrot.lane.b32.xlu0 %v754, 64
        %v790 = vpop.permute.xlu0 %789
        %791 = vrot.lane.b32.xlu0 %v756, 64
        %v792 = vpop.permute.xlu0 %791
        %793 = vrot.lane.b32.xlu0 %v759, 64
        %v794 = vpop.permute.xlu0 %793
        %795 = vrot.lane.b32.xlu0 %v761, 64
        %v796 = vpop.permute.xlu0 %795
        %797 = vrot.lane.b32.xlu0 %v764, 64
        %v798 = vpop.permute.xlu0 %797
        %799 = vrot.lane.b32.xlu0 %v766, 64
        %v800 = vpop.permute.xlu0 %799
        %801 = vrot.lane.b32.xlu0 %v769, 64
        %v802 = vpop.permute.xlu0 %801
        %803 = vrot.lane.b32.xlu0 %v771, 64
        %v804 = vpop.permute.xlu0 %803
        %805 = vrot.lane.b32.xlu0 %v774, 64
        %v806 = vpop.permute.xlu0 %805
        %807 = vrot.lane.b32.xlu0 %v776, 64
        %v808 = vpop.permute.xlu0 %807
        %vm809 = vcmask 261120
        %v811 = vsel %vm809, %v503, %v705
        %v813 = vsel %vm809, %v504, %v707
        %v815 = vsel %vm809, %v505, %v709
        %v817 = vsel %vm809, %v506, %v711
        %v819 = vsel %vm809, %v507, %v713
        %v821 = vsel %vm809, %v508, %v715
        %v823 = vsel %vm809, %v509, %v717
        %v825 = vsel %vm809, %v510, %v719
        %v827 = vsel %vm809, %v511, %v721
        %v829 = vsel %vm809, %v512, %v723
        %v831 = vsel %vm809, %v513, %v725
        %v833 = vsel %vm809, %v514, %v727
        %v835 = vsel %vm809, %v515, %v729
        %v837 = vsel %vm809, %v516, %v731
        %v839 = vsel %vm809, %v517, %v733
        %v841 = vsel %vm809, %v518, %v735
        %vm842 = vcmask 523264
        %v844 = vsel %vm842, %v811, %v778
        %v846 = vsel %vm842, %v813, %v780
        %v848 = vsel %vm842, %v815, %v782
        %v850 = vsel %vm842, %v817, %v784
        %v852 = vsel %vm842, %v819, %v786
        %v854 = vsel %vm842, %v821, %v788
        %v856 = vsel %vm842, %v823, %v790
        %v858 = vsel %vm842, %v825, %v792
        %v860 = vsel %vm842, %v827, %v794
        %v862 = vsel %vm842, %v829, %v796
        %v864 = vsel %vm842, %v831, %v798
        %v866 = vsel %vm842, %v833, %v800
        %v868 = vsel %vm842, %v835, %v802
        %v870 = vsel %vm842, %v837, %v804
        %v872 = vsel %vm842, %v839, %v806
        %v874 = vsel %vm842, %v841, %v808
        %v875 = vld [vmem:[%s2] sm:$0xf]
        %v876 = vld [vmem:[%s2 + $0x4] sm:$0xf]
        %v877 = vld [vmem:[%s2 + $0x8] sm:$0xf]
        %v878 = vld [vmem:[%s2 + $0xc] sm:$0xf]
        %v879 = vld [vmem:[%s2 + $0x10] sm:$0xf]
        %v880 = vld [vmem:[%s2 + $0x14] sm:$0xf]
        %v881 = vld [vmem:[%s2 + $0x18] sm:$0xf]
        %v882 = vld [vmem:[%s2 + $0x1c] sm:$0xf]
        %v883 = vld [vmem:[%s2 + $0x20] sm:$0xf]
        %v884 = vld [vmem:[%s2 + $0x24] sm:$0xf]
        %v885 = vld [vmem:[%s2 + $0x28] sm:$0xf]
        %v886 = vld [vmem:[%s2 + $0x2c] sm:$0xf]
        %v887 = vld [vmem:[%s8] sm:$0x1]
        %v888 = vlaneseq
        %v889 = vshrl.u32 %v888, 7
        %v890 = vsub.s32 0, %v889
        %v891 = vrot.slane %v887, %v890
        %v904 = vunpack.c.l.b16 %v875
        %v905 = vunpack.c.l.b16 %v876
        %v906 = vunpack.c.l.b16 %v877
        %v907 = vunpack.c.l.b16 %v878
        %v908 = vunpack.c.l.b16 %v879
        %v909 = vunpack.c.l.b16 %v880
        %v910 = vunpack.c.l.b16 %v881
        %v911 = vunpack.c.l.b16 %v882
        %v912 = vunpack.c.l.b16 %v883
        %v913 = vunpack.c.l.b16 %v884
        %v914 = vunpack.c.l.b16 %v885
        %v915 = vunpack.c.l.b16 %v886
        %v916 = vpack.c.b16 %v905, %v904
        %v917 = vpack.c.b16 %v907, %v906
        %v918 = vpack.c.b16 %v909, %v908
        %v919 = vpack.c.b16 %v911, %v910
        %v920 = vpack.c.b16 %v913, %v912
        %v921 = vpack.c.b16 %v915, %v914
        %vm928 = vcmask 785408
        %v929 = vsel %vm928, %v844, 0
        %v931 = vsel %vm928, %v846, 0
        %v933 = vsel %vm928, %v848, 0
        %v935 = vsel %vm928, %v850, 0
        %v937 = vsel %vm928, %v852, 0
        %v939 = vsel %vm928, %v854, 0
        %v941 = vsel %vm928, %v856, 0
        %v943 = vsel %vm928, %v858, 0
        %v945 = vsel %vm928, %v860, 0
        %v947 = vsel %vm928, %v862, 0
        %v949 = vsel %vm928, %v864, 0
        %v951 = vsel %vm928, %v866, 0
        %v953 = vsel %vm928, %v868, 0
        %v955 = vsel %vm928, %v870, 0
        %v957 = vsel %vm928, %v872, 0
        %v959 = vsel %vm928, %v874, 0
        %961 = vmatprep.subr.bf16.mxu0 0
        %962 = vmatpush1.bf16.msra.mxu0 %v916
        %963 = vmatprep.subr.bf16.mxu0 0
        %964 = vmatpush1.bf16.msra.mxu0 %v917
        %965 = vmatprep.subr.bf16.mxu0 0
        %966 = vmatpush1.bf16.msra.mxu0 %v918
        %967 = vmatprep.subr.bf16.mxu0 0
        %968 = vmatpush1.bf16.msra.mxu0 %v919
        %969 = vmatprep.subr.bf16.mxu0 0
        %970 = vmatpush1.bf16.msra.mxu0 %v920
        %971 = vmatprep.subr.bf16.mxu0 0
        %972 = vmatpush1.bf16.msra.mxu0 %v921
        %973 = vmatprep.subr.bf16.mxu0 0
        %974 = vmatpush1.bf16.msra.mxu0 0
        %975 = vmatprep.subr.bf16.mxu0 0
        %976 = vmatpush1.bf16.msra.mxu0 0
        %977 = vmatprep.subr.bf16.mxu0 0
        %978 = vmatpush1.bf16.msra.mxu0 0
        %979 = vmatprep.subr.bf16.mxu0 0
        %980 = vmatpush1.bf16.msra.mxu0 0
        %981 = vmatprep.subr.bf16.mxu0 0
        %982 = vmatpush1.bf16.msra.mxu0 0
        %983 = vmatprep.subr.bf16.mxu0 0
        %984 = vmatpush1.bf16.msra.mxu0 0
        %985 = vmatprep.subr.bf16.mxu0 0
        %986 = vmatpush1.bf16.msra.mxu0 0
        %987 = vmatprep.subr.bf16.mxu0 0
        %988 = vmatpush1.bf16.msra.mxu0 0
        %989 = vmatprep.subr.bf16.mxu0 0
        %990 = vmatpush1.bf16.msra.mxu0 0
        %991 = vmatprep.subr.bf16.mxu0 0
        %992 = vmatpush1.bf16.msra.mxu0 0
        %993 = vmatprep.mubr.bf16.mxu0 0
        %994 = vmatmul.mubr.bf16.gmra.mrb[0].mxu0 %v929
        %v995 = vpop.f32.mrb[0].mxu0
        %v996 = vadd.f32 %v891, %v995
        %v997 = vpop.f32.mrb[0].mxu0
        %v998 = vpop.f32.mrb[0].mxu0
        %v999 = vadd.f32 %v891, %v998
        %v1000 = vpop.f32.mrb[0].mxu0
        %1001 = vmatprep.mubr.bf16.mxu0 0
        %1002 = vmatmul.mubr.bf16.gmra.mrb[0].mxu0 %v931
        %v1003 = vpop.f32.mrb[0].mxu0
        %v1004 = vadd.f32 %v891, %v1003
        %v1005 = vpop.f32.mrb[0].mxu0
        %v1006 = vpop.f32.mrb[0].mxu0
        %v1007 = vadd.f32 %v891, %v1006
        %v1008 = vpop.f32.mrb[0].mxu0
        %1009 = vmatprep.mubr.bf16.mxu0 0
        %1010 = vmatmul.mubr.bf16.gmra.mrb[0].mxu0 %v933
        %v1011 = vpop.f32.mrb[0].mxu0
        %v1012 = vadd.f32 %v891, %v1011
        %v1013 = vpop.f32.mrb[0].mxu0
        %v1014 = vpop.f32.mrb[0].mxu0
        %v1015 = vadd.f32 %v891, %v1014
        %v1016 = vpop.f32.mrb[0].mxu0
        %1017 = vmatprep.mubr.bf16.mxu0 0
        %1018 = vmatmul.mubr.bf16.gmra.mrb[0].mxu0 %v935
        %v1019 = vpop.f32.mrb[0].mxu0
        %v1020 = vadd.f32 %v891, %v1019
        %v1021 = vpop.f32.mrb[0].mxu0
        %v1022 = vpop.f32.mrb[0].mxu0
        %v1023 = vadd.f32 %v891, %v1022
        %v1024 = vpop.f32.mrb[0].mxu0
        %1025 = vmatprep.mubr.bf16.mxu0 0
        %1026 = vmatmul.mubr.bf16.gmra.mrb[0].mxu0 %v937
        %v1027 = vpop.f32.mrb[0].mxu0
        %v1028 = vadd.f32 %v891, %v1027
        %v1029 = vpop.f32.mrb[0].mxu0
        %v1030 = vpop.f32.mrb[0].mxu0
        %v1031 = vadd.f32 %v891, %v1030
        %v1032 = vpop.f32.mrb[0].mxu0
        %1033 = vmatprep.mubr.bf16.mxu0 0
        %1034 = vmatmul.mubr.bf16.gmra.mrb[0].mxu0 %v939
        %v1035 = vpop.f32.mrb[0].mxu0
        %v1036 = vadd.f32 %v891, %v1035
        %v1037 = vpop.f32.mrb[0].mxu0
        %v1038 = vpop.f32.mrb[0].mxu0
        %v1039 = vadd.f32 %v891, %v1038
        %v1040 = vpop.f32.mrb[0].mxu0
        %1041 = vmatprep.mubr.bf16.mxu0 0
        %1042 = vmatmul.mubr.bf16.gmra.mrb[0].mxu0 %v941
        %v1043 = vpop.f32.mrb[0].mxu0
        %v1044 = vadd.f32 %v891, %v1043
        %v1045 = vpop.f32.mrb[0].mxu0
        %v1046 = vpop.f32.mrb[0].mxu0
        %v1047 = vadd.f32 %v891, %v1046
        %v1048 = vpop.f32.mrb[0].mxu0
        %1049 = vmatprep.mubr.bf16.mxu0 0
        %1050 = vmatmul.mubr.bf16.gmra.mrb[0].mxu0 %v943
        %v1051 = vpop.f32.mrb[0].mxu0
        %v1052 = vadd.f32 %v891, %v1051
        %v1053 = vpop.f32.mrb[0].mxu0
        %v1054 = vpop.f32.mrb[0].mxu0
        %v1055 = vadd.f32 %v891, %v1054
        %v1056 = vpop.f32.mrb[0].mxu0
        %1057 = vmatprep.mubr.bf16.mxu0 0
        %1058 = vmatmul.mubr.bf16.gmra.mrb[0].mxu0 %v945
        %v1059 = vpop.f32.mrb[0].mxu0
        %v1060 = vadd.f32 %v891, %v1059
        %v1061 = vpop.f32.mrb[0].mxu0
        %v1062 = vpop.f32.mrb[0].mxu0
        %v1063 = vadd.f32 %v891, %v1062
        %v1064 = vpop.f32.mrb[0].mxu0
        %1065 = vmatprep.mubr.bf16.mxu0 0
        %1066 = vmatmul.mubr.bf16.gmra.mrb[0].mxu0 %v947
        %v1067 = vpop.f32.mrb[0].mxu0
        %v1068 = vadd.f32 %v891, %v1067
        %v1069 = vpop.f32.mrb[0].mxu0
        %v1070 = vpop.f32.mrb[0].mxu0
        %v1071 = vadd.f32 %v891, %v1070
        %v1072 = vpop.f32.mrb[0].mxu0
        %1073 = vmatprep.mubr.bf16.mxu0 0
        %1074 = vmatmul.mubr.bf16.gmra.mrb[0].mxu0 %v949
        %v1075 = vpop.f32.mrb[0].mxu0
        %v1076 = vadd.f32 %v891, %v1075
        %v1077 = vpop.f32.mrb[0].mxu0
        %v1078 = vpop.f32.mrb[0].mxu0
        %v1079 = vadd.f32 %v891, %v1078
        %v1080 = vpop.f32.mrb[0].mxu0
        %1081 = vmatprep.mubr.bf16.mxu0 0
        %1082 = vmatmul.mubr.bf16.gmra.mrb[0].mxu0 %v951
        %v1083 = vpop.f32.mrb[0].mxu0
        %v1084 = vadd.f32 %v891, %v1083
        %v1085 = vpop.f32.mrb[0].mxu0
        %v1086 = vpop.f32.mrb[0].mxu0
        %v1087 = vadd.f32 %v891, %v1086
        %v1088 = vpop.f32.mrb[0].mxu0
        %1089 = vmatprep.mubr.bf16.mxu0 0
        %1090 = vmatmul.mubr.bf16.gmra.mrb[0].mxu0 %v953
        %v1091 = vpop.f32.mrb[0].mxu0
        %v1092 = vadd.f32 %v891, %v1091
        %v1093 = vpop.f32.mrb[0].mxu0
        %v1094 = vpop.f32.mrb[0].mxu0
        %v1095 = vadd.f32 %v891, %v1094
        %v1096 = vpop.f32.mrb[0].mxu0
        %1097 = vmatprep.mubr.bf16.mxu0 0
        %1098 = vmatmul.mubr.bf16.gmra.mrb[0].mxu0 %v955
        %v1099 = vpop.f32.mrb[0].mxu0
        %v1100 = vadd.f32 %v891, %v1099
        %v1101 = vpop.f32.mrb[0].mxu0
        %v1102 = vpop.f32.mrb[0].mxu0
        %v1103 = vadd.f32 %v891, %v1102
        %v1104 = vpop.f32.mrb[0].mxu0
        %1105 = vmatprep.mubr.bf16.mxu0 0
        %1106 = vmatmul.mubr.bf16.gmra.mrb[0].mxu0 %v957
        %v1107 = vpop.f32.mrb[0].mxu0
        %v1108 = vadd.f32 %v891, %v1107
        %v1109 = vpop.f32.mrb[0].mxu0
        %v1110 = vpop.f32.mrb[0].mxu0
        %v1111 = vadd.f32 %v891, %v1110
        %v1112 = vpop.f32.mrb[0].mxu0
        %1113 = vmatprep.mubr.bf16.mxu0 0
        %1114 = vmatmul.mubr.bf16.gmra.mrb[0].mxu0 %v959
        %v1115 = vpop.f32.mrb[0].mxu0
        %v1116 = vadd.f32 %v891, %v1115
        %v1117 = vpop.f32.mrb[0].mxu0
        %v1118 = vpop.f32.mrb[0].mxu0
        %v1119 = vadd.f32 %v891, %v1118
        %v1120 = vpop.f32.mrb[0].mxu0
        %1121 = vdwg.mxu0
        %v1122 = vld [vmem:[%s8 + $0x6] sm:$0x1]
        %vm1123 = vcmp.ge.f32.partialorder %v996, 0.0
        %vm1124 = vcmp.ge.f32.partialorder %v999, 0.0
        %vm1125 = vcmp.ge.f32.partialorder %v1004, 0.0
        %vm1126 = vcmp.ge.f32.partialorder %v1007, 0.0
        %vm1127 = vcmp.ge.f32.partialorder %v1012, 0.0
        %vm1128 = vcmp.ge.f32.partialorder %v1015, 0.0
        %vm1129 = vcmp.ge.f32.partialorder %v1020, 0.0
        %vm1130 = vcmp.ge.f32.partialorder %v1023, 0.0
        %vm1131 = vcmp.ge.f32.partialorder %v1028, 0.0
        %vm1132 = vcmp.ge.f32.partialorder %v1031, 0.0
        %vm1133 = vcmp.ge.f32.partialorder %v1036, 0.0
        %vm1134 = vcmp.ge.f32.partialorder %v1039, 0.0
        %vm1135 = vcmp.ge.f32.partialorder %v1044, 0.0
        %vm1136 = vcmp.ge.f32.partialorder %v1047, 0.0
        %vm1137 = vcmp.ge.f32.partialorder %v1052, 0.0
        %vm1138 = vcmp.ge.f32.partialorder %v1055, 0.0
        %vm1139 = vcmp.ge.f32.partialorder %v1060, 0.0
        %vm1140 = vcmp.ge.f32.partialorder %v1063, 0.0
        %vm1141 = vcmp.ge.f32.partialorder %v1068, 0.0
        %vm1142 = vcmp.ge.f32.partialorder %v1071, 0.0
        %vm1143 = vcmp.ge.f32.partialorder %v1076, 0.0
        %vm1144 = vcmp.ge.f32.partialorder %v1079, 0.0
        %vm1145 = vcmp.ge.f32.partialorder %v1084, 0.0
        %vm1146 = vcmp.ge.f32.partialorder %v1087, 0.0
        %vm1147 = vcmp.ge.f32.partialorder %v1092, 0.0
        %vm1148 = vcmp.ge.f32.partialorder %v1095, 0.0
        %vm1149 = vcmp.ge.f32.partialorder %v1100, 0.0
        %vm1150 = vcmp.ge.f32.partialorder %v1103, 0.0
        %vm1151 = vcmp.ge.f32.partialorder %v1108, 0.0
        %vm1152 = vcmp.ge.f32.partialorder %v1111, 0.0
        %vm1153 = vcmp.ge.f32.partialorder %v1116, 0.0
        %vm1154 = vcmp.ge.f32.partialorder %v1119, 0.0
        %s1156 = vtos %v1122
        %v1157 = vstv %s1156
        %v1159 = vmul.f32 %v1157, %v996
        %v1160 = vmul.f32 %v1157, %v999
        %v1161 = vmul.f32 %v1157, %v1004
        %v1162 = vmul.f32 %v1157, %v1007
        %v1163 = vmul.f32 %v1157, %v1012
        %v1164 = vmul.f32 %v1157, %v1015
        %v1165 = vmul.f32 %v1157, %v1020
        %v1166 = vmul.f32 %v1157, %v1023
        %v1167 = vmul.f32 %v1157, %v1028
        %v1168 = vmul.f32 %v1157, %v1031
        %v1169 = vmul.f32 %v1157, %v1036
        %v1170 = vmul.f32 %v1157, %v1039
        %v1171 = vmul.f32 %v1157, %v1044
        %v1172 = vmul.f32 %v1157, %v1047
        %v1173 = vmul.f32 %v1157, %v1052
        %v1174 = vmul.f32 %v1157, %v1055
        %v1175 = vmul.f32 %v1157, %v1060
        %v1176 = vmul.f32 %v1157, %v1063
        %v1177 = vmul.f32 %v1157, %v1068
        %v1178 = vmul.f32 %v1157, %v1071
        %v1179 = vmul.f32 %v1157, %v1076
        %v1180 = vmul.f32 %v1157, %v1079
        %v1181 = vmul.f32 %v1157, %v1084
        %v1182 = vmul.f32 %v1157, %v1087
        %v1183 = vmul.f32 %v1157, %v1092
        %v1184 = vmul.f32 %v1157, %v1095
        %v1185 = vmul.f32 %v1157, %v1100
        %v1186 = vmul.f32 %v1157, %v1103
        %v1187 = vmul.f32 %v1157, %v1108
        %v1188 = vmul.f32 %v1157, %v1111
        %v1189 = vmul.f32 %v1157, %v1116
        %v1190 = vmul.f32 %v1157, %v1119
        %v1191 = vsel %vm1123, %v996, %v1159
        %v1192 = vsel %vm1124, %v999, %v1160
        %v1193 = vsel %vm1125, %v1004, %v1161
        %v1194 = vsel %vm1126, %v1007, %v1162
        %v1195 = vsel %vm1127, %v1012, %v1163
        %v1196 = vsel %vm1128, %v1015, %v1164
        %v1197 = vsel %vm1129, %v1020, %v1165
        %v1198 = vsel %vm1130, %v1023, %v1166
        %v1199 = vsel %vm1131, %v1028, %v1167
        %v1200 = vsel %vm1132, %v1031, %v1168
        %v1201 = vsel %vm1133, %v1036, %v1169
        %v1202 = vsel %vm1134, %v1039, %v1170
        %v1203 = vsel %vm1135, %v1044, %v1171
        %v1204 = vsel %vm1136, %v1047, %v1172
        %v1205 = vsel %vm1137, %v1052, %v1173
        %v1206 = vsel %vm1138, %v1055, %v1174
        %v1207 = vsel %vm1139, %v1060, %v1175
        %v1208 = vsel %vm1140, %v1063, %v1176
        %v1209 = vsel %vm1141, %v1068, %v1177
        %v1210 = vsel %vm1142, %v1071, %v1178
        %v1211 = vsel %vm1143, %v1076, %v1179
        %v1212 = vsel %vm1144, %v1079, %v1180
        %v1213 = vsel %vm1145, %v1084, %v1181
        %v1214 = vsel %vm1146, %v1087, %v1182
        %v1215 = vsel %vm1147, %v1092, %v1183
        %v1216 = vsel %vm1148, %v1095, %v1184
        %v1217 = vsel %vm1149, %v1100, %v1185
        %v1218 = vsel %vm1150, %v1103, %v1186
        %v1219 = vsel %vm1151, %v1108, %v1187
        %v1220 = vsel %vm1152, %v1111, %v1188
        %v1221 = vsel %vm1153, %v1116, %v1189
        %v1222 = vsel %vm1154, %v1119, %v1190
        %v1223 = vpack.c.bf16 %v1192, %v1191
        %v1224 = vpack.c.bf16 %v1194, %v1193
        %v1225 = vpack.c.bf16 %v1196, %v1195
        %v1226 = vpack.c.bf16 %v1198, %v1197
        %v1227 = vpack.c.bf16 %v1200, %v1199
        %v1228 = vpack.c.bf16 %v1202, %v1201
        %v1229 = vpack.c.bf16 %v1204, %v1203
        %v1230 = vpack.c.bf16 %v1206, %v1205
        %v1231 = vpack.c.bf16 %v1208, %v1207
        %v1232 = vpack.c.bf16 %v1210, %v1209
        %v1233 = vpack.c.bf16 %v1212, %v1211
        %v1234 = vpack.c.bf16 %v1214, %v1213
        %v1235 = vpack.c.bf16 %v1216, %v1215
        %v1236 = vpack.c.bf16 %v1218, %v1217
        %v1237 = vpack.c.bf16 %v1220, %v1219
        %v1238 = vpack.c.bf16 %v1222, %v1221
        %v1240 = vshrl.u32 %v1223, 16
        %v1242 = vshll.u32 %v1223, 16
        %v1244 = vrot.slane %v1242, 1
        %v1245 = vor.u32 %v1240, %v1244
        %v1247 = vshll.u32 %v1224, 16
        %v1249 = vrot.slane %v1247, 1
        %v1250 = vsel %vm543, %v1245, %v1249
        %v1251 = vshrl.u32 %v1224, 16
        %v1253 = vor.u32 %v1251, %v1249
        %v1255 = vshrl.u32 %v1225, 16
        %v1257 = vshll.u32 %v1225, 16
        %v1259 = vrot.slane %v1257, 1
        %v1260 = vor.u32 %v1255, %v1259
        %v1262 = vshll.u32 %v1226, 16
        %v1264 = vrot.slane %v1262, 1
        %v1265 = vsel %vm543, %v1260, %v1264
        %v1266 = vshrl.u32 %v1226, 16
        %v1268 = vor.u32 %v1266, %v1264
        %v1270 = vshrl.u32 %v1227, 16
        %v1272 = vshll.u32 %v1227, 16
        %v1274 = vrot.slane %v1272, 1
        %v1275 = vor.u32 %v1270, %v1274
        %v1277 = vshll.u32 %v1228, 16
        %v1279 = vrot.slane %v1277, 1
        %v1280 = vsel %vm543, %v1275, %v1279
        %v1281 = vshrl.u32 %v1228, 16
        %v1283 = vor.u32 %v1281, %v1279
        %v1285 = vshrl.u32 %v1229, 16
        %v1287 = vshll.u32 %v1229, 16
        %v1289 = vrot.slane %v1287, 1
        %v1290 = vor.u32 %v1285, %v1289
        %v1292 = vshll.u32 %v1230, 16
        %v1294 = vrot.slane %v1292, 1
        %v1295 = vsel %vm543, %v1290, %v1294
        %v1296 = vshrl.u32 %v1230, 16
        %v1298 = vor.u32 %v1296, %v1294
        %v1300 = vshrl.u32 %v1231, 16
        %v1302 = vshll.u32 %v1231, 16
        %v1304 = vrot.slane %v1302, 1
        %v1305 = vor.u32 %v1300, %v1304
        %v1307 = vshll.u32 %v1232, 16
        %v1309 = vrot.slane %v1307, 1
        %v1310 = vsel %vm543, %v1305, %v1309
        %v1311 = vshrl.u32 %v1232, 16
        %v1313 = vor.u32 %v1311, %v1309
        %v1315 = vshrl.u32 %v1233, 16
        %v1317 = vshll.u32 %v1233, 16
        %v1319 = vrot.slane %v1317, 1
        %v1320 = vor.u32 %v1315, %v1319
        %v1322 = vshll.u32 %v1234, 16
        %v1324 = vrot.slane %v1322, 1
        %v1325 = vsel %vm543, %v1320, %v1324
        %v1326 = vshrl.u32 %v1234, 16
        %v1328 = vor.u32 %v1326, %v1324
        %v1330 = vshrl.u32 %v1235, 16
        %v1332 = vshll.u32 %v1235, 16
        %v1334 = vrot.slane %v1332, 1
        %v1335 = vor.u32 %v1330, %v1334
        %v1337 = vshll.u32 %v1236, 16
        %v1339 = vrot.slane %v1337, 1
        %v1340 = vsel %vm543, %v1335, %v1339
        %v1341 = vshrl.u32 %v1236, 16
        %v1343 = vor.u32 %v1341, %v1339
        %v1345 = vshrl.u32 %v1237, 16
        %v1347 = vshll.u32 %v1237, 16
        %v1349 = vrot.slane %v1347, 1
        %v1350 = vor.u32 %v1345, %v1349
        %v1352 = vshll.u32 %v1238, 16
        %v1354 = vrot.slane %v1352, 1
        %v1355 = vsel %vm543, %v1350, %v1354
        %v1356 = vshrl.u32 %v1238, 16
        %v1358 = vor.u32 %v1356, %v1354
        %1359 = vrot.lane.b32.xlu0 %v1250, 16
        %v1360 = vpop.permute.xlu0 %1359
        %1361 = vrot.lane.b32.xlu0 %v1253, 16
        %v1362 = vpop.permute.xlu0 %1361
        %1363 = vrot.lane.b32.xlu0 %v1265, 16
        %v1364 = vpop.permute.xlu0 %1363
        %1365 = vrot.lane.b32.xlu0 %v1268, 16
        %v1366 = vpop.permute.xlu0 %1365
        %1367 = vrot.lane.b32.xlu0 %v1280, 16
        %v1368 = vpop.permute.xlu0 %1367
        %1369 = vrot.lane.b32.xlu0 %v1283, 16
        %v1370 = vpop.permute.xlu0 %1369
        %1371 = vrot.lane.b32.xlu0 %v1295, 16
        %v1372 = vpop.permute.xlu0 %1371
        %1373 = vrot.lane.b32.xlu0 %v1298, 16
        %v1374 = vpop.permute.xlu0 %1373
        %1375 = vrot.lane.b32.xlu0 %v1310, 16
        %v1376 = vpop.permute.xlu0 %1375
        %1377 = vrot.lane.b32.xlu0 %v1313, 16
        %v1378 = vpop.permute.xlu0 %1377
        %1379 = vrot.lane.b32.xlu0 %v1325, 16
        %v1380 = vpop.permute.xlu0 %1379
        %1381 = vrot.lane.b32.xlu0 %v1328, 16
        %v1382 = vpop.permute.xlu0 %1381
        %1383 = vrot.lane.b32.xlu0 %v1340, 16
        %v1384 = vpop.permute.xlu0 %1383
        %1385 = vrot.lane.b32.xlu0 %v1343, 16
        %v1386 = vpop.permute.xlu0 %1385
        %1387 = vrot.lane.b32.xlu0 %v1355, 16
        %v1388 = vpop.permute.xlu0 %1387
        %1389 = vrot.lane.b32.xlu0 %v1358, 16
        %v1390 = vpop.permute.xlu0 %1389
        %v1407 = vrot.slane %v1223, 1
        %v1408 = vrot.slane %v1224, 1
        %v1409 = vsel %vm736, %v1407, %v1408
        %v1410 = vrot.slane %v1225, 1
        %v1411 = vrot.slane %v1226, 1
        %v1412 = vsel %vm736, %v1410, %v1411
        %v1413 = vrot.slane %v1227, 1
        %v1414 = vrot.slane %v1228, 1
        %v1415 = vsel %vm736, %v1413, %v1414
        %v1416 = vrot.slane %v1229, 1
        %v1417 = vrot.slane %v1230, 1
        %v1418 = vsel %vm736, %v1416, %v1417
        %v1419 = vrot.slane %v1231, 1
        %v1420 = vrot.slane %v1232, 1
        %v1421 = vsel %vm736, %v1419, %v1420
        %v1422 = vrot.slane %v1233, 1
        %v1423 = vrot.slane %v1234, 1
        %v1424 = vsel %vm736, %v1422, %v1423
        %v1425 = vrot.slane %v1235, 1
        %v1426 = vrot.slane %v1236, 1
        %v1427 = vsel %vm736, %v1425, %v1426
        %v1428 = vrot.slane %v1237, 1
        %v1429 = vrot.slane %v1238, 1
        %v1430 = vsel %vm736, %v1428, %v1429
        %1431 = vrot.lane.b32.xlu0 %v1409, 32
        %v1432 = vpop.permute.xlu0 %1431
        %1433 = vrot.lane.b32.xlu0 %v1408, 32
        %v1434 = vpop.permute.xlu0 %1433
        %1435 = vrot.lane.b32.xlu0 %v1412, 32
        %v1436 = vpop.permute.xlu0 %1435
        %1437 = vrot.lane.b32.xlu0 %v1411, 32
        %v1438 = vpop.permute.xlu0 %1437
        %1439 = vrot.lane.b32.xlu0 %v1415, 32
        %v1440 = vpop.permute.xlu0 %1439
        %1441 = vrot.lane.b32.xlu0 %v1414, 32
        %v1442 = vpop.permute.xlu0 %1441
        %1443 = vrot.lane.b32.xlu0 %v1418, 32
        %v1444 = vpop.permute.xlu0 %1443
        %1445 = vrot.lane.b32.xlu0 %v1417, 32
        %v1446 = vpop.permute.xlu0 %1445
        %1447 = vrot.lane.b32.xlu0 %v1421, 32
        %v1448 = vpop.permute.xlu0 %1447
        %1449 = vrot.lane.b32.xlu0 %v1420, 32
        %v1450 = vpop.permute.xlu0 %1449
        %1451 = vrot.lane.b32.xlu0 %v1424, 32
        %v1452 = vpop.permute.xlu0 %1451
        %1453 = vrot.lane.b32.xlu0 %v1423, 32
        %v1454 = vpop.permute.xlu0 %1453
        %1455 = vrot.lane.b32.xlu0 %v1427, 32
        %v1456 = vpop.permute.xlu0 %1455
        %1457 = vrot.lane.b32.xlu0 %v1426, 32
        %v1458 = vpop.permute.xlu0 %1457
        %1459 = vrot.lane.b32.xlu0 %v1430, 32
        %v1460 = vpop.permute.xlu0 %1459
        %1461 = vrot.lane.b32.xlu0 %v1429, 32
        %v1462 = vpop.permute.xlu0 %1461
        %vm1463 = vcmask 130048
        %v1465 = vsel %vm1463, %v1223, %v1360
        %v1467 = vsel %vm1463, %v1224, %v1362
        %v1469 = vsel %vm1463, %v1225, %v1364
        %v1471 = vsel %vm1463, %v1226, %v1366
        %v1473 = vsel %vm1463, %v1227, %v1368
        %v1475 = vsel %vm1463, %v1228, %v1370
        %v1477 = vsel %vm1463, %v1229, %v1372
        %v1479 = vsel %vm1463, %v1230, %v1374
        %v1481 = vsel %vm1463, %v1231, %v1376
        %v1483 = vsel %vm1463, %v1232, %v1378
        %v1485 = vsel %vm1463, %v1233, %v1380
        %v1487 = vsel %vm1463, %v1234, %v1382
        %v1489 = vsel %vm1463, %v1235, %v1384
        %v1491 = vsel %vm1463, %v1236, %v1386
        %v1493 = vsel %vm1463, %v1237, %v1388
        %v1495 = vsel %vm1463, %v1238, %v1390
        %v1497 = vsel %vm809, %v1465, %v1432
        %v1499 = vsel %vm809, %v1467, %v1434
        %v1501 = vsel %vm809, %v1469, %v1436
        %v1503 = vsel %vm809, %v1471, %v1438
        %v1505 = vsel %vm809, %v1473, %v1440
        %v1507 = vsel %vm809, %v1475, %v1442
        %v1509 = vsel %vm809, %v1477, %v1444
        %v1511 = vsel %vm809, %v1479, %v1446
        %v1513 = vsel %vm809, %v1481, %v1448
        %v1515 = vsel %vm809, %v1483, %v1450
        %v1517 = vsel %vm809, %v1485, %v1452
        %v1519 = vsel %vm809, %v1487, %v1454
        %v1521 = vsel %vm809, %v1489, %v1456
        %v1523 = vsel %vm809, %v1491, %v1458
        %v1525 = vsel %vm809, %v1493, %v1460
        %v1527 = vsel %vm809, %v1495, %v1462
        %v1544 = vunpack.c.l.b16 %v1497
        %v1545 = vunpack.c.h.b16 %v1497
        %v1546 = vunpack.c.l.b16 %v1499
        %v1547 = vunpack.c.l.b16 %v1501
        %v1548 = vunpack.c.h.b16 %v1501
        %v1549 = vunpack.c.l.b16 %v1503
        %v1550 = vunpack.c.l.b16 %v1505
        %v1551 = vunpack.c.h.b16 %v1505
        %v1552 = vunpack.c.l.b16 %v1507
        %v1553 = vunpack.c.l.b16 %v1509
        %v1554 = vunpack.c.h.b16 %v1509
        %v1555 = vunpack.c.l.b16 %v1511
        %v1556 = vunpack.c.l.b16 %v1513
        %v1557 = vunpack.c.h.b16 %v1513
        %v1558 = vunpack.c.l.b16 %v1515
        %v1559 = vunpack.c.l.b16 %v1517
        %v1560 = vunpack.c.h.b16 %v1517
        %v1561 = vunpack.c.l.b16 %v1519
        %v1562 = vunpack.c.l.b16 %v1521
        %v1563 = vunpack.c.h.b16 %v1521
        %v1564 = vunpack.c.l.b16 %v1523
        %v1565 = vunpack.c.l.b16 %v1525
        %v1566 = vunpack.c.h.b16 %v1525
        %v1567 = vunpack.c.l.b16 %v1527
        %v1568 = vld [vmem:[%s3] sm:$0xf]
        %v1569 = vld [vmem:[%s3 + $0x4] sm:$0xf]
        %v1570 = vld [vmem:[%s3 + $0x8] sm:$0xf]
        %v1571 = vld [vmem:[%s3 + $0xc] sm:$0xf]
        %v1572 = vld [vmem:[%s3 + $0x10] sm:$0xf]
        %v1573 = vld [vmem:[%s3 + $0x14] sm:$0xf]
        %v1574 = vld [vmem:[%s8 + $0x1] sm:$0x1]
        %v1575 = vlaneseq
        %v1576 = vshrl.u32 %v1575, 7
        %v1577 = vsub.s32 0, %v1576
        %v1578 = vrot.slane %v1574, %v1577
        %v1579 = vpack.c.b16 %v1545, %v1544
        %v1580 = vpack.c.b16 %v1547, %v1546
        %v1581 = vpack.c.b16 %v1549, %v1548
        %v1582 = vpack.c.b16 %v1551, %v1550
        %v1583 = vpack.c.b16 %v1553, %v1552
        %v1584 = vpack.c.b16 %v1555, %v1554
        %v1585 = vpack.c.b16 %v1557, %v1556
        %v1586 = vpack.c.b16 %v1559, %v1558
        %v1587 = vpack.c.b16 %v1561, %v1560
        %v1588 = vpack.c.b16 %v1563, %v1562
        %v1589 = vpack.c.b16 %v1565, %v1564
        %v1590 = vpack.c.b16 %v1567, %v1566
        %v1597 = vunpack.c.l.b16 %v1568
        %v1598 = vunpack.c.l.b16 %v1569
        %v1599 = vunpack.c.l.b16 %v1570
        %v1600 = vunpack.c.l.b16 %v1571
        %v1601 = vunpack.c.l.b16 %v1572
        %v1602 = vunpack.c.l.b16 %v1573
        %v1603 = vpack.c.b16 %v1598, %v1597
        %v1604 = vpack.c.b16 %v1600, %v1599
        %v1605 = vpack.c.b16 %v1602, %v1601
        %vm1609 = vcmask 392192
        %v1611 = vsel %vm1609, %v1579, 0
        %v1614 = vsel %vm1609, %v1580, 0
        %v1617 = vsel %vm1609, %v1581, 0
        %v1620 = vsel %vm1609, %v1582, 0
        %v1623 = vsel %vm1609, %v1583, 0
        %v1626 = vsel %vm1609, %v1584, 0
        %v1629 = vsel %vm1609, %v1585, 0
        %v1632 = vsel %vm1609, %v1586, 0
        %v1635 = vsel %vm1609, %v1587, 0
        %v1638 = vsel %vm1609, %v1588, 0
        %v1641 = vsel %vm1609, %v1589, 0
        %v1644 = vsel %vm1609, %v1590, 0
        %1646 = vmatprep.subr.bf16.mxu0 0
        %1647 = vmatpush1.bf16.msra.mxu0 %v1603
        %1648 = vmatprep.subr.bf16.mxu0 0
        %1649 = vmatpush1.bf16.msra.mxu0 %v1604
        %1650 = vmatprep.subr.bf16.mxu0 0
        %1651 = vmatpush1.bf16.msra.mxu0 %v1605
        %1652 = vmatprep.subr.bf16.mxu0 0
        %1653 = vmatpush1.bf16.msra.mxu0 0
        %1654 = vmatprep.subr.bf16.mxu0 0
        %1655 = vmatpush1.bf16.msra.mxu0 0
        %1656 = vmatprep.subr.bf16.mxu0 0
        %1657 = vmatpush1.bf16.msra.mxu0 0
        %1658 = vmatprep.subr.bf16.mxu0 0
        %1659 = vmatpush1.bf16.msra.mxu0 0
        %1660 = vmatprep.subr.bf16.mxu0 0
        %1661 = vmatpush1.bf16.msra.mxu0 0
        %1662 = vmatprep.subr.bf16.mxu0 0
        %1663 = vmatpush1.bf16.msra.mxu0 0
        %1664 = vmatprep.subr.bf16.mxu0 0
        %1665 = vmatpush1.bf16.msra.mxu0 0
        %1666 = vmatprep.subr.bf16.mxu0 0
        %1667 = vmatpush1.bf16.msra.mxu0 0
        %1668 = vmatprep.subr.bf16.mxu0 0
        %1669 = vmatpush1.bf16.msra.mxu0 0
        %1670 = vmatprep.subr.bf16.mxu0 0
        %1671 = vmatpush1.bf16.msra.mxu0 0
        %1672 = vmatprep.subr.bf16.mxu0 0
        %1673 = vmatpush1.bf16.msra.mxu0 0
        %1674 = vmatprep.subr.bf16.mxu0 0
        %1675 = vmatpush1.bf16.msra.mxu0 0
        %1676 = vmatprep.subr.bf16.mxu0 0
        %1677 = vmatpush1.bf16.msra.mxu0 0
        %1678 = vmatprep.mubr.bf16.mxu0 0
        %1679 = vmatmul.mubr.bf16.gmra.mrb[0].mxu0 %v1611
        %v1680 = vpop.f32.mrb[0].mxu0
        %v1681 = vadd.f32 %v1578, %v1680
        %v1682 = vpop.f32.mrb[0].mxu0
        %v1683 = vpop.f32.mrb[0].mxu0
        %v1684 = vadd.f32 %v1578, %v1683
        %v1685 = vpop.f32.mrb[0].mxu0
        %1686 = vmatprep.mubr.bf16.mxu0 0
        %1687 = vmatmul.mubr.bf16.gmra.mrb[0].mxu0 %v1614
        %v1688 = vpop.f32.mrb[0].mxu0
        %v1689 = vadd.f32 %v1578, %v1688
        %v1690 = vpop.f32.mrb[0].mxu0
        %v1691 = vpop.f32.mrb[0].mxu0
        %v1692 = vadd.f32 %v1578, %v1691
        %v1693 = vpop.f32.mrb[0].mxu0
        %1694 = vmatprep.mubr.bf16.mxu0 0
        %1695 = vmatmul.mubr.bf16.gmra.mrb[0].mxu0 %v1617
        %v1696 = vpop.f32.mrb[0].mxu0
        %v1697 = vadd.f32 %v1578, %v1696
        %v1698 = vpop.f32.mrb[0].mxu0
        %v1699 = vpop.f32.mrb[0].mxu0
        %v1700 = vadd.f32 %v1578, %v1699
        %v1701 = vpop.f32.mrb[0].mxu0
        %1702 = vmatprep.mubr.bf16.mxu0 0
        %1703 = vmatmul.mubr.bf16.gmra.mrb[0].mxu0 %v1620
        %v1704 = vpop.f32.mrb[0].mxu0
        %v1705 = vadd.f32 %v1578, %v1704
        %v1706 = vpop.f32.mrb[0].mxu0
        %v1707 = vpop.f32.mrb[0].mxu0
        %v1708 = vadd.f32 %v1578, %v1707
        %v1709 = vpop.f32.mrb[0].mxu0
        %1710 = vmatprep.mubr.bf16.mxu0 0
        %1711 = vmatmul.mubr.bf16.gmra.mrb[0].mxu0 %v1623
        %v1712 = vpop.f32.mrb[0].mxu0
        %v1713 = vadd.f32 %v1578, %v1712
        %v1714 = vpop.f32.mrb[0].mxu0
        %v1715 = vpop.f32.mrb[0].mxu0
        %v1716 = vadd.f32 %v1578, %v1715
        %v1717 = vpop.f32.mrb[0].mxu0
        %1718 = vmatprep.mubr.bf16.mxu0 0
        %1719 = vmatmul.mubr.bf16.gmra.mrb[0].mxu0 %v1626
        %v1720 = vpop.f32.mrb[0].mxu0
        %v1721 = vadd.f32 %v1578, %v1720
        %v1722 = vpop.f32.mrb[0].mxu0
        %v1723 = vpop.f32.mrb[0].mxu0
        %v1724 = vadd.f32 %v1578, %v1723
        %v1725 = vpop.f32.mrb[0].mxu0
        %1726 = vmatprep.mubr.bf16.mxu0 0
        %1727 = vmatmul.mubr.bf16.gmra.mrb[0].mxu0 %v1629
        %v1728 = vpop.f32.mrb[0].mxu0
        %v1729 = vadd.f32 %v1578, %v1728
        %v1730 = vpop.f32.mrb[0].mxu0
        %v1731 = vpop.f32.mrb[0].mxu0
        %v1732 = vadd.f32 %v1578, %v1731
        %v1733 = vpop.f32.mrb[0].mxu0
        %1734 = vmatprep.mubr.bf16.mxu0 0
        %1735 = vmatmul.mubr.bf16.gmra.mrb[0].mxu0 %v1632
        %v1736 = vpop.f32.mrb[0].mxu0
        %v1737 = vadd.f32 %v1578, %v1736
        %v1738 = vpop.f32.mrb[0].mxu0
        %v1739 = vpop.f32.mrb[0].mxu0
        %v1740 = vadd.f32 %v1578, %v1739
        %v1741 = vpop.f32.mrb[0].mxu0
        %1742 = vmatprep.mubr.bf16.mxu0 0
        %1743 = vmatmul.mubr.bf16.gmra.mrb[0].mxu0 %v1635
        %v1744 = vpop.f32.mrb[0].mxu0
        %v1745 = vadd.f32 %v1578, %v1744
        %v1746 = vpop.f32.mrb[0].mxu0
        %v1747 = vpop.f32.mrb[0].mxu0
        %v1748 = vadd.f32 %v1578, %v1747
        %v1749 = vpop.f32.mrb[0].mxu0
        %1750 = vmatprep.mubr.bf16.mxu0 0
        %1751 = vmatmul.mubr.bf16.gmra.mrb[0].mxu0 %v1638
        %v1752 = vpop.f32.mrb[0].mxu0
        %v1753 = vadd.f32 %v1578, %v1752
        %v1754 = vpop.f32.mrb[0].mxu0
        %v1755 = vpop.f32.mrb[0].mxu0
        %v1756 = vadd.f32 %v1578, %v1755
        %v1757 = vpop.f32.mrb[0].mxu0
        %1758 = vmatprep.mubr.bf16.mxu0 0
        %1759 = vmatmul.mubr.bf16.gmra.mrb[0].mxu0 %v1641
        %v1760 = vpop.f32.mrb[0].mxu0
        %v1761 = vadd.f32 %v1578, %v1760
        %v1762 = vpop.f32.mrb[0].mxu0
        %v1763 = vpop.f32.mrb[0].mxu0
        %v1764 = vadd.f32 %v1578, %v1763
        %v1765 = vpop.f32.mrb[0].mxu0
        %1766 = vmatprep.mubr.bf16.mxu0 0
        %1767 = vmatmul.mubr.bf16.gmra.mrb[0].mxu0 %v1644
        %v1768 = vpop.f32.mrb[0].mxu0
        %v1769 = vadd.f32 %v1578, %v1768
        %v1770 = vpop.f32.mrb[0].mxu0
        %v1771 = vpop.f32.mrb[0].mxu0
        %v1772 = vadd.f32 %v1578, %v1771
        %v1773 = vpop.f32.mrb[0].mxu0
        %1774 = vdwg.mxu0
        %v1775 = vld [vmem:[%s394] sm:$0xf]
        %v1776 = vld [vmem:[%s394 + $0x4] sm:$0xf]
        %v1777 = vld [vmem:[%s394 + $0x8] sm:$0xf]
        %v1778 = vld [vmem:[%s394 + $0xc] sm:$0xf]
        %v1779 = vld [vmem:[%s394 + $0x10] sm:$0xf]
        %v1780 = vld [vmem:[%s394 + $0x14] sm:$0xf]
        %v1781 = vld [vmem:[%s394 + $0x18] sm:$0xf]
        %v1782 = vld [vmem:[%s394 + $0x1c] sm:$0xf]
        %v1783 = vld [vmem:[%s4] sm:$0xf]
        %v1784 = vld [vmem:[%s4 + $0x4] sm:$0xf]
        %v1785 = vld [vmem:[%s4 + $0x8] sm:$0xf]
        %v1786 = vld [vmem:[%s4 + $0xc] sm:$0xf]
        %v1795 = vunpack.c.l.b16 %v1775
        %v1796 = vunpack.c.l.b16 %v1776
        %v1797 = vunpack.c.l.b16 %v1777
        %v1798 = vunpack.c.l.b16 %v1778
        %v1799 = vunpack.c.l.b16 %v1779
        %v1800 = vunpack.c.l.b16 %v1780
        %v1801 = vunpack.c.l.b16 %v1781
        %v1802 = vunpack.c.l.b16 %v1782
        %v1803 = vpack.c.b16 %v1796, %v1795
        %v1804 = vpack.c.b16 %v1798, %v1797
        %v1805 = vpack.c.b16 %v1800, %v1799
        %v1806 = vpack.c.b16 %v1802, %v1801
        %v1811 = vunpack.c.l.b16 %v1783
        %v1812 = vunpack.c.l.b16 %v1784
        %v1813 = vunpack.c.l.b16 %v1785
        %v1814 = vunpack.c.l.b16 %v1786
        %v1815 = vpack.c.b16 %v1812, %v1811
        %v1816 = vpack.c.b16 %v1814, %v1813
        %v1820 = vsel %vm809, %v1803, 0
        %v1823 = vsel %vm809, %v1804, 0
        %v1826 = vsel %vm809, %v1805, 0
        %v1829 = vsel %vm809, %v1806, 0
        %1831 = vmatprep.subr.bf16.mxu0 0
        %1832 = vmatpush1.bf16.msra.mxu0 %v1815
        %1833 = vmatprep.subr.bf16.mxu0 0
        %1834 = vmatpush1.bf16.msra.mxu0 %v1816
        %1835 = vmatprep.subr.bf16.mxu0 0
        %1836 = vmatpush1.bf16.msra.mxu0 0
        %1837 = vmatprep.subr.bf16.mxu0 0
        %1838 = vmatpush1.bf16.msra.mxu0 0
        %1839 = vmatprep.subr.bf16.mxu0 0
        %1840 = vmatpush1.bf16.msra.mxu0 0
        %1841 = vmatprep.subr.bf16.mxu0 0
        %1842 = vmatpush1.bf16.msra.mxu0 0
        %1843 = vmatprep.subr.bf16.mxu0 0
        %1844 = vmatpush1.bf16.msra.mxu0 0
        %1845 = vmatprep.subr.bf16.mxu0 0
        %1846 = vmatpush1.bf16.msra.mxu0 0
        %1847 = vmatprep.subr.bf16.mxu0 0
        %1848 = vmatpush1.bf16.msra.mxu0 0
        %1849 = vmatprep.subr.bf16.mxu0 0
        %1850 = vmatpush1.bf16.msra.mxu0 0
        %1851 = vmatprep.subr.bf16.mxu0 0
        %1852 = vmatpush1.bf16.msra.mxu0 0
        %1853 = vmatprep.subr.bf16.mxu0 0
        %1854 = vmatpush1.bf16.msra.mxu0 0
        %1855 = vmatprep.subr.bf16.mxu0 0
        %1856 = vmatpush1.bf16.msra.mxu0 0
        %1857 = vmatprep.subr.bf16.mxu0 0
        %1858 = vmatpush1.bf16.msra.mxu0 0
        %1859 = vmatprep.subr.bf16.mxu0 0
        %1860 = vmatpush1.bf16.msra.mxu0 0
        %1861 = vmatprep.subr.bf16.mxu0 0
        %1862 = vmatpush1.bf16.msra.mxu0 0
        %1863 = vmatprep.mubr.bf16.mxu0 0
        %1864 = vmatmul.mubr.bf16.gmra.mrb[0].mxu0 %v1820
        %v1865 = vpop.f32.mrb[0].mxu0
        %v1866 = vadd.f32 0.0, %v1865
        %v1867 = vpop.f32.mrb[0].mxu0
        %v1868 = vpop.f32.mrb[0].mxu0
        %v1869 = vadd.f32 0.0, %v1868
        %v1870 = vpop.f32.mrb[0].mxu0
        %1871 = vmatprep.mubr.bf16.mxu0 0
        %1872 = vmatmul.mubr.bf16.gmra.mrb[0].mxu0 %v1823
        %v1873 = vpop.f32.mrb[0].mxu0
        %v1874 = vadd.f32 0.0, %v1873
        %v1875 = vpop.f32.mrb[0].mxu0
        %v1876 = vpop.f32.mrb[0].mxu0
        %v1877 = vadd.f32 0.0, %v1876
        %v1878 = vpop.f32.mrb[0].mxu0
        %1879 = vmatprep.mubr.bf16.mxu0 0
        %1880 = vmatmul.mubr.bf16.gmra.mrb[0].mxu0 %v1826
        %v1881 = vpop.f32.mrb[0].mxu0
        %v1882 = vadd.f32 0.0, %v1881
        %v1883 = vpop.f32.mrb[0].mxu0
        %v1884 = vpop.f32.mrb[0].mxu0
        %v1885 = vadd.f32 0.0, %v1884
        %v1886 = vpop.f32.mrb[0].mxu0
        %1887 = vmatprep.mubr.bf16.mxu0 0
        %1888 = vmatmul.mubr.bf16.gmra.mrb[0].mxu0 %v1829
        %v1889 = vpop.f32.mrb[0].mxu0
        %v1890 = vadd.f32 0.0, %v1889
        %v1891 = vpop.f32.mrb[0].mxu0
        %v1892 = vpop.f32.mrb[0].mxu0
        %v1893 = vadd.f32 0.0, %v1892
        %v1894 = vpop.f32.mrb[0].mxu0
        %1895 = vdwg.mxu0
        %v1896 = vld [vmem:[%s8 + $0x2] sm:$0x1]
        %v1897 = vlaneseq
        %v1898 = vshrl.u32 %v1897, 7
        %v1899 = vsub.s32 0, %v1898
        %v1900 = vrot.slane %v1896, %v1899
        %v1901 = vadd.f32 %v1866, %v1900
        %v1902 = vadd.f32 %v1869, %v1900
        %v1903 = vadd.f32 %v1874, %v1900
        %v1904 = vadd.f32 %v1877, %v1900
        %v1905 = vadd.f32 %v1882, %v1900
        %v1906 = vadd.f32 %v1885, %v1900
        %v1907 = vadd.f32 %v1890, %v1900
        %v1908 = vadd.f32 %v1893, %v1900
        %v1909 = vxor.u32 %v1901, 2147483648
        %v1910 = vxor.u32 %v1902, 2147483648
        %v1911 = vxor.u32 %v1903, 2147483648
        %v1912 = vxor.u32 %v1904, 2147483648
        %v1913 = vxor.u32 %v1905, 2147483648
        %v1914 = vxor.u32 %v1906, 2147483648
        %v1915 = vxor.u32 %v1907, 2147483648
        %v1916 = vxor.u32 %v1908, 2147483648
        %v1917 = vmul.f32 %v1909, 1.442695
        %v1918 = vpow.pop %v1917
        %v1919 = vmul.f32 %v1910, 1.442695
        %v1920 = vpow.pop %v1919
        %v1921 = vmul.f32 %v1911, 1.442695
        %v1922 = vpow.pop %v1921
        %v1923 = vmul.f32 %v1912, 1.442695
        %v1924 = vpow.pop %v1923
        %v1925 = vmul.f32 %v1913, 1.442695
        %v1926 = vpow.pop %v1925
        %v1927 = vmul.f32 %v1914, 1.442695
        %v1928 = vpow.pop %v1927
        %v1929 = vmul.f32 %v1915, 1.442695
        %v1930 = vpow.pop %v1929
        %v1931 = vmul.f32 %v1916, 1.442695
        %v1932 = vpow.pop %v1931
        %v1933 = vadd.f32 %v1918, 1.0
        %v1934 = vadd.f32 %v1920, 1.0
        %v1935 = vadd.f32 %v1922, 1.0
        %v1936 = vadd.f32 %v1924, 1.0
        %v1937 = vadd.f32 %v1926, 1.0
        %v1938 = vadd.f32 %v1928, 1.0
        %v1939 = vadd.f32 %v1930, 1.0
        %v1940 = vadd.f32 %v1932, 1.0
        %v1941 = vrcp.pop %v1933
        %v1942 = vmul.f32 1.0, %v1941
        %v1943 = vrcp.pop %v1934
        %v1944 = vmul.f32 1.0, %v1943
        %v1945 = vrcp.pop %v1935
        %v1946 = vmul.f32 1.0, %v1945
        %v1947 = vrcp.pop %v1936
        %v1948 = vmul.f32 1.0, %v1947
        %v1949 = vrcp.pop %v1937
        %v1950 = vmul.f32 1.0, %v1949
        %v1951 = vrcp.pop %v1938
        %v1952 = vmul.f32 1.0, %v1951
        %v1953 = vrcp.pop %v1939
        %v1954 = vmul.f32 1.0, %v1953
        %v1955 = vrcp.pop %v1940
        %v1956 = vmul.f32 1.0, %v1955
        %v1957 = vld [vmem:[%s8 + $0x3] sm:$0x1]
        %v1958 = vlaneseq
        %v1959 = vshrl.u32 %v1958, 7
        %v1960 = vsub.s32 0, %v1959
        %v1961 = vrot.slane %v1957, %v1960
        %1963 = vrot.lane.b32.xlu0 %v1961, 16
        %v1964 = vpop.permute.xlu0 %1963
        %v1966 = vadd.f32 %v1866, %v1964
        %v1967 = vadd.f32 %v1869, %v1964
        %v1968 = vadd.f32 %v1874, %v1964
        %v1969 = vadd.f32 %v1877, %v1964
        %v1970 = vadd.f32 %v1882, %v1964
        %v1971 = vadd.f32 %v1885, %v1964
        %v1972 = vadd.f32 %v1890, %v1964
        %v1973 = vadd.f32 %v1893, %v1964
        %v1974 = vxor.u32 %v1966, 2147483648
        %v1975 = vxor.u32 %v1967, 2147483648
        %v1976 = vxor.u32 %v1968, 2147483648
        %v1977 = vxor.u32 %v1969, 2147483648
        %v1978 = vxor.u32 %v1970, 2147483648
        %v1979 = vxor.u32 %v1971, 2147483648
        %v1980 = vxor.u32 %v1972, 2147483648
        %v1981 = vxor.u32 %v1973, 2147483648
        %v1982 = vmul.f32 %v1974, 1.442695
        %v1983 = vpow.pop %v1982
        %v1984 = vmul.f32 %v1975, 1.442695
        %v1985 = vpow.pop %v1984
        %v1986 = vmul.f32 %v1976, 1.442695
        %v1987 = vpow.pop %v1986
        %v1988 = vmul.f32 %v1977, 1.442695
        %v1989 = vpow.pop %v1988
        %v1990 = vmul.f32 %v1978, 1.442695
        %v1991 = vpow.pop %v1990
        %v1992 = vmul.f32 %v1979, 1.442695
        %v1993 = vpow.pop %v1992
        %v1994 = vmul.f32 %v1980, 1.442695
        %v1995 = vpow.pop %v1994
        %v1996 = vmul.f32 %v1981, 1.442695
        %v1997 = vpow.pop %v1996
        %v1998 = vadd.f32 %v1983, 1.0
        %v1999 = vadd.f32 %v1985, 1.0
        %v2000 = vadd.f32 %v1987, 1.0
        %v2001 = vadd.f32 %v1989, 1.0
        %v2002 = vadd.f32 %v1991, 1.0
        %v2003 = vadd.f32 %v1993, 1.0
        %v2004 = vadd.f32 %v1995, 1.0
        %v2005 = vadd.f32 %v1997, 1.0
        %v2006 = vrcp.pop %v1998
        %v2007 = vmul.f32 1.0, %v2006
        %v2008 = vrcp.pop %v1999
        %v2009 = vmul.f32 1.0, %v2008
        %v2010 = vrcp.pop %v2000
        %v2011 = vmul.f32 1.0, %v2010
        %v2012 = vrcp.pop %v2001
        %v2013 = vmul.f32 1.0, %v2012
        %v2014 = vrcp.pop %v2002
        %v2015 = vmul.f32 1.0, %v2014
        %v2016 = vrcp.pop %v2003
        %v2017 = vmul.f32 1.0, %v2016
        %v2018 = vrcp.pop %v2004
        %v2019 = vmul.f32 1.0, %v2018
        %v2020 = vrcp.pop %v2005
        %v2021 = vmul.f32 1.0, %v2020
        %v2022 = vld [vmem:[%s8 + $0x4] sm:$0x1]
        %v2023 = vlaneseq
        %v2024 = vshrl.u32 %v2023, 7
        %v2025 = vsub.s32 0, %v2024
        %v2026 = vrot.slane %v2022, %v2025
        %2028 = vrot.lane.b32.xlu0 %v2026, 32
        %v2029 = vpop.permute.xlu0 %2028
        %v2031 = vadd.f32 %v1866, %v2029
        %v2032 = vadd.f32 %v1869, %v2029
        %v2033 = vadd.f32 %v1874, %v2029
        %v2034 = vadd.f32 %v1877, %v2029
        %v2035 = vadd.f32 %v1882, %v2029
        %v2036 = vadd.f32 %v1885, %v2029
        %v2037 = vadd.f32 %v1890, %v2029
        %v2038 = vadd.f32 %v1893, %v2029
        %v2039 = vld [vmem:[%s8 + $0x5] sm:$0x1]
        %v2040 = vlaneseq
        %v2041 = vshrl.u32 %v2040, 7
        %v2042 = vsub.s32 0, %v2041
        %v2043 = vrot.slane %v2039, %v2042
        %v2044 = vmul.f32 %v1942, %v2043
        %v2045 = vmul.f32 %v1944, %v2043
        %v2046 = vmul.f32 %v1946, %v2043
        %v2047 = vmul.f32 %v1948, %v2043
        %v2048 = vmul.f32 %v1950, %v2043
        %v2049 = vmul.f32 %v1952, %v2043
        %v2050 = vmul.f32 %v1954, %v2043
        %v2051 = vmul.f32 %v1956, %v2043
        %2060 = vrot.lane.b32.xlu0 %v2044, 32
        %v2061 = vpop.permute.xlu0 %2060
        %2062 = vrot.lane.b32.xlu0 %v2045, 32
        %v2063 = vpop.permute.xlu0 %2062
        %2064 = vrot.lane.b32.xlu0 %v2046, 32
        %v2065 = vpop.permute.xlu0 %2064
        %2066 = vrot.lane.b32.xlu0 %v2047, 32
        %v2067 = vpop.permute.xlu0 %2066
        %2068 = vrot.lane.b32.xlu0 %v2048, 32
        %v2069 = vpop.permute.xlu0 %2068
        %2070 = vrot.lane.b32.xlu0 %v2049, 32
        %v2071 = vpop.permute.xlu0 %2070
        %2072 = vrot.lane.b32.xlu0 %v2050, 32
        %v2073 = vpop.permute.xlu0 %2072
        %2074 = vrot.lane.b32.xlu0 %v2051, 32
        %v2075 = vpop.permute.xlu0 %2074
        %v2084 = vadd.f32 %v2031, %v2061
        %v2085 = vadd.f32 %v2032, %v2063
        %v2086 = vadd.f32 %v2033, %v2065
        %v2087 = vadd.f32 %v2034, %v2067
        %v2088 = vadd.f32 %v2035, %v2069
        %v2089 = vadd.f32 %v2036, %v2071
        %v2090 = vadd.f32 %v2037, %v2073
        %v2091 = vadd.f32 %v2038, %v2075
        %v2092 = vtanh.pop %v2084
        %v2093 = vtanh.pop %v2085
        %v2094 = vtanh.pop %v2086
        %v2095 = vtanh.pop %v2087
        %v2096 = vtanh.pop %v2088
        %v2097 = vtanh.pop %v2089
        %v2098 = vtanh.pop %v2090
        %v2099 = vtanh.pop %v2091
        %v2100 = vsub.f32 1.0, %v2007
        %v2101 = vsub.f32 1.0, %v2009
        %v2102 = vsub.f32 1.0, %v2011
        %v2103 = vsub.f32 1.0, %v2013
        %v2104 = vsub.f32 1.0, %v2015
        %v2105 = vsub.f32 1.0, %v2017
        %v2106 = vsub.f32 1.0, %v2019
        %v2107 = vsub.f32 1.0, %v2021
        %2116 = vrot.lane.b32.xlu0 %v2092, 112
        %v2117 = vpop.permute.xlu0 %2116
        %2118 = vrot.lane.b32.xlu0 %v2093, 112
        %v2119 = vpop.permute.xlu0 %2118
        %2120 = vrot.lane.b32.xlu0 %v2094, 112
        %v2121 = vpop.permute.xlu0 %2120
        %2122 = vrot.lane.b32.xlu0 %v2095, 112
        %v2123 = vpop.permute.xlu0 %2122
        %2124 = vrot.lane.b32.xlu0 %v2096, 112
        %v2125 = vpop.permute.xlu0 %2124
        %2126 = vrot.lane.b32.xlu0 %v2097, 112
        %v2127 = vpop.permute.xlu0 %2126
        %2128 = vrot.lane.b32.xlu0 %v2098, 112
        %v2129 = vpop.permute.xlu0 %2128
        %2130 = vrot.lane.b32.xlu0 %v2099, 112
        %v2131 = vpop.permute.xlu0 %2130
        %v2140 = vmul.f32 %v2100, %v2117
        %v2141 = vmul.f32 %v2101, %v2119
        %v2142 = vmul.f32 %v2102, %v2121
        %v2143 = vmul.f32 %v2103, %v2123
        %v2144 = vmul.f32 %v2104, %v2125
        %v2145 = vmul.f32 %v2105, %v2127
        %v2146 = vmul.f32 %v2106, %v2129
        %v2147 = vmul.f32 %v2107, %v2131
        %v2148 = vmul.f32 %v2140, %v2140
        %v2149 = vmul.f32 %v2141, %v2141
        %v2150 = vmul.f32 %v2142, %v2142
        %v2151 = vmul.f32 %v2143, %v2143
        %v2152 = vmul.f32 %v2144, %v2144
        %v2153 = vmul.f32 %v2145, %v2145
        %v2154 = vmul.f32 %v2146, %v2146
        %v2155 = vmul.f32 %v2147, %v2147
        %v2156 = vmul.f32 %v1681, %v1681
        %v2157 = vmul.f32 %v1684, %v1684
        %v2158 = vmul.f32 %v1689, %v1689
        %v2159 = vmul.f32 %v1692, %v1692
        %v2160 = vmul.f32 %v1697, %v1697
        %v2161 = vmul.f32 %v1700, %v1700
        %v2162 = vmul.f32 %v1705, %v1705
        %v2163 = vmul.f32 %v1708, %v1708
        %v2164 = vmul.f32 %v1713, %v1713
        %v2165 = vmul.f32 %v1716, %v1716
        %v2166 = vmul.f32 %v1721, %v1721
        %v2167 = vmul.f32 %v1724, %v1724
        %v2168 = vmul.f32 %v1729, %v1729
        %v2169 = vmul.f32 %v1732, %v1732
        %v2170 = vmul.f32 %v1737, %v1737
        %v2171 = vmul.f32 %v1740, %v1740
        %v2172 = vmul.f32 %v1745, %v1745
        %v2173 = vmul.f32 %v1748, %v1748
        %v2174 = vmul.f32 %v1753, %v1753
        %v2175 = vmul.f32 %v1756, %v1756
        %v2176 = vmul.f32 %v1761, %v1761
        %v2177 = vmul.f32 %v1764, %v1764
        %v2178 = vmul.f32 %v1769, %v1769
        %v2179 = vmul.f32 %v1772, %v1772
        %2181 = vrot.lane.b32.xlu0 %v2148, 112
        %v2182 = vpop.permute.xlu0 %2181
        %v2183 = vsel %vm1463, %v2182, 0
        %v2186 = vsel %vm1463, %v2156, 0
        %v2189 = vsel %vm1463, %v2157, 0
        %v2192 = vsel %vm1463, %v2158, 0
        %2194 = vmatprep.subr.mxu0 0.0
        %2195 = vmatpush1.xpose.msra.mxu0 %v2186
        %2196 = vmatprep.subr.mxu0 0.0
        %2197 = vmatpush1.xpose.msra.mxu0 %v2189
        %2198 = vmatprep.subr.mxu0 0.0
        %2199 = vmatpush1.xpose.msra.mxu0 %v2192
        %2200 = vmatprep.subr.mxu0 0.0
        %2201 = vmatpush1.xpose.msra.mxu0 0.0
        %2202 = vmatprep.subr.mxu0 0.0
        %2203 = vmatpush1.xpose.msra.mxu0 0.0
        %2204 = vmatprep.subr.mxu0 0.0
        %2205 = vmatpush1.xpose.msra.mxu0 0.0
        %2206 = vmatprep.subr.mxu0 0.0
        %2207 = vmatpush1.xpose.msra.mxu0 0.0
        %2208 = vmatprep.subr.mxu0 0.0
        %2209 = vmatpush1.xpose.msra.mxu0 0.0
        %2210 = vmatprep.subr.mxu0 0.0
        %2211 = vmatpush1.xpose.msra.mxu0 0.0
        %2212 = vmatprep.subr.mxu0 0.0
        %2213 = vmatpush1.xpose.msra.mxu0 0.0
        %2214 = vmatprep.subr.mxu0 0.0
        %2215 = vmatpush1.xpose.msra.mxu0 0.0
        %2216 = vmatprep.subr.mxu0 0.0
        %2217 = vmatpush1.xpose.msra.mxu0 0.0
        %2218 = vmatprep.subr.mxu0 0.0
        %2219 = vmatpush1.xpose.msra.mxu0 0.0
        %2220 = vmatprep.subr.mxu0 0.0
        %2221 = vmatpush1.xpose.msra.mxu0 0.0
        %2222 = vmatprep.subr.mxu0 0.0
        %2223 = vmatpush1.xpose.msra.mxu0 0.0
        %2224 = vmatprep.subr.mxu0 0.0
        %2225 = vmatpush1.xpose.msra.mxu0 0.0
        %2226 = vmatprep.subr.mxu0 0.0
        %2227 = vmatpush1.xpose.msra.mxu0 0.0
        %2228 = vmatprep.subr.mxu0 0.0
        %2229 = vmatpush1.xpose.msra.mxu0 0.0
        %2230 = vmatprep.subr.mxu0 0.0
        %2231 = vmatpush1.xpose.msra.mxu0 0.0
        %2232 = vmatprep.subr.mxu0 0.0
        %2233 = vmatpush1.xpose.msra.mxu0 0.0
        %2234 = vmatprep.subr.mxu0 0.0
        %2235 = vmatpush1.xpose.msra.mxu0 0.0
        %2236 = vmatprep.subr.mxu0 0.0
        %2237 = vmatpush1.xpose.msra.mxu0 0.0
        %2238 = vmatprep.subr.mxu0 0.0
        %2239 = vmatpush1.xpose.msra.mxu0 0.0
        %2240 = vmatprep.subr.mxu0 0.0
        %2241 = vmatpush1.xpose.msra.mxu0 0.0
        %2242 = vmatprep.subr.mxu0 0.0
        %2243 = vmatpush1.xpose.msra.mxu0 0.0
        %2244 = vmatprep.subr.mxu0 0.0
        %2245 = vmatpush1.xpose.msra.mxu0 0.0
        %2246 = vmatprep.subr.mxu0 0.0
        %2247 = vmatpush1.xpose.msra.mxu0 0.0
        %2248 = vmatprep.subr.mxu0 0.0
        %2249 = vmatpush1.xpose.msra.mxu0 0.0
        %2250 = vmatprep.subr.mxu0 0.0
        %2251 = vmatpush1.xpose.msra.mxu0 0.0
        %2252 = vmatprep.subr.mxu0 0.0
        %2253 = vmatpush1.xpose.msra.mxu0 0.0
        %2254 = vmatprep.subr.mxu0 0.0
        %2255 = vmatpush1.xpose.msra.mxu0 0.0
        %2256 = vmatprep.subr.mxu0 0.0
        %2257 = vmatpush1.xpose.msra.mxu0 0.0
        %2258 = vmatprep.mubr.f32.mxu0 0.0
        %2259 = vmatmul.mubr.f32.gmra.mrb[0].mxu0 %v2183
        %v2260 = vpop.f32.mrb[0].mxu0
        %v2261 = vadd.f32 0.0, %v2260
        %v2262 = vpop.f32.mrb[0].mxu0
        %2263 = vdwg.mxu0
        %2265 = vrot.lane.b32.xlu0 %v2149, 112
        %v2266 = vpop.permute.xlu0 %2265
        %v2267 = vsel %vm1463, %v2266, 0
        %v2270 = vsel %vm1463, %v2159, 0
        %v2273 = vsel %vm1463, %v2160, 0
        %v2276 = vsel %vm1463, %v2161, 0
        %2278 = vmatprep.subr.mxu0 0.0
        %2279 = vmatpush1.xpose.msra.mxu0 %v2270
        %2280 = vmatprep.subr.mxu0 0.0
        %2281 = vmatpush1.xpose.msra.mxu0 %v2273
        %2282 = vmatprep.subr.mxu0 0.0
        %2283 = vmatpush1.xpose.msra.mxu0 %v2276
        %2284 = vmatprep.subr.mxu0 0.0
        %2285 = vmatpush1.xpose.msra.mxu0 0.0
        %2286 = vmatprep.subr.mxu0 0.0
        %2287 = vmatpush1.xpose.msra.mxu0 0.0
        %2288 = vmatprep.subr.mxu0 0.0
        %2289 = vmatpush1.xpose.msra.mxu0 0.0
        %2290 = vmatprep.subr.mxu0 0.0
        %2291 = vmatpush1.xpose.msra.mxu0 0.0
        %2292 = vmatprep.subr.mxu0 0.0
        %2293 = vmatpush1.xpose.msra.mxu0 0.0
        %2294 = vmatprep.subr.mxu0 0.0
        %2295 = vmatpush1.xpose.msra.mxu0 0.0
        %2296 = vmatprep.subr.mxu0 0.0
        %2297 = vmatpush1.xpose.msra.mxu0 0.0
        %2298 = vmatprep.subr.mxu0 0.0
        %2299 = vmatpush1.xpose.msra.mxu0 0.0
        %2300 = vmatprep.subr.mxu0 0.0
        %2301 = vmatpush1.xpose.msra.mxu0 0.0
        %2302 = vmatprep.subr.mxu0 0.0
        %2303 = vmatpush1.xpose.msra.mxu0 0.0
        %2304 = vmatprep.subr.mxu0 0.0
        %2305 = vmatpush1.xpose.msra.mxu0 0.0
        %2306 = vmatprep.subr.mxu0 0.0
        %2307 = vmatpush1.xpose.msra.mxu0 0.0
        %2308 = vmatprep.subr.mxu0 0.0
        %2309 = vmatpush1.xpose.msra.mxu0 0.0
        %2310 = vmatprep.subr.mxu0 0.0
        %2311 = vmatpush1.xpose.msra.mxu0 0.0
        %2312 = vmatprep.subr.mxu0 0.0
        %2313 = vmatpush1.xpose.msra.mxu0 0.0
        %2314 = vmatprep.subr.mxu0 0.0
        %2315 = vmatpush1.xpose.msra.mxu0 0.0
        %2316 = vmatprep.subr.mxu0 0.0
        %2317 = vmatpush1.xpose.msra.mxu0 0.0
        %2318 = vmatprep.subr.mxu0 0.0
        %2319 = vmatpush1.xpose.msra.mxu0 0.0
        %2320 = vmatprep.subr.mxu0 0.0
        %2321 = vmatpush1.xpose.msra.mxu0 0.0
        %2322 = vmatprep.subr.mxu0 0.0
        %2323 = vmatpush1.xpose.msra.mxu0 0.0
        %2324 = vmatprep.subr.mxu0 0.0
        %2325 = vmatpush1.xpose.msra.mxu0 0.0
        %2326 = vmatprep.subr.mxu0 0.0
        %2327 = vmatpush1.xpose.msra.mxu0 0.0
        %2328 = vmatprep.subr.mxu0 0.0
        %2329 = vmatpush1.xpose.msra.mxu0 0.0
        %2330 = vmatprep.subr.mxu0 0.0
        %2331 = vmatpush1.xpose.msra.mxu0 0.0
        %2332 = vmatprep.subr.mxu0 0.0
        %2333 = vmatpush1.xpose.msra.mxu0 0.0
        %2334 = vmatprep.subr.mxu0 0.0
        %2335 = vmatpush1.xpose.msra.mxu0 0.0
        %2336 = vmatprep.subr.mxu0 0.0
        %2337 = vmatpush1.xpose.msra.mxu0 0.0
        %2338 = vmatprep.subr.mxu0 0.0
        %2339 = vmatpush1.xpose.msra.mxu0 0.0
        %2340 = vmatprep.subr.mxu0 0.0
        %2341 = vmatpush1.xpose.msra.mxu0 0.0
        %2342 = vmatprep.mubr.f32.mxu0 0.0
        %2343 = vmatmul.mubr.f32.gmra.mrb[0].mxu0 %v2267
        %v2344 = vpop.f32.mrb[0].mxu0
        %v2345 = vadd.f32 0.0, %v2344
        %v2346 = vpop.f32.mrb[0].mxu0
        %2347 = vdwg.mxu0
        %2349 = vrot.lane.b32.xlu0 %v2150, 112
        %v2350 = vpop.permute.xlu0 %2349
        %v2351 = vsel %vm1463, %v2350, 0
        %v2354 = vsel %vm1463, %v2162, 0
        %v2357 = vsel %vm1463, %v2163, 0
        %v2360 = vsel %vm1463, %v2164, 0
        %2362 = vmatprep.subr.mxu0 0.0
        %2363 = vmatpush1.xpose.msra.mxu0 %v2354
        %2364 = vmatprep.subr.mxu0 0.0
        %2365 = vmatpush1.xpose.msra.mxu0 %v2357
        %2366 = vmatprep.subr.mxu0 0.0
        %2367 = vmatpush1.xpose.msra.mxu0 %v2360
        %2368 = vmatprep.subr.mxu0 0.0
        %2369 = vmatpush1.xpose.msra.mxu0 0.0
        %2370 = vmatprep.subr.mxu0 0.0
        %2371 = vmatpush1.xpose.msra.mxu0 0.0
        %2372 = vmatprep.subr.mxu0 0.0
        %2373 = vmatpush1.xpose.msra.mxu0 0.0
        %2374 = vmatprep.subr.mxu0 0.0
        %2375 = vmatpush1.xpose.msra.mxu0 0.0
        %2376 = vmatprep.subr.mxu0 0.0
        %2377 = vmatpush1.xpose.msra.mxu0 0.0
        %2378 = vmatprep.subr.mxu0 0.0
        %2379 = vmatpush1.xpose.msra.mxu0 0.0
        %2380 = vmatprep.subr.mxu0 0.0
        %2381 = vmatpush1.xpose.msra.mxu0 0.0
        %2382 = vmatprep.subr.mxu0 0.0
        %2383 = vmatpush1.xpose.msra.mxu0 0.0
        %2384 = vmatprep.subr.mxu0 0.0
        %2385 = vmatpush1.xpose.msra.mxu0 0.0
        %2386 = vmatprep.subr.mxu0 0.0
        %2387 = vmatpush1.xpose.msra.mxu0 0.0
        %2388 = vmatprep.subr.mxu0 0.0
        %2389 = vmatpush1.xpose.msra.mxu0 0.0
        %2390 = vmatprep.subr.mxu0 0.0
        %2391 = vmatpush1.xpose.msra.mxu0 0.0
        %2392 = vmatprep.subr.mxu0 0.0
        %2393 = vmatpush1.xpose.msra.mxu0 0.0
        %2394 = vmatprep.subr.mxu0 0.0
        %2395 = vmatpush1.xpose.msra.mxu0 0.0
        %2396 = vmatprep.subr.mxu0 0.0
        %2397 = vmatpush1.xpose.msra.mxu0 0.0
        %2398 = vmatprep.subr.mxu0 0.0
        %2399 = vmatpush1.xpose.msra.mxu0 0.0
        %2400 = vmatprep.subr.mxu0 0.0
        %2401 = vmatpush1.xpose.msra.mxu0 0.0
        %2402 = vmatprep.subr.mxu0 0.0
        %2403 = vmatpush1.xpose.msra.mxu0 0.0
        %2404 = vmatprep.subr.mxu0 0.0
        %2405 = vmatpush1.xpose.msra.mxu0 0.0
        %2406 = vmatprep.subr.mxu0 0.0
        %2407 = vmatpush1.xpose.msra.mxu0 0.0
        %2408 = vmatprep.subr.mxu0 0.0
        %2409 = vmatpush1.xpose.msra.mxu0 0.0
        %2410 = vmatprep.subr.mxu0 0.0
        %2411 = vmatpush1.xpose.msra.mxu0 0.0
        %2412 = vmatprep.subr.mxu0 0.0
        %2413 = vmatpush1.xpose.msra.mxu0 0.0
        %2414 = vmatprep.subr.mxu0 0.0
        %2415 = vmatpush1.xpose.msra.mxu0 0.0
        %2416 = vmatprep.subr.mxu0 0.0
        %2417 = vmatpush1.xpose.msra.mxu0 0.0
        %2418 = vmatprep.subr.mxu0 0.0
        %2419 = vmatpush1.xpose.msra.mxu0 0.0
        %2420 = vmatprep.subr.mxu0 0.0
        %2421 = vmatpush1.xpose.msra.mxu0 0.0
        %2422 = vmatprep.subr.mxu0 0.0
        %2423 = vmatpush1.xpose.msra.mxu0 0.0
        %2424 = vmatprep.subr.mxu0 0.0
        %2425 = vmatpush1.xpose.msra.mxu0 0.0
        %2426 = vmatprep.mubr.f32.mxu0 0.0
        %2427 = vmatmul.mubr.f32.gmra.mrb[0].mxu0 %v2351
        %v2428 = vpop.f32.mrb[0].mxu0
        %v2429 = vadd.f32 0.0, %v2428
        %v2430 = vpop.f32.mrb[0].mxu0
        %2431 = vdwg.mxu0
        %2433 = vrot.lane.b32.xlu0 %v2151, 112
        %v2434 = vpop.permute.xlu0 %2433
        %v2435 = vsel %vm1463, %v2434, 0
        %v2438 = vsel %vm1463, %v2165, 0
        %v2441 = vsel %vm1463, %v2166, 0
        %v2444 = vsel %vm1463, %v2167, 0
        %2446 = vmatprep.subr.mxu0 0.0
        %2447 = vmatpush1.xpose.msra.mxu0 %v2438
        %2448 = vmatprep.subr.mxu0 0.0
        %2449 = vmatpush1.xpose.msra.mxu0 %v2441
        %2450 = vmatprep.subr.mxu0 0.0
        %2451 = vmatpush1.xpose.msra.mxu0 %v2444
        %2452 = vmatprep.subr.mxu0 0.0
        %2453 = vmatpush1.xpose.msra.mxu0 0.0
        %2454 = vmatprep.subr.mxu0 0.0
        %2455 = vmatpush1.xpose.msra.mxu0 0.0
        %2456 = vmatprep.subr.mxu0 0.0
        %2457 = vmatpush1.xpose.msra.mxu0 0.0
        %2458 = vmatprep.subr.mxu0 0.0
        %2459 = vmatpush1.xpose.msra.mxu0 0.0
        %2460 = vmatprep.subr.mxu0 0.0
        %2461 = vmatpush1.xpose.msra.mxu0 0.0
        %2462 = vmatprep.subr.mxu0 0.0
        %2463 = vmatpush1.xpose.msra.mxu0 0.0
        %2464 = vmatprep.subr.mxu0 0.0
        %2465 = vmatpush1.xpose.msra.mxu0 0.0
        %2466 = vmatprep.subr.mxu0 0.0
        %2467 = vmatpush1.xpose.msra.mxu0 0.0
        %2468 = vmatprep.subr.mxu0 0.0
        %2469 = vmatpush1.xpose.msra.mxu0 0.0
        %2470 = vmatprep.subr.mxu0 0.0
        %2471 = vmatpush1.xpose.msra.mxu0 0.0
        %2472 = vmatprep.subr.mxu0 0.0
        %2473 = vmatpush1.xpose.msra.mxu0 0.0
        %2474 = vmatprep.subr.mxu0 0.0
        %2475 = vmatpush1.xpose.msra.mxu0 0.0
        %2476 = vmatprep.subr.mxu0 0.0
        %2477 = vmatpush1.xpose.msra.mxu0 0.0
        %2478 = vmatprep.subr.mxu0 0.0
        %2479 = vmatpush1.xpose.msra.mxu0 0.0
        %2480 = vmatprep.subr.mxu0 0.0
        %2481 = vmatpush1.xpose.msra.mxu0 0.0
        %2482 = vmatprep.subr.mxu0 0.0
        %2483 = vmatpush1.xpose.msra.mxu0 0.0
        %2484 = vmatprep.subr.mxu0 0.0
        %2485 = vmatpush1.xpose.msra.mxu0 0.0
        %2486 = vmatprep.subr.mxu0 0.0
        %2487 = vmatpush1.xpose.msra.mxu0 0.0
        %2488 = vmatprep.subr.mxu0 0.0
        %2489 = vmatpush1.xpose.msra.mxu0 0.0
        %2490 = vmatprep.subr.mxu0 0.0
        %2491 = vmatpush1.xpose.msra.mxu0 0.0
        %2492 = vmatprep.subr.mxu0 0.0
        %2493 = vmatpush1.xpose.msra.mxu0 0.0
        %2494 = vmatprep.subr.mxu0 0.0
        %2495 = vmatpush1.xpose.msra.mxu0 0.0
        %2496 = vmatprep.subr.mxu0 0.0
        %2497 = vmatpush1.xpose.msra.mxu0 0.0
        %2498 = vmatprep.subr.mxu0 0.0
        %2499 = vmatpush1.xpose.msra.mxu0 0.0
        %2500 = vmatprep.subr.mxu0 0.0
        %2501 = vmatpush1.xpose.msra.mxu0 0.0
        %2502 = vmatprep.subr.mxu0 0.0
        %2503 = vmatpush1.xpose.msra.mxu0 0.0
        %2504 = vmatprep.subr.mxu0 0.0
        %2505 = vmatpush1.xpose.msra.mxu0 0.0
        %2506 = vmatprep.subr.mxu0 0.0
        %2507 = vmatpush1.xpose.msra.mxu0 0.0
        %2508 = vmatprep.subr.mxu0 0.0
        %2509 = vmatpush1.xpose.msra.mxu0 0.0
        %2510 = vmatprep.mubr.f32.mxu0 0.0
        %2511 = vmatmul.mubr.f32.gmra.mrb[0].mxu0 %v2435
        %v2512 = vpop.f32.mrb[0].mxu0
        %v2513 = vadd.f32 0.0, %v2512
        %v2514 = vpop.f32.mrb[0].mxu0
        %2515 = vdwg.mxu0
        %2517 = vrot.lane.b32.xlu0 %v2152, 112
        %v2518 = vpop.permute.xlu0 %2517
        %v2519 = vsel %vm1463, %v2518, 0
        %v2522 = vsel %vm1463, %v2168, 0
        %v2525 = vsel %vm1463, %v2169, 0
        %v2528 = vsel %vm1463, %v2170, 0
        %2530 = vmatprep.subr.mxu0 0.0
        %2531 = vmatpush1.xpose.msra.mxu0 %v2522
        %2532 = vmatprep.subr.mxu0 0.0
        %2533 = vmatpush1.xpose.msra.mxu0 %v2525
        %2534 = vmatprep.subr.mxu0 0.0
        %2535 = vmatpush1.xpose.msra.mxu0 %v2528
        %2536 = vmatprep.subr.mxu0 0.0
        %2537 = vmatpush1.xpose.msra.mxu0 0.0
        %2538 = vmatprep.subr.mxu0 0.0
        %2539 = vmatpush1.xpose.msra.mxu0 0.0
        %2540 = vmatprep.subr.mxu0 0.0
        %2541 = vmatpush1.xpose.msra.mxu0 0.0
        %2542 = vmatprep.subr.mxu0 0.0
        %2543 = vmatpush1.xpose.msra.mxu0 0.0
        %2544 = vmatprep.subr.mxu0 0.0
        %2545 = vmatpush1.xpose.msra.mxu0 0.0
        %2546 = vmatprep.subr.mxu0 0.0
        %2547 = vmatpush1.xpose.msra.mxu0 0.0
        %2548 = vmatprep.subr.mxu0 0.0
        %2549 = vmatpush1.xpose.msra.mxu0 0.0
        %2550 = vmatprep.subr.mxu0 0.0
        %2551 = vmatpush1.xpose.msra.mxu0 0.0
        %2552 = vmatprep.subr.mxu0 0.0
        %2553 = vmatpush1.xpose.msra.mxu0 0.0
        %2554 = vmatprep.subr.mxu0 0.0
        %2555 = vmatpush1.xpose.msra.mxu0 0.0
        %2556 = vmatprep.subr.mxu0 0.0
        %2557 = vmatpush1.xpose.msra.mxu0 0.0
        %2558 = vmatprep.subr.mxu0 0.0
        %2559 = vmatpush1.xpose.msra.mxu0 0.0
        %2560 = vmatprep.subr.mxu0 0.0
        %2561 = vmatpush1.xpose.msra.mxu0 0.0
        %2562 = vmatprep.subr.mxu0 0.0
        %2563 = vmatpush1.xpose.msra.mxu0 0.0
        %2564 = vmatprep.subr.mxu0 0.0
        %2565 = vmatpush1.xpose.msra.mxu0 0.0
        %2566 = vmatprep.subr.mxu0 0.0
        %2567 = vmatpush1.xpose.msra.mxu0 0.0
        %2568 = vmatprep.subr.mxu0 0.0
        %2569 = vmatpush1.xpose.msra.mxu0 0.0
        %2570 = vmatprep.subr.mxu0 0.0
        %2571 = vmatpush1.xpose.msra.mxu0 0.0
        %2572 = vmatprep.subr.mxu0 0.0
        %2573 = vmatpush1.xpose.msra.mxu0 0.0
        %2574 = vmatprep.subr.mxu0 0.0
        %2575 = vmatpush1.xpose.msra.mxu0 0.0
        %2576 = vmatprep.subr.mxu0 0.0
        %2577 = vmatpush1.xpose.msra.mxu0 0.0
        %2578 = vmatprep.subr.mxu0 0.0
        %2579 = vmatpush1.xpose.msra.mxu0 0.0
        %2580 = vmatprep.subr.mxu0 0.0
        %2581 = vmatpush1.xpose.msra.mxu0 0.0
        %2582 = vmatprep.subr.mxu0 0.0
        %2583 = vmatpush1.xpose.msra.mxu0 0.0
        %2584 = vmatprep.subr.mxu0 0.0
        %2585 = vmatpush1.xpose.msra.mxu0 0.0
        %2586 = vmatprep.subr.mxu0 0.0
        %2587 = vmatpush1.xpose.msra.mxu0 0.0
        %2588 = vmatprep.subr.mxu0 0.0
        %2589 = vmatpush1.xpose.msra.mxu0 0.0
        %2590 = vmatprep.subr.mxu0 0.0
        %2591 = vmatpush1.xpose.msra.mxu0 0.0
        %2592 = vmatprep.subr.mxu0 0.0
        %2593 = vmatpush1.xpose.msra.mxu0 0.0
        %2594 = vmatprep.mubr.f32.mxu0 0.0
        %2595 = vmatmul.mubr.f32.gmra.mrb[0].mxu0 %v2519
        %v2596 = vpop.f32.mrb[0].mxu0
        %v2597 = vadd.f32 0.0, %v2596
        %v2598 = vpop.f32.mrb[0].mxu0
        %2599 = vdwg.mxu0
        %2601 = vrot.lane.b32.xlu0 %v2153, 112
        %v2602 = vpop.permute.xlu0 %2601
        %v2603 = vsel %vm1463, %v2602, 0
        %v2606 = vsel %vm1463, %v2171, 0
        %v2609 = vsel %vm1463, %v2172, 0
        %v2612 = vsel %vm1463, %v2173, 0
        %2614 = vmatprep.subr.mxu0 0.0
        %2615 = vmatpush1.xpose.msra.mxu0 %v2606
        %2616 = vmatprep.subr.mxu0 0.0
        %2617 = vmatpush1.xpose.msra.mxu0 %v2609
        %2618 = vmatprep.subr.mxu0 0.0
        %2619 = vmatpush1.xpose.msra.mxu0 %v2612
        %2620 = vmatprep.subr.mxu0 0.0
        %2621 = vmatpush1.xpose.msra.mxu0 0.0
        %2622 = vmatprep.subr.mxu0 0.0
        %2623 = vmatpush1.xpose.msra.mxu0 0.0
        %2624 = vmatprep.subr.mxu0 0.0
        %2625 = vmatpush1.xpose.msra.mxu0 0.0
        %2626 = vmatprep.subr.mxu0 0.0
        %2627 = vmatpush1.xpose.msra.mxu0 0.0
        %2628 = vmatprep.subr.mxu0 0.0
        %2629 = vmatpush1.xpose.msra.mxu0 0.0
        %2630 = vmatprep.subr.mxu0 0.0
        %2631 = vmatpush1.xpose.msra.mxu0 0.0
        %2632 = vmatprep.subr.mxu0 0.0
        %2633 = vmatpush1.xpose.msra.mxu0 0.0
        %2634 = vmatprep.subr.mxu0 0.0
        %2635 = vmatpush1.xpose.msra.mxu0 0.0
        %2636 = vmatprep.subr.mxu0 0.0
        %2637 = vmatpush1.xpose.msra.mxu0 0.0
        %2638 = vmatprep.subr.mxu0 0.0
        %2639 = vmatpush1.xpose.msra.mxu0 0.0
        %2640 = vmatprep.subr.mxu0 0.0
        %2641 = vmatpush1.xpose.msra.mxu0 0.0
        %2642 = vmatprep.subr.mxu0 0.0
        %2643 = vmatpush1.xpose.msra.mxu0 0.0
        %2644 = vmatprep.subr.mxu0 0.0
        %2645 = vmatpush1.xpose.msra.mxu0 0.0
        %2646 = vmatprep.subr.mxu0 0.0
        %2647 = vmatpush1.xpose.msra.mxu0 0.0
        %2648 = vmatprep.subr.mxu0 0.0
        %2649 = vmatpush1.xpose.msra.mxu0 0.0
        %2650 = vmatprep.subr.mxu0 0.0
        %2651 = vmatpush1.xpose.msra.mxu0 0.0
        %2652 = vmatprep.subr.mxu0 0.0
        %2653 = vmatpush1.xpose.msra.mxu0 0.0
        %2654 = vmatprep.subr.mxu0 0.0
        %2655 = vmatpush1.xpose.msra.mxu0 0.0
        %2656 = vmatprep.subr.mxu0 0.0
        %2657 = vmatpush1.xpose.msra.mxu0 0.0
        %2658 = vmatprep.subr.mxu0 0.0
        %2659 = vmatpush1.xpose.msra.mxu0 0.0
        %2660 = vmatprep.subr.mxu0 0.0
        %2661 = vmatpush1.xpose.msra.mxu0 0.0
        %2662 = vmatprep.subr.mxu0 0.0
        %2663 = vmatpush1.xpose.msra.mxu0 0.0
        %2664 = vmatprep.subr.mxu0 0.0
        %2665 = vmatpush1.xpose.msra.mxu0 0.0
        %2666 = vmatprep.subr.mxu0 0.0
        %2667 = vmatpush1.xpose.msra.mxu0 0.0
        %2668 = vmatprep.subr.mxu0 0.0
        %2669 = vmatpush1.xpose.msra.mxu0 0.0
        %2670 = vmatprep.subr.mxu0 0.0
        %2671 = vmatpush1.xpose.msra.mxu0 0.0
        %2672 = vmatprep.subr.mxu0 0.0
        %2673 = vmatpush1.xpose.msra.mxu0 0.0
        %2674 = vmatprep.subr.mxu0 0.0
        %2675 = vmatpush1.xpose.msra.mxu0 0.0
        %2676 = vmatprep.subr.mxu0 0.0
        %2677 = vmatpush1.xpose.msra.mxu0 0.0
        %2678 = vmatprep.mubr.f32.mxu0 0.0
        %2679 = vmatmul.mubr.f32.gmra.mrb[0].mxu0 %v2603
        %v2680 = vpop.f32.mrb[0].mxu0
        %v2681 = vadd.f32 0.0, %v2680
        %v2682 = vpop.f32.mrb[0].mxu0
        %2683 = vdwg.mxu0
        %2685 = vrot.lane.b32.xlu0 %v2154, 112
        %v2686 = vpop.permute.xlu0 %2685
        %v2687 = vsel %vm1463, %v2686, 0
        %v2690 = vsel %vm1463, %v2174, 0
        %v2693 = vsel %vm1463, %v2175, 0
        %v2696 = vsel %vm1463, %v2176, 0
        %2698 = vmatprep.subr.mxu0 0.0
        %2699 = vmatpush1.xpose.msra.mxu0 %v2690
        %2700 = vmatprep.subr.mxu0 0.0
        %2701 = vmatpush1.xpose.msra.mxu0 %v2693
        %2702 = vmatprep.subr.mxu0 0.0
        %2703 = vmatpush1.xpose.msra.mxu0 %v2696
        %2704 = vmatprep.subr.mxu0 0.0
        %2705 = vmatpush1.xpose.msra.mxu0 0.0
        %2706 = vmatprep.subr.mxu0 0.0
        %2707 = vmatpush1.xpose.msra.mxu0 0.0
        %2708 = vmatprep.subr.mxu0 0.0
        %2709 = vmatpush1.xpose.msra.mxu0 0.0
        %2710 = vmatprep.subr.mxu0 0.0
        %2711 = vmatpush1.xpose.msra.mxu0 0.0
        %2712 = vmatprep.subr.mxu0 0.0
        %2713 = vmatpush1.xpose.msra.mxu0 0.0
        %2714 = vmatprep.subr.mxu0 0.0
        %2715 = vmatpush1.xpose.msra.mxu0 0.0
        %2716 = vmatprep.subr.mxu0 0.0
        %2717 = vmatpush1.xpose.msra.mxu0 0.0
        %2718 = vmatprep.subr.mxu0 0.0
        %2719 = vmatpush1.xpose.msra.mxu0 0.0
        %2720 = vmatprep.subr.mxu0 0.0
        %2721 = vmatpush1.xpose.msra.mxu0 0.0
        %2722 = vmatprep.subr.mxu0 0.0
        %2723 = vmatpush1.xpose.msra.mxu0 0.0
        %2724 = vmatprep.subr.mxu0 0.0
        %2725 = vmatpush1.xpose.msra.mxu0 0.0
        %2726 = vmatprep.subr.mxu0 0.0
        %2727 = vmatpush1.xpose.msra.mxu0 0.0
        %2728 = vmatprep.subr.mxu0 0.0
        %2729 = vmatpush1.xpose.msra.mxu0 0.0
        %2730 = vmatprep.subr.mxu0 0.0
        %2731 = vmatpush1.xpose.msra.mxu0 0.0
        %2732 = vmatprep.subr.mxu0 0.0
        %2733 = vmatpush1.xpose.msra.mxu0 0.0
        %2734 = vmatprep.subr.mxu0 0.0
        %2735 = vmatpush1.xpose.msra.mxu0 0.0
        %2736 = vmatprep.subr.mxu0 0.0
        %2737 = vmatpush1.xpose.msra.mxu0 0.0
        %2738 = vmatprep.subr.mxu0 0.0
        %2739 = vmatpush1.xpose.msra.mxu0 0.0
        %2740 = vmatprep.subr.mxu0 0.0
        %2741 = vmatpush1.xpose.msra.mxu0 0.0
        %2742 = vmatprep.subr.mxu0 0.0
        %2743 = vmatpush1.xpose.msra.mxu0 0.0
        %2744 = vmatprep.subr.mxu0 0.0
        %2745 = vmatpush1.xpose.msra.mxu0 0.0
        %2746 = vmatprep.subr.mxu0 0.0
        %2747 = vmatpush1.xpose.msra.mxu0 0.0
        %2748 = vmatprep.subr.mxu0 0.0
        %2749 = vmatpush1.xpose.msra.mxu0 0.0
        %2750 = vmatprep.subr.mxu0 0.0
        %2751 = vmatpush1.xpose.msra.mxu0 0.0
        %2752 = vmatprep.subr.mxu0 0.0
        %2753 = vmatpush1.xpose.msra.mxu0 0.0
        %2754 = vmatprep.subr.mxu0 0.0
        %2755 = vmatpush1.xpose.msra.mxu0 0.0
        %2756 = vmatprep.subr.mxu0 0.0
        %2757 = vmatpush1.xpose.msra.mxu0 0.0
        %2758 = vmatprep.subr.mxu0 0.0
        %2759 = vmatpush1.xpose.msra.mxu0 0.0
        %2760 = vmatprep.subr.mxu0 0.0
        %2761 = vmatpush1.xpose.msra.mxu0 0.0
        %2762 = vmatprep.mubr.f32.mxu0 0.0
        %2763 = vmatmul.mubr.f32.gmra.mrb[0].mxu0 %v2687
        %v2764 = vpop.f32.mrb[0].mxu0
        %v2765 = vadd.f32 0.0, %v2764
        %v2766 = vpop.f32.mrb[0].mxu0
        %2767 = vdwg.mxu0
        %2769 = vrot.lane.b32.xlu0 %v2155, 112
        %v2770 = vpop.permute.xlu0 %2769
        %v2771 = vsel %vm1463, %v2770, 0
        %v2774 = vsel %vm1463, %v2177, 0
        %v2777 = vsel %vm1463, %v2178, 0
        %v2780 = vsel %vm1463, %v2179, 0
        %2782 = vmatprep.subr.mxu0 0.0
        %2783 = vmatpush1.xpose.msra.mxu0 %v2774
        %2784 = vmatprep.subr.mxu0 0.0
        %2785 = vmatpush1.xpose.msra.mxu0 %v2777
        %2786 = vmatprep.subr.mxu0 0.0
        %2787 = vmatpush1.xpose.msra.mxu0 %v2780
        %2788 = vmatprep.subr.mxu0 0.0
        %2789 = vmatpush1.xpose.msra.mxu0 0.0
        %2790 = vmatprep.subr.mxu0 0.0
        %2791 = vmatpush1.xpose.msra.mxu0 0.0
        %2792 = vmatprep.subr.mxu0 0.0
        %2793 = vmatpush1.xpose.msra.mxu0 0.0
        %2794 = vmatprep.subr.mxu0 0.0
        %2795 = vmatpush1.xpose.msra.mxu0 0.0
        %2796 = vmatprep.subr.mxu0 0.0
        %2797 = vmatpush1.xpose.msra.mxu0 0.0
        %2798 = vmatprep.subr.mxu0 0.0
        %2799 = vmatpush1.xpose.msra.mxu0 0.0
        %2800 = vmatprep.subr.mxu0 0.0
        %2801 = vmatpush1.xpose.msra.mxu0 0.0
        %2802 = vmatprep.subr.mxu0 0.0
        %2803 = vmatpush1.xpose.msra.mxu0 0.0
        %2804 = vmatprep.subr.mxu0 0.0
        %2805 = vmatpush1.xpose.msra.mxu0 0.0
        %2806 = vmatprep.subr.mxu0 0.0
        %2807 = vmatpush1.xpose.msra.mxu0 0.0
        %2808 = vmatprep.subr.mxu0 0.0
        %2809 = vmatpush1.xpose.msra.mxu0 0.0
        %2810 = vmatprep.subr.mxu0 0.0
        %2811 = vmatpush1.xpose.msra.mxu0 0.0
        %2812 = vmatprep.subr.mxu0 0.0
        %2813 = vmatpush1.xpose.msra.mxu0 0.0
        %2814 = vmatprep.subr.mxu0 0.0
        %2815 = vmatpush1.xpose.msra.mxu0 0.0
        %2816 = vmatprep.subr.mxu0 0.0
        %2817 = vmatpush1.xpose.msra.mxu0 0.0
        %2818 = vmatprep.subr.mxu0 0.0
        %2819 = vmatpush1.xpose.msra.mxu0 0.0
        %2820 = vmatprep.subr.mxu0 0.0
        %2821 = vmatpush1.xpose.msra.mxu0 0.0
        %2822 = vmatprep.subr.mxu0 0.0
        %2823 = vmatpush1.xpose.msra.mxu0 0.0
        %2824 = vmatprep.subr.mxu0 0.0
        %2825 = vmatpush1.xpose.msra.mxu0 0.0
        %2826 = vmatprep.subr.mxu0 0.0
        %2827 = vmatpush1.xpose.msra.mxu0 0.0
        %2828 = vmatprep.subr.mxu0 0.0
        %2829 = vmatpush1.xpose.msra.mxu0 0.0
        %2830 = vmatprep.subr.mxu0 0.0
        %2831 = vmatpush1.xpose.msra.mxu0 0.0
        %2832 = vmatprep.subr.mxu0 0.0
        %2833 = vmatpush1.xpose.msra.mxu0 0.0
        %2834 = vmatprep.subr.mxu0 0.0
        %2835 = vmatpush1.xpose.msra.mxu0 0.0
        %2836 = vmatprep.subr.mxu0 0.0
        %2837 = vmatpush1.xpose.msra.mxu0 0.0
        %2838 = vmatprep.subr.mxu0 0.0
        %2839 = vmatpush1.xpose.msra.mxu0 0.0
        %2840 = vmatprep.subr.mxu0 0.0
        %2841 = vmatpush1.xpose.msra.mxu0 0.0
        %2842 = vmatprep.subr.mxu0 0.0
        %2843 = vmatpush1.xpose.msra.mxu0 0.0
        %2844 = vmatprep.subr.mxu0 0.0
        %2845 = vmatpush1.xpose.msra.mxu0 0.0
        %2846 = vmatprep.mubr.f32.mxu0 0.0
        %2847 = vmatmul.mubr.f32.gmra.mrb[0].mxu0 %v2771
        %v2848 = vpop.f32.mrb[0].mxu0
        %v2849 = vadd.f32 0.0, %v2848
        %v2850 = vpop.f32.mrb[0].mxu0
        %2851 = vdwg.mxu0
        %v2852 = vmax.f32 %v2261, 1e-24
        %v2853 = vmax.f32 %v2345, 1e-24
        %v2854 = vmax.f32 %v2429, 1e-24
        %v2855 = vmax.f32 %v2513, 1e-24
        %v2856 = vmax.f32 %v2597, 1e-24
        %v2857 = vmax.f32 %v2681, 1e-24
        %v2858 = vmax.f32 %v2765, 1e-24
        %v2859 = vmax.f32 %v2849, 1e-24
        %v2860 = vrsqrt.pop %v2852
        %v2861 = vrsqrt.pop %v2853
        %v2862 = vrsqrt.pop %v2854
        %v2863 = vrsqrt.pop %v2855
        %v2864 = vrsqrt.pop %v2856
        %v2865 = vrsqrt.pop %v2857
        %v2866 = vrsqrt.pop %v2858
        %v2867 = vrsqrt.pop %v2859
        %v2868 = vld [vmem:[%s5] sm:$0xff]
        %v2869 = vld [vmem:[%s5 + $0x8] sm:$0x1]
        %v2870 = vlaneseq
        %v2871 = vshrl.u32 %v2870, 7
        %v2872 = vsub.s32 0, %v2871
        %v2873 = vrot.slane %v2868, %v2872
        %2875 = vrot.lane.b32.xlu0 %v2873, 16
        %v2876 = vpop.permute.xlu0 %2875
        %v2878 = vmul.f32 %v2140, %v2876
        %v2879 = vmul.f32 %v2141, %v2876
        %v2880 = vmul.f32 %v2142, %v2876
        %v2881 = vmul.f32 %v2143, %v2876
        %v2882 = vmul.f32 %v2144, %v2876
        %v2883 = vmul.f32 %v2145, %v2876
        %v2884 = vmul.f32 %v2146, %v2876
        %v2885 = vmul.f32 %v2147, %v2876
        %v2886 = vlaneseq
        %v2887 = vshrl.u32 %v2886, 7
        %v2888 = vsub.s32 1, %v2887
        %v2889 = vrot.slane %v2868, %v2888
        %2891 = vrot.lane.b32.xlu0 %v2889, 16
        %v2892 = vpop.permute.xlu0 %2891
        %v2894 = vmul.f32 %v2140, %v2892
        %v2895 = vmul.f32 %v2141, %v2892
        %v2896 = vmul.f32 %v2142, %v2892
        %v2897 = vmul.f32 %v2143, %v2892
        %v2898 = vmul.f32 %v2144, %v2892
        %v2899 = vmul.f32 %v2145, %v2892
        %v2900 = vmul.f32 %v2146, %v2892
        %v2901 = vmul.f32 %v2147, %v2892
        %v2902 = vlaneseq
        %v2903 = vshrl.u32 %v2902, 7
        %v2904 = vsub.s32 2, %v2903
        %v2905 = vrot.slane %v2868, %v2904
        %2907 = vrot.lane.b32.xlu0 %v2905, 16
        %v2908 = vpop.permute.xlu0 %2907
        %v2910 = vmul.f32 %v2140, %v2908
        %v2911 = vmul.f32 %v2141, %v2908
        %v2912 = vmul.f32 %v2142, %v2908
        %v2913 = vmul.f32 %v2143, %v2908
        %v2914 = vmul.f32 %v2144, %v2908
        %v2915 = vmul.f32 %v2145, %v2908
        %v2916 = vmul.f32 %v2146, %v2908
        %v2917 = vmul.f32 %v2147, %v2908
        %v2918 = vlaneseq
        %v2919 = vshrl.u32 %v2918, 7
        %v2920 = vsub.s32 3, %v2919
        %v2921 = vrot.slane %v2868, %v2920
        %2923 = vrot.lane.b32.xlu0 %v2921, 16
        %v2924 = vpop.permute.xlu0 %2923
        %v2926 = vmul.f32 %v2140, %v2924
        %v2927 = vmul.f32 %v2141, %v2924
        %v2928 = vmul.f32 %v2142, %v2924
        %v2929 = vmul.f32 %v2143, %v2924
        %v2930 = vmul.f32 %v2144, %v2924
        %v2931 = vmul.f32 %v2145, %v2924
        %v2932 = vmul.f32 %v2146, %v2924
        %v2933 = vmul.f32 %v2147, %v2924
        %v2934 = vlaneseq
        %v2935 = vshrl.u32 %v2934, 7
        %v2936 = vsub.s32 4, %v2935
        %v2937 = vrot.slane %v2868, %v2936
        %2939 = vrot.lane.b32.xlu0 %v2937, 16
        %v2940 = vpop.permute.xlu0 %2939
        %v2942 = vmul.f32 %v2140, %v2940
        %v2943 = vmul.f32 %v2141, %v2940
        %v2944 = vmul.f32 %v2142, %v2940
        %v2945 = vmul.f32 %v2143, %v2940
        %v2946 = vmul.f32 %v2144, %v2940
        %v2947 = vmul.f32 %v2145, %v2940
        %v2948 = vmul.f32 %v2146, %v2940
        %v2949 = vmul.f32 %v2147, %v2940
        %v2950 = vlaneseq
        %v2951 = vshrl.u32 %v2950, 7
        %v2952 = vsub.s32 5, %v2951
        %v2953 = vrot.slane %v2868, %v2952
        %2955 = vrot.lane.b32.xlu0 %v2953, 16
        %v2956 = vpop.permute.xlu0 %2955
        %v2958 = vmul.f32 %v2140, %v2956
        %v2959 = vmul.f32 %v2141, %v2956
        %v2960 = vmul.f32 %v2142, %v2956
        %v2961 = vmul.f32 %v2143, %v2956
        %v2962 = vmul.f32 %v2144, %v2956
        %v2963 = vmul.f32 %v2145, %v2956
        %v2964 = vmul.f32 %v2146, %v2956
        %v2965 = vmul.f32 %v2147, %v2956
        %v2966 = vlaneseq
        %v2967 = vshrl.u32 %v2966, 7
        %v2968 = vsub.s32 6, %v2967
        %v2969 = vrot.slane %v2868, %v2968
        %2971 = vrot.lane.b32.xlu0 %v2969, 16
        %v2972 = vpop.permute.xlu0 %2971
        %v2974 = vmul.f32 %v2140, %v2972
        %v2975 = vmul.f32 %v2141, %v2972
        %v2976 = vmul.f32 %v2142, %v2972
        %v2977 = vmul.f32 %v2143, %v2972
        %v2978 = vmul.f32 %v2144, %v2972
        %v2979 = vmul.f32 %v2145, %v2972
        %v2980 = vmul.f32 %v2146, %v2972
        %v2981 = vmul.f32 %v2147, %v2972
        %v2982 = vlaneseq
        %v2983 = vshrl.u32 %v2982, 7
        %v2984 = vsub.s32 7, %v2983
        %v2985 = vrot.slane %v2868, %v2984
        %2987 = vrot.lane.b32.xlu0 %v2985, 16
        %v2988 = vpop.permute.xlu0 %2987
        %v2990 = vmul.f32 %v2140, %v2988
        %v2991 = vmul.f32 %v2141, %v2988
        %v2992 = vmul.f32 %v2142, %v2988
        %v2993 = vmul.f32 %v2143, %v2988
        %v2994 = vmul.f32 %v2144, %v2988
        %v2995 = vmul.f32 %v2145, %v2988
        %v2996 = vmul.f32 %v2146, %v2988
        %v2997 = vmul.f32 %v2147, %v2988
        %v2998 = vlaneseq
        %v2999 = vshrl.u32 %v2998, 7
        %v3000 = vsub.s32 0, %v2999
        %v3001 = vrot.slane %v2869, %v3000
        %3003 = vrot.lane.b32.xlu0 %v3001, 16
        %v3004 = vpop.permute.xlu0 %3003
        %v3006 = vmul.f32 %v2140, %v3004
        %v3007 = vmul.f32 %v2141, %v3004
        %v3008 = vmul.f32 %v2142, %v3004
        %v3009 = vmul.f32 %v2143, %v3004
        %v3010 = vmul.f32 %v2144, %v3004
        %v3011 = vmul.f32 %v2145, %v3004
        %v3012 = vmul.f32 %v2146, %v3004
        %v3013 = vmul.f32 %v2147, %v3004
        %3023 = vrot.lane.b32.xlu0 %v2878, 112
        %v3024 = vpop.permute.xlu0 %3023
        %3025 = vrot.lane.b32.xlu0 %v2894, 112
        %v3026 = vpop.permute.xlu0 %3025
        %3027 = vrot.lane.b32.xlu0 %v2910, 112
        %v3028 = vpop.permute.xlu0 %3027
        %3029 = vrot.lane.b32.xlu0 %v2926, 112
        %v3030 = vpop.permute.xlu0 %3029
        %3031 = vrot.lane.b32.xlu0 %v2942, 112
        %v3032 = vpop.permute.xlu0 %3031
        %3033 = vrot.lane.b32.xlu0 %v2958, 112
        %v3034 = vpop.permute.xlu0 %3033
        %3035 = vrot.lane.b32.xlu0 %v2974, 112
        %v3036 = vpop.permute.xlu0 %3035
        %3037 = vrot.lane.b32.xlu0 %v2990, 112
        %v3038 = vpop.permute.xlu0 %3037
        %3039 = vrot.lane.b32.xlu0 %v3006, 112
        %v3040 = vpop.permute.xlu0 %3039
        %v3041 = vsel %vm1463, %v3024, 0
        %v3043 = vsel %vm1463, %v3026, 0
        %v3045 = vsel %vm1463, %v3028, 0
        %v3047 = vsel %vm1463, %v3030, 0
        %v3049 = vsel %vm1463, %v3032, 0
        %v3051 = vsel %vm1463, %v3034, 0
        %v3053 = vsel %vm1463, %v3036, 0
        %v3055 = vsel %vm1463, %v3038, 0
        %v3057 = vsel %vm1463, %v3040, 0
        %v3060 = vsel %vm1463, %v1681, 0
        %v3063 = vsel %vm1463, %v1684, 0
        %v3066 = vsel %vm1463, %v1689, 0
        %3068 = vmatprep.subr.mxu0 0.0
        %3069 = vmatpush1.xpose.msra.mxu0 %v3060
        %3070 = vmatprep.subr.mxu0 0.0
        %3071 = vmatpush1.xpose.msra.mxu0 %v3063
        %3072 = vmatprep.subr.mxu0 0.0
        %3073 = vmatpush1.xpose.msra.mxu0 %v3066
        %3074 = vmatprep.subr.mxu0 0.0
        %3075 = vmatpush1.xpose.msra.mxu0 0.0
        %3076 = vmatprep.subr.mxu0 0.0
        %3077 = vmatpush1.xpose.msra.mxu0 0.0
        %3078 = vmatprep.subr.mxu0 0.0
        %3079 = vmatpush1.xpose.msra.mxu0 0.0
        %3080 = vmatprep.subr.mxu0 0.0
        %3081 = vmatpush1.xpose.msra.mxu0 0.0
        %3082 = vmatprep.subr.mxu0 0.0
        %3083 = vmatpush1.xpose.msra.mxu0 0.0
        %3084 = vmatprep.subr.mxu0 0.0
        %3085 = vmatpush1.xpose.msra.mxu0 0.0
        %3086 = vmatprep.subr.mxu0 0.0
        %3087 = vmatpush1.xpose.msra.mxu0 0.0
        %3088 = vmatprep.subr.mxu0 0.0
        %3089 = vmatpush1.xpose.msra.mxu0 0.0
        %3090 = vmatprep.subr.mxu0 0.0
        %3091 = vmatpush1.xpose.msra.mxu0 0.0
        %3092 = vmatprep.subr.mxu0 0.0
        %3093 = vmatpush1.xpose.msra.mxu0 0.0
        %3094 = vmatprep.subr.mxu0 0.0
        %3095 = vmatpush1.xpose.msra.mxu0 0.0
        %3096 = vmatprep.subr.mxu0 0.0
        %3097 = vmatpush1.xpose.msra.mxu0 0.0
        %3098 = vmatprep.subr.mxu0 0.0
        %3099 = vmatpush1.xpose.msra.mxu0 0.0
        %3100 = vmatprep.subr.mxu0 0.0
        %3101 = vmatpush1.xpose.msra.mxu0 0.0
        %3102 = vmatprep.subr.mxu0 0.0
        %3103 = vmatpush1.xpose.msra.mxu0 0.0
        %3104 = vmatprep.subr.mxu0 0.0
        %3105 = vmatpush1.xpose.msra.mxu0 0.0
        %3106 = vmatprep.subr.mxu0 0.0
        %3107 = vmatpush1.xpose.msra.mxu0 0.0
        %3108 = vmatprep.subr.mxu0 0.0
        %3109 = vmatpush1.xpose.msra.mxu0 0.0
        %3110 = vmatprep.subr.mxu0 0.0
        %3111 = vmatpush1.xpose.msra.mxu0 0.0
        %3112 = vmatprep.subr.mxu0 0.0
        %3113 = vmatpush1.xpose.msra.mxu0 0.0
        %3114 = vmatprep.subr.mxu0 0.0
        %3115 = vmatpush1.xpose.msra.mxu0 0.0
        %3116 = vmatprep.subr.mxu0 0.0
        %3117 = vmatpush1.xpose.msra.mxu0 0.0
        %3118 = vmatprep.subr.mxu0 0.0
        %3119 = vmatpush1.xpose.msra.mxu0 0.0
        %3120 = vmatprep.subr.mxu0 0.0
        %3121 = vmatpush1.xpose.msra.mxu0 0.0
        %3122 = vmatprep.subr.mxu0 0.0
        %3123 = vmatpush1.xpose.msra.mxu0 0.0
        %3124 = vmatprep.subr.mxu0 0.0
        %3125 = vmatpush1.xpose.msra.mxu0 0.0
        %3126 = vmatprep.subr.mxu0 0.0
        %3127 = vmatpush1.xpose.msra.mxu0 0.0
        %3128 = vmatprep.subr.mxu0 0.0
        %3129 = vmatpush1.xpose.msra.mxu0 0.0
        %3130 = vmatprep.subr.mxu0 0.0
        %3131 = vmatpush1.xpose.msra.mxu0 0.0
        %3132 = vmatprep.mubr.f32.mxu0 0.0
        %3133 = vmatmul.mubr.f32.gmra.mrb[0].mxu0 %v3041
        %v3134 = vpop.f32.mrb[0].mxu0
        %v3135 = vadd.f32 0.0, %v3134
        %v3136 = vpop.f32.mrb[0].mxu0
        %3137 = vmatprep.mubr.f32.mxu0 0.0
        %3138 = vmatmul.mubr.f32.gmra.mrb[0].mxu0 %v3043
        %v3139 = vpop.f32.mrb[0].mxu0
        %v3140 = vadd.f32 0.0, %v3139
        %v3141 = vpop.f32.mrb[0].mxu0
        %3142 = vmatprep.mubr.f32.mxu0 0.0
        %3143 = vmatmul.mubr.f32.gmra.mrb[0].mxu0 %v3045
        %v3144 = vpop.f32.mrb[0].mxu0
        %v3145 = vadd.f32 0.0, %v3144
        %v3146 = vpop.f32.mrb[0].mxu0
        %3147 = vmatprep.mubr.f32.mxu0 0.0
        %3148 = vmatmul.mubr.f32.gmra.mrb[0].mxu0 %v3047
        %v3149 = vpop.f32.mrb[0].mxu0
        %v3150 = vadd.f32 0.0, %v3149
        %v3151 = vpop.f32.mrb[0].mxu0
        %3152 = vmatprep.mubr.f32.mxu0 0.0
        %3153 = vmatmul.mubr.f32.gmra.mrb[0].mxu0 %v3049
        %v3154 = vpop.f32.mrb[0].mxu0
        %v3155 = vadd.f32 0.0, %v3154
        %v3156 = vpop.f32.mrb[0].mxu0
        %3157 = vmatprep.mubr.f32.mxu0 0.0
        %3158 = vmatmul.mubr.f32.gmra.mrb[0].mxu0 %v3051
        %v3159 = vpop.f32.mrb[0].mxu0
        %v3160 = vadd.f32 0.0, %v3159
        %v3161 = vpop.f32.mrb[0].mxu0
        %3162 = vmatprep.mubr.f32.mxu0 0.0
        %3163 = vmatmul.mubr.f32.gmra.mrb[0].mxu0 %v3053
        %v3164 = vpop.f32.mrb[0].mxu0
        %v3165 = vadd.f32 0.0, %v3164
        %v3166 = vpop.f32.mrb[0].mxu0
        %3167 = vmatprep.mubr.f32.mxu0 0.0
        %3168 = vmatmul.mubr.f32.gmra.mrb[0].mxu0 %v3055
        %v3169 = vpop.f32.mrb[0].mxu0
        %v3170 = vadd.f32 0.0, %v3169
        %v3171 = vpop.f32.mrb[0].mxu0
        %3172 = vmatprep.mubr.f32.mxu0 0.0
        %3173 = vmatmul.mubr.f32.gmra.mrb[0].mxu0 %v3057
        %v3174 = vpop.f32.mrb[0].mxu0
        %v3175 = vadd.f32 0.0, %v3174
        %v3176 = vpop.f32.mrb[0].mxu0
        %3177 = vdwg.mxu0
        %3187 = vrot.lane.b32.xlu0 %v2879, 112
        %v3188 = vpop.permute.xlu0 %3187
        %3189 = vrot.lane.b32.xlu0 %v2895, 112
        %v3190 = vpop.permute.xlu0 %3189
        %3191 = vrot.lane.b32.xlu0 %v2911, 112
        %v3192 = vpop.permute.xlu0 %3191
        %3193 = vrot.lane.b32.xlu0 %v2927, 112
        %v3194 = vpop.permute.xlu0 %3193
        %3195 = vrot.lane.b32.xlu0 %v2943, 112
        %v3196 = vpop.permute.xlu0 %3195
        %3197 = vrot.lane.b32.xlu0 %v2959, 112
        %v3198 = vpop.permute.xlu0 %3197
        %3199 = vrot.lane.b32.xlu0 %v2975, 112
        %v3200 = vpop.permute.xlu0 %3199
        %3201 = vrot.lane.b32.xlu0 %v2991, 112
        %v3202 = vpop.permute.xlu0 %3201
        %3203 = vrot.lane.b32.xlu0 %v3007, 112
        %v3204 = vpop.permute.xlu0 %3203
        %v3205 = vsel %vm1463, %v3188, 0
        %v3207 = vsel %vm1463, %v3190, 0
        %v3209 = vsel %vm1463, %v3192, 0
        %v3211 = vsel %vm1463, %v3194, 0
        %v3213 = vsel %vm1463, %v3196, 0
        %v3215 = vsel %vm1463, %v3198, 0
        %v3217 = vsel %vm1463, %v3200, 0
        %v3219 = vsel %vm1463, %v3202, 0
        %v3221 = vsel %vm1463, %v3204, 0
        %v3224 = vsel %vm1463, %v1692, 0
        %v3227 = vsel %vm1463, %v1697, 0
        %v3230 = vsel %vm1463, %v1700, 0
        %3232 = vmatprep.subr.mxu0 0.0
        %3233 = vmatpush1.xpose.msra.mxu0 %v3224
        %3234 = vmatprep.subr.mxu0 0.0
        %3235 = vmatpush1.xpose.msra.mxu0 %v3227
        %3236 = vmatprep.subr.mxu0 0.0
        %3237 = vmatpush1.xpose.msra.mxu0 %v3230
        %3238 = vmatprep.subr.mxu0 0.0
        %3239 = vmatpush1.xpose.msra.mxu0 0.0
        %3240 = vmatprep.subr.mxu0 0.0
        %3241 = vmatpush1.xpose.msra.mxu0 0.0
        %3242 = vmatprep.subr.mxu0 0.0
        %3243 = vmatpush1.xpose.msra.mxu0 0.0
        %3244 = vmatprep.subr.mxu0 0.0
        %3245 = vmatpush1.xpose.msra.mxu0 0.0
        %3246 = vmatprep.subr.mxu0 0.0
        %3247 = vmatpush1.xpose.msra.mxu0 0.0
        %3248 = vmatprep.subr.mxu0 0.0
        %3249 = vmatpush1.xpose.msra.mxu0 0.0
        %3250 = vmatprep.subr.mxu0 0.0
        %3251 = vmatpush1.xpose.msra.mxu0 0.0
        %3252 = vmatprep.subr.mxu0 0.0
        %3253 = vmatpush1.xpose.msra.mxu0 0.0
        %3254 = vmatprep.subr.mxu0 0.0
        %3255 = vmatpush1.xpose.msra.mxu0 0.0
        %3256 = vmatprep.subr.mxu0 0.0
        %3257 = vmatpush1.xpose.msra.mxu0 0.0
        %3258 = vmatprep.subr.mxu0 0.0
        %3259 = vmatpush1.xpose.msra.mxu0 0.0
        %3260 = vmatprep.subr.mxu0 0.0
        %3261 = vmatpush1.xpose.msra.mxu0 0.0
        %3262 = vmatprep.subr.mxu0 0.0
        %3263 = vmatpush1.xpose.msra.mxu0 0.0
        %3264 = vmatprep.subr.mxu0 0.0
        %3265 = vmatpush1.xpose.msra.mxu0 0.0
        %3266 = vmatprep.subr.mxu0 0.0
        %3267 = vmatpush1.xpose.msra.mxu0 0.0
        %3268 = vmatprep.subr.mxu0 0.0
        %3269 = vmatpush1.xpose.msra.mxu0 0.0
        %3270 = vmatprep.subr.mxu0 0.0
        %3271 = vmatpush1.xpose.msra.mxu0 0.0
        %3272 = vmatprep.subr.mxu0 0.0
        %3273 = vmatpush1.xpose.msra.mxu0 0.0
        %3274 = vmatprep.subr.mxu0 0.0
        %3275 = vmatpush1.xpose.msra.mxu0 0.0
        %3276 = vmatprep.subr.mxu0 0.0
        %3277 = vmatpush1.xpose.msra.mxu0 0.0
        %3278 = vmatprep.subr.mxu0 0.0
        %3279 = vmatpush1.xpose.msra.mxu0 0.0
        %3280 = vmatprep.subr.mxu0 0.0
        %3281 = vmatpush1.xpose.msra.mxu0 0.0
        %3282 = vmatprep.subr.mxu0 0.0
        %3283 = vmatpush1.xpose.msra.mxu0 0.0
        %3284 = vmatprep.subr.mxu0 0.0
        %3285 = vmatpush1.xpose.msra.mxu0 0.0
        %3286 = vmatprep.subr.mxu0 0.0
        %3287 = vmatpush1.xpose.msra.mxu0 0.0
        %3288 = vmatprep.subr.mxu0 0.0
        %3289 = vmatpush1.xpose.msra.mxu0 0.0
        %3290 = vmatprep.subr.mxu0 0.0
        %3291 = vmatpush1.xpose.msra.mxu0 0.0
        %3292 = vmatprep.subr.mxu0 0.0
        %3293 = vmatpush1.xpose.msra.mxu0 0.0
        %3294 = vmatprep.subr.mxu0 0.0
        %3295 = vmatpush1.xpose.msra.mxu0 0.0
        %3296 = vmatprep.mubr.f32.mxu0 0.0
        %3297 = vmatmul.mubr.f32.gmra.mrb[0].mxu0 %v3205
        %v3298 = vpop.f32.mrb[0].mxu0
        %v3299 = vadd.f32 0.0, %v3298
        %v3300 = vpop.f32.mrb[0].mxu0
        %3301 = vmatprep.mubr.f32.mxu0 0.0
        %3302 = vmatmul.mubr.f32.gmra.mrb[0].mxu0 %v3207
        %v3303 = vpop.f32.mrb[0].mxu0
        %v3304 = vadd.f32 0.0, %v3303
        %v3305 = vpop.f32.mrb[0].mxu0
        %3306 = vmatprep.mubr.f32.mxu0 0.0
        %3307 = vmatmul.mubr.f32.gmra.mrb[0].mxu0 %v3209
        %v3308 = vpop.f32.mrb[0].mxu0
        %v3309 = vadd.f32 0.0, %v3308
        %v3310 = vpop.f32.mrb[0].mxu0
        %3311 = vmatprep.mubr.f32.mxu0 0.0
        %3312 = vmatmul.mubr.f32.gmra.mrb[0].mxu0 %v3211
        %v3313 = vpop.f32.mrb[0].mxu0
        %v3314 = vadd.f32 0.0, %v3313
        %v3315 = vpop.f32.mrb[0].mxu0
        %3316 = vmatprep.mubr.f32.mxu0 0.0
        %3317 = vmatmul.mubr.f32.gmra.mrb[0].mxu0 %v3213
        %v3318 = vpop.f32.mrb[0].mxu0
        %v3319 = vadd.f32 0.0, %v3318
        %v3320 = vpop.f32.mrb[0].mxu0
        %3321 = vmatprep.mubr.f32.mxu0 0.0
        %3322 = vmatmul.mubr.f32.gmra.mrb[0].mxu0 %v3215
        %v3323 = vpop.f32.mrb[0].mxu0
        %v3324 = vadd.f32 0.0, %v3323
        %v3325 = vpop.f32.mrb[0].mxu0
        %3326 = vmatprep.mubr.f32.mxu0 0.0
        %3327 = vmatmul.mubr.f32.gmra.mrb[0].mxu0 %v3217
        %v3328 = vpop.f32.mrb[0].mxu0
        %v3329 = vadd.f32 0.0, %v3328
        %v3330 = vpop.f32.mrb[0].mxu0
        %3331 = vmatprep.mubr.f32.mxu0 0.0
        %3332 = vmatmul.mubr.f32.gmra.mrb[0].mxu0 %v3219
        %v3333 = vpop.f32.mrb[0].mxu0
        %v3334 = vadd.f32 0.0, %v3333
        %v3335 = vpop.f32.mrb[0].mxu0
        %3336 = vmatprep.mubr.f32.mxu0 0.0
        %3337 = vmatmul.mubr.f32.gmra.mrb[0].mxu0 %v3221
        %v3338 = vpop.f32.mrb[0].mxu0
        %v3339 = vadd.f32 0.0, %v3338
        %v3340 = vpop.f32.mrb[0].mxu0
        %3341 = vdwg.mxu0
        %3351 = vrot.lane.b32.xlu0 %v2880, 112
        %v3352 = vpop.permute.xlu0 %3351
        %3353 = vrot.lane.b32.xlu0 %v2896, 112
        %v3354 = vpop.permute.xlu0 %3353
        %3355 = vrot.lane.b32.xlu0 %v2912, 112
        %v3356 = vpop.permute.xlu0 %3355
        %3357 = vrot.lane.b32.xlu0 %v2928, 112
        %v3358 = vpop.permute.xlu0 %3357
        %3359 = vrot.lane.b32.xlu0 %v2944, 112
        %v3360 = vpop.permute.xlu0 %3359
        %3361 = vrot.lane.b32.xlu0 %v2960, 112
        %v3362 = vpop.permute.xlu0 %3361
        %3363 = vrot.lane.b32.xlu0 %v2976, 112
        %v3364 = vpop.permute.xlu0 %3363
        %3365 = vrot.lane.b32.xlu0 %v2992, 112
        %v3366 = vpop.permute.xlu0 %3365
        %3367 = vrot.lane.b32.xlu0 %v3008, 112
        %v3368 = vpop.permute.xlu0 %3367
        %v3369 = vsel %vm1463, %v3352, 0
        %v3371 = vsel %vm1463, %v3354, 0
        %v3373 = vsel %vm1463, %v3356, 0
        %v3375 = vsel %vm1463, %v3358, 0
        %v3377 = vsel %vm1463, %v3360, 0
        %v3379 = vsel %vm1463, %v3362, 0
        %v3381 = vsel %vm1463, %v3364, 0
        %v3383 = vsel %vm1463, %v3366, 0
        %v3385 = vsel %vm1463, %v3368, 0
        %v3388 = vsel %vm1463, %v1705, 0
        %v3391 = vsel %vm1463, %v1708, 0
        %v3394 = vsel %vm1463, %v1713, 0
        %3396 = vmatprep.subr.mxu0 0.0
        %3397 = vmatpush1.xpose.msra.mxu0 %v3388
        %3398 = vmatprep.subr.mxu0 0.0
        %3399 = vmatpush1.xpose.msra.mxu0 %v3391
        %3400 = vmatprep.subr.mxu0 0.0
        %3401 = vmatpush1.xpose.msra.mxu0 %v3394
        %3402 = vmatprep.subr.mxu0 0.0
        %3403 = vmatpush1.xpose.msra.mxu0 0.0
        %3404 = vmatprep.subr.mxu0 0.0
        %3405 = vmatpush1.xpose.msra.mxu0 0.0
        %3406 = vmatprep.subr.mxu0 0.0
        %3407 = vmatpush1.xpose.msra.mxu0 0.0
        %3408 = vmatprep.subr.mxu0 0.0
        %3409 = vmatpush1.xpose.msra.mxu0 0.0
        %3410 = vmatprep.subr.mxu0 0.0
        %3411 = vmatpush1.xpose.msra.mxu0 0.0
        %3412 = vmatprep.subr.mxu0 0.0
        %3413 = vmatpush1.xpose.msra.mxu0 0.0
        %3414 = vmatprep.subr.mxu0 0.0
        %3415 = vmatpush1.xpose.msra.mxu0 0.0
        %3416 = vmatprep.subr.mxu0 0.0
        %3417 = vmatpush1.xpose.msra.mxu0 0.0
        %3418 = vmatprep.subr.mxu0 0.0
        %3419 = vmatpush1.xpose.msra.mxu0 0.0
        %3420 = vmatprep.subr.mxu0 0.0
        %3421 = vmatpush1.xpose.msra.mxu0 0.0
        %3422 = vmatprep.subr.mxu0 0.0
        %3423 = vmatpush1.xpose.msra.mxu0 0.0
        %3424 = vmatprep.subr.mxu0 0.0
        %3425 = vmatpush1.xpose.msra.mxu0 0.0
        %3426 = vmatprep.subr.mxu0 0.0
        %3427 = vmatpush1.xpose.msra.mxu0 0.0
        %3428 = vmatprep.subr.mxu0 0.0
        %3429 = vmatpush1.xpose.msra.mxu0 0.0
        %3430 = vmatprep.subr.mxu0 0.0
        %3431 = vmatpush1.xpose.msra.mxu0 0.0
        %3432 = vmatprep.subr.mxu0 0.0
        %3433 = vmatpush1.xpose.msra.mxu0 0.0
        %3434 = vmatprep.subr.mxu0 0.0
        %3435 = vmatpush1.xpose.msra.mxu0 0.0
        %3436 = vmatprep.subr.mxu0 0.0
        %3437 = vmatpush1.xpose.msra.mxu0 0.0
        %3438 = vmatprep.subr.mxu0 0.0
        %3439 = vmatpush1.xpose.msra.mxu0 0.0
        %3440 = vmatprep.subr.mxu0 0.0
        %3441 = vmatpush1.xpose.msra.mxu0 0.0
        %3442 = vmatprep.subr.mxu0 0.0
        %3443 = vmatpush1.xpose.msra.mxu0 0.0
        %3444 = vmatprep.subr.mxu0 0.0
        %3445 = vmatpush1.xpose.msra.mxu0 0.0
        %3446 = vmatprep.subr.mxu0 0.0
        %3447 = vmatpush1.xpose.msra.mxu0 0.0
        %3448 = vmatprep.subr.mxu0 0.0
        %3449 = vmatpush1.xpose.msra.mxu0 0.0
        %3450 = vmatprep.subr.mxu0 0.0
        %3451 = vmatpush1.xpose.msra.mxu0 0.0
        %3452 = vmatprep.subr.mxu0 0.0
        %3453 = vmatpush1.xpose.msra.mxu0 0.0
        %3454 = vmatprep.subr.mxu0 0.0
        %3455 = vmatpush1.xpose.msra.mxu0 0.0
        %3456 = vmatprep.subr.mxu0 0.0
        %3457 = vmatpush1.xpose.msra.mxu0 0.0
        %3458 = vmatprep.subr.mxu0 0.0
        %3459 = vmatpush1.xpose.msra.mxu0 0.0
        %3460 = vmatprep.mubr.f32.mxu0 0.0
        %3461 = vmatmul.mubr.f32.gmra.mrb[0].mxu0 %v3369
        %v3462 = vpop.f32.mrb[0].mxu0
        %v3463 = vadd.f32 0.0, %v3462
        %v3464 = vpop.f32.mrb[0].mxu0
        %3465 = vmatprep.mubr.f32.mxu0 0.0
        %3466 = vmatmul.mubr.f32.gmra.mrb[0].mxu0 %v3371
        %v3467 = vpop.f32.mrb[0].mxu0
        %v3468 = vadd.f32 0.0, %v3467
        %v3469 = vpop.f32.mrb[0].mxu0
        %3470 = vmatprep.mubr.f32.mxu0 0.0
        %3471 = vmatmul.mubr.f32.gmra.mrb[0].mxu0 %v3373
        %v3472 = vpop.f32.mrb[0].mxu0
        %v3473 = vadd.f32 0.0, %v3472
        %v3474 = vpop.f32.mrb[0].mxu0
        %3475 = vmatprep.mubr.f32.mxu0 0.0
        %3476 = vmatmul.mubr.f32.gmra.mrb[0].mxu0 %v3375
        %v3477 = vpop.f32.mrb[0].mxu0
        %v3478 = vadd.f32 0.0, %v3477
        %v3479 = vpop.f32.mrb[0].mxu0
        %3480 = vmatprep.mubr.f32.mxu0 0.0
        %3481 = vmatmul.mubr.f32.gmra.mrb[0].mxu0 %v3377
        %v3482 = vpop.f32.mrb[0].mxu0
        %v3483 = vadd.f32 0.0, %v3482
        %v3484 = vpop.f32.mrb[0].mxu0
        %3485 = vmatprep.mubr.f32.mxu0 0.0
        %3486 = vmatmul.mubr.f32.gmra.mrb[0].mxu0 %v3379
        %v3487 = vpop.f32.mrb[0].mxu0
        %v3488 = vadd.f32 0.0, %v3487
        %v3489 = vpop.f32.mrb[0].mxu0
        %3490 = vmatprep.mubr.f32.mxu0 0.0
        %3491 = vmatmul.mubr.f32.gmra.mrb[0].mxu0 %v3381
        %v3492 = vpop.f32.mrb[0].mxu0
        %v3493 = vadd.f32 0.0, %v3492
        %v3494 = vpop.f32.mrb[0].mxu0
        %3495 = vmatprep.mubr.f32.mxu0 0.0
        %3496 = vmatmul.mubr.f32.gmra.mrb[0].mxu0 %v3383
        %v3497 = vpop.f32.mrb[0].mxu0
        %v3498 = vadd.f32 0.0, %v3497
        %v3499 = vpop.f32.mrb[0].mxu0
        %3500 = vmatprep.mubr.f32.mxu0 0.0
        %3501 = vmatmul.mubr.f32.gmra.mrb[0].mxu0 %v3385
        %v3502 = vpop.f32.mrb[0].mxu0
        %v3503 = vadd.f32 0.0, %v3502
        %v3504 = vpop.f32.mrb[0].mxu0
        %3505 = vdwg.mxu0
        %3515 = vrot.lane.b32.xlu0 %v2881, 112
        %v3516 = vpop.permute.xlu0 %3515
        %3517 = vrot.lane.b32.xlu0 %v2897, 112
        %v3518 = vpop.permute.xlu0 %3517
        %3519 = vrot.lane.b32.xlu0 %v2913, 112
        %v3520 = vpop.permute.xlu0 %3519
        %3521 = vrot.lane.b32.xlu0 %v2929, 112
        %v3522 = vpop.permute.xlu0 %3521
        %3523 = vrot.lane.b32.xlu0 %v2945, 112
        %v3524 = vpop.permute.xlu0 %3523
        %3525 = vrot.lane.b32.xlu0 %v2961, 112
        %v3526 = vpop.permute.xlu0 %3525
        %3527 = vrot.lane.b32.xlu0 %v2977, 112
        %v3528 = vpop.permute.xlu0 %3527
        %3529 = vrot.lane.b32.xlu0 %v2993, 112
        %v3530 = vpop.permute.xlu0 %3529
        %3531 = vrot.lane.b32.xlu0 %v3009, 112
        %v3532 = vpop.permute.xlu0 %3531
        %v3533 = vsel %vm1463, %v3516, 0
        %v3535 = vsel %vm1463, %v3518, 0
        %v3537 = vsel %vm1463, %v3520, 0
        %v3539 = vsel %vm1463, %v3522, 0
        %v3541 = vsel %vm1463, %v3524, 0
        %v3543 = vsel %vm1463, %v3526, 0
        %v3545 = vsel %vm1463, %v3528, 0
        %v3547 = vsel %vm1463, %v3530, 0
        %v3549 = vsel %vm1463, %v3532, 0
        %v3552 = vsel %vm1463, %v1716, 0
        %v3555 = vsel %vm1463, %v1721, 0
        %v3558 = vsel %vm1463, %v1724, 0
        %3560 = vmatprep.subr.mxu0 0.0
        %3561 = vmatpush1.xpose.msra.mxu0 %v3552
        %3562 = vmatprep.subr.mxu0 0.0
        %3563 = vmatpush1.xpose.msra.mxu0 %v3555
        %3564 = vmatprep.subr.mxu0 0.0
        %3565 = vmatpush1.xpose.msra.mxu0 %v3558
        %3566 = vmatprep.subr.mxu0 0.0
        %3567 = vmatpush1.xpose.msra.mxu0 0.0
        %3568 = vmatprep.subr.mxu0 0.0
        %3569 = vmatpush1.xpose.msra.mxu0 0.0
        %3570 = vmatprep.subr.mxu0 0.0
        %3571 = vmatpush1.xpose.msra.mxu0 0.0
        %3572 = vmatprep.subr.mxu0 0.0
        %3573 = vmatpush1.xpose.msra.mxu0 0.0
        %3574 = vmatprep.subr.mxu0 0.0
        %3575 = vmatpush1.xpose.msra.mxu0 0.0
        %3576 = vmatprep.subr.mxu0 0.0
        %3577 = vmatpush1.xpose.msra.mxu0 0.0
        %3578 = vmatprep.subr.mxu0 0.0
        %3579 = vmatpush1.xpose.msra.mxu0 0.0
        %3580 = vmatprep.subr.mxu0 0.0
        %3581 = vmatpush1.xpose.msra.mxu0 0.0
        %3582 = vmatprep.subr.mxu0 0.0
        %3583 = vmatpush1.xpose.msra.mxu0 0.0
        %3584 = vmatprep.subr.mxu0 0.0
        %3585 = vmatpush1.xpose.msra.mxu0 0.0
        %3586 = vmatprep.subr.mxu0 0.0
        %3587 = vmatpush1.xpose.msra.mxu0 0.0
        %3588 = vmatprep.subr.mxu0 0.0
        %3589 = vmatpush1.xpose.msra.mxu0 0.0
        %3590 = vmatprep.subr.mxu0 0.0
        %3591 = vmatpush1.xpose.msra.mxu0 0.0
        %3592 = vmatprep.subr.mxu0 0.0
        %3593 = vmatpush1.xpose.msra.mxu0 0.0
        %3594 = vmatprep.subr.mxu0 0.0
        %3595 = vmatpush1.xpose.msra.mxu0 0.0
        %3596 = vmatprep.subr.mxu0 0.0
        %3597 = vmatpush1.xpose.msra.mxu0 0.0
        %3598 = vmatprep.subr.mxu0 0.0
        %3599 = vmatpush1.xpose.msra.mxu0 0.0
        %3600 = vmatprep.subr.mxu0 0.0
        %3601 = vmatpush1.xpose.msra.mxu0 0.0
        %3602 = vmatprep.subr.mxu0 0.0
        %3603 = vmatpush1.xpose.msra.mxu0 0.0
        %3604 = vmatprep.subr.mxu0 0.0
        %3605 = vmatpush1.xpose.msra.mxu0 0.0
        %3606 = vmatprep.subr.mxu0 0.0
        %3607 = vmatpush1.xpose.msra.mxu0 0.0
        %3608 = vmatprep.subr.mxu0 0.0
        %3609 = vmatpush1.xpose.msra.mxu0 0.0
        %3610 = vmatprep.subr.mxu0 0.0
        %3611 = vmatpush1.xpose.msra.mxu0 0.0
        %3612 = vmatprep.subr.mxu0 0.0
        %3613 = vmatpush1.xpose.msra.mxu0 0.0
        %3614 = vmatprep.subr.mxu0 0.0
        %3615 = vmatpush1.xpose.msra.mxu0 0.0
        %3616 = vmatprep.subr.mxu0 0.0
        %3617 = vmatpush1.xpose.msra.mxu0 0.0
        %3618 = vmatprep.subr.mxu0 0.0
        %3619 = vmatpush1.xpose.msra.mxu0 0.0
        %3620 = vmatprep.subr.mxu0 0.0
        %3621 = vmatpush1.xpose.msra.mxu0 0.0
        %3622 = vmatprep.subr.mxu0 0.0
        %3623 = vmatpush1.xpose.msra.mxu0 0.0
        %3624 = vmatprep.mubr.f32.mxu0 0.0
        %3625 = vmatmul.mubr.f32.gmra.mrb[0].mxu0 %v3533
        %v3626 = vpop.f32.mrb[0].mxu0
        %v3627 = vadd.f32 0.0, %v3626
        %v3628 = vpop.f32.mrb[0].mxu0
        %3629 = vmatprep.mubr.f32.mxu0 0.0
        %3630 = vmatmul.mubr.f32.gmra.mrb[0].mxu0 %v3535
        %v3631 = vpop.f32.mrb[0].mxu0
        %v3632 = vadd.f32 0.0, %v3631
        %v3633 = vpop.f32.mrb[0].mxu0
        %3634 = vmatprep.mubr.f32.mxu0 0.0
        %3635 = vmatmul.mubr.f32.gmra.mrb[0].mxu0 %v3537
        %v3636 = vpop.f32.mrb[0].mxu0
        %v3637 = vadd.f32 0.0, %v3636
        %v3638 = vpop.f32.mrb[0].mxu0
        %3639 = vmatprep.mubr.f32.mxu0 0.0
        %3640 = vmatmul.mubr.f32.gmra.mrb[0].mxu0 %v3539
        %v3641 = vpop.f32.mrb[0].mxu0
        %v3642 = vadd.f32 0.0, %v3641
        %v3643 = vpop.f32.mrb[0].mxu0
        %3644 = vmatprep.mubr.f32.mxu0 0.0
        %3645 = vmatmul.mubr.f32.gmra.mrb[0].mxu0 %v3541
        %v3646 = vpop.f32.mrb[0].mxu0
        %v3647 = vadd.f32 0.0, %v3646
        %v3648 = vpop.f32.mrb[0].mxu0
        %3649 = vmatprep.mubr.f32.mxu0 0.0
        %3650 = vmatmul.mubr.f32.gmra.mrb[0].mxu0 %v3543
        %v3651 = vpop.f32.mrb[0].mxu0
        %v3652 = vadd.f32 0.0, %v3651
        %v3653 = vpop.f32.mrb[0].mxu0
        %3654 = vmatprep.mubr.f32.mxu0 0.0
        %3655 = vmatmul.mubr.f32.gmra.mrb[0].mxu0 %v3545
        %v3656 = vpop.f32.mrb[0].mxu0
        %v3657 = vadd.f32 0.0, %v3656
        %v3658 = vpop.f32.mrb[0].mxu0
        %3659 = vmatprep.mubr.f32.mxu0 0.0
        %3660 = vmatmul.mubr.f32.gmra.mrb[0].mxu0 %v3547
        %v3661 = vpop.f32.mrb[0].mxu0
        %v3662 = vadd.f32 0.0, %v3661
        %v3663 = vpop.f32.mrb[0].mxu0
        %3664 = vmatprep.mubr.f32.mxu0 0.0
        %3665 = vmatmul.mubr.f32.gmra.mrb[0].mxu0 %v3549
        %v3666 = vpop.f32.mrb[0].mxu0
        %v3667 = vadd.f32 0.0, %v3666
        %v3668 = vpop.f32.mrb[0].mxu0
        %3669 = vdwg.mxu0
        %3679 = vrot.lane.b32.xlu0 %v2882, 112
        %v3680 = vpop.permute.xlu0 %3679
        %3681 = vrot.lane.b32.xlu0 %v2898, 112
        %v3682 = vpop.permute.xlu0 %3681
        %3683 = vrot.lane.b32.xlu0 %v2914, 112
        %v3684 = vpop.permute.xlu0 %3683
        %3685 = vrot.lane.b32.xlu0 %v2930, 112
        %v3686 = vpop.permute.xlu0 %3685
        %3687 = vrot.lane.b32.xlu0 %v2946, 112
        %v3688 = vpop.permute.xlu0 %3687
        %3689 = vrot.lane.b32.xlu0 %v2962, 112
        %v3690 = vpop.permute.xlu0 %3689
        %3691 = vrot.lane.b32.xlu0 %v2978, 112
        %v3692 = vpop.permute.xlu0 %3691
        %3693 = vrot.lane.b32.xlu0 %v2994, 112
        %v3694 = vpop.permute.xlu0 %3693
        %3695 = vrot.lane.b32.xlu0 %v3010, 112
        %v3696 = vpop.permute.xlu0 %3695
        %v3697 = vsel %vm1463, %v3680, 0
        %v3699 = vsel %vm1463, %v3682, 0
        %v3701 = vsel %vm1463, %v3684, 0
        %v3703 = vsel %vm1463, %v3686, 0
        %v3705 = vsel %vm1463, %v3688, 0
        %v3707 = vsel %vm1463, %v3690, 0
        %v3709 = vsel %vm1463, %v3692, 0
        %v3711 = vsel %vm1463, %v3694, 0
        %v3713 = vsel %vm1463, %v3696, 0
        %v3716 = vsel %vm1463, %v1729, 0
        %v3719 = vsel %vm1463, %v1732, 0
        %v3722 = vsel %vm1463, %v1737, 0
        %3724 = vmatprep.subr.mxu0 0.0
        %3725 = vmatpush1.xpose.msra.mxu0 %v3716
        %3726 = vmatprep.subr.mxu0 0.0
        %3727 = vmatpush1.xpose.msra.mxu0 %v3719
        %3728 = vmatprep.subr.mxu0 0.0
        %3729 = vmatpush1.xpose.msra.mxu0 %v3722
        %3730 = vmatprep.subr.mxu0 0.0
        %3731 = vmatpush1.xpose.msra.mxu0 0.0
        %3732 = vmatprep.subr.mxu0 0.0
        %3733 = vmatpush1.xpose.msra.mxu0 0.0
        %3734 = vmatprep.subr.mxu0 0.0
        %3735 = vmatpush1.xpose.msra.mxu0 0.0
        %3736 = vmatprep.subr.mxu0 0.0
        %3737 = vmatpush1.xpose.msra.mxu0 0.0
        %3738 = vmatprep.subr.mxu0 0.0
        %3739 = vmatpush1.xpose.msra.mxu0 0.0
        %3740 = vmatprep.subr.mxu0 0.0
        %3741 = vmatpush1.xpose.msra.mxu0 0.0
        %3742 = vmatprep.subr.mxu0 0.0
        %3743 = vmatpush1.xpose.msra.mxu0 0.0
        %3744 = vmatprep.subr.mxu0 0.0
        %3745 = vmatpush1.xpose.msra.mxu0 0.0
        %3746 = vmatprep.subr.mxu0 0.0
        %3747 = vmatpush1.xpose.msra.mxu0 0.0
        %3748 = vmatprep.subr.mxu0 0.0
        %3749 = vmatpush1.xpose.msra.mxu0 0.0
        %3750 = vmatprep.subr.mxu0 0.0
        %3751 = vmatpush1.xpose.msra.mxu0 0.0
        %3752 = vmatprep.subr.mxu0 0.0
        %3753 = vmatpush1.xpose.msra.mxu0 0.0
        %3754 = vmatprep.subr.mxu0 0.0
        %3755 = vmatpush1.xpose.msra.mxu0 0.0
        %3756 = vmatprep.subr.mxu0 0.0
        %3757 = vmatpush1.xpose.msra.mxu0 0.0
        %3758 = vmatprep.subr.mxu0 0.0
        %3759 = vmatpush1.xpose.msra.mxu0 0.0
        %3760 = vmatprep.subr.mxu0 0.0
        %3761 = vmatpush1.xpose.msra.mxu0 0.0
        %3762 = vmatprep.subr.mxu0 0.0
        %3763 = vmatpush1.xpose.msra.mxu0 0.0
        %3764 = vmatprep.subr.mxu0 0.0
        %3765 = vmatpush1.xpose.msra.mxu0 0.0
        %3766 = vmatprep.subr.mxu0 0.0
        %3767 = vmatpush1.xpose.msra.mxu0 0.0
        %3768 = vmatprep.subr.mxu0 0.0
        %3769 = vmatpush1.xpose.msra.mxu0 0.0
        %3770 = vmatprep.subr.mxu0 0.0
        %3771 = vmatpush1.xpose.msra.mxu0 0.0
        %3772 = vmatprep.subr.mxu0 0.0
        %3773 = vmatpush1.xpose.msra.mxu0 0.0
        %3774 = vmatprep.subr.mxu0 0.0
        %3775 = vmatpush1.xpose.msra.mxu0 0.0
        %3776 = vmatprep.subr.mxu0 0.0
        %3777 = vmatpush1.xpose.msra.mxu0 0.0
        %3778 = vmatprep.subr.mxu0 0.0
        %3779 = vmatpush1.xpose.msra.mxu0 0.0
        %3780 = vmatprep.subr.mxu0 0.0
        %3781 = vmatpush1.xpose.msra.mxu0 0.0
        %3782 = vmatprep.subr.mxu0 0.0
        %3783 = vmatpush1.xpose.msra.mxu0 0.0
        %3784 = vmatprep.subr.mxu0 0.0
        %3785 = vmatpush1.xpose.msra.mxu0 0.0
        %3786 = vmatprep.subr.mxu0 0.0
        %3787 = vmatpush1.xpose.msra.mxu0 0.0
        %3788 = vmatprep.mubr.f32.mxu0 0.0
        %3789 = vmatmul.mubr.f32.gmra.mrb[0].mxu0 %v3697
        %v3790 = vpop.f32.mrb[0].mxu0
        %v3791 = vadd.f32 0.0, %v3790
        %v3792 = vpop.f32.mrb[0].mxu0
        %3793 = vmatprep.mubr.f32.mxu0 0.0
        %3794 = vmatmul.mubr.f32.gmra.mrb[0].mxu0 %v3699
        %v3795 = vpop.f32.mrb[0].mxu0
        %v3796 = vadd.f32 0.0, %v3795
        %v3797 = vpop.f32.mrb[0].mxu0
        %3798 = vmatprep.mubr.f32.mxu0 0.0
        %3799 = vmatmul.mubr.f32.gmra.mrb[0].mxu0 %v3701
        %v3800 = vpop.f32.mrb[0].mxu0
        %v3801 = vadd.f32 0.0, %v3800
        %v3802 = vpop.f32.mrb[0].mxu0
        %3803 = vmatprep.mubr.f32.mxu0 0.0
        %3804 = vmatmul.mubr.f32.gmra.mrb[0].mxu0 %v3703
        %v3805 = vpop.f32.mrb[0].mxu0
        %v3806 = vadd.f32 0.0, %v3805
        %v3807 = vpop.f32.mrb[0].mxu0
        %3808 = vmatprep.mubr.f32.mxu0 0.0
        %3809 = vmatmul.mubr.f32.gmra.mrb[0].mxu0 %v3705
        %v3810 = vpop.f32.mrb[0].mxu0
        %v3811 = vadd.f32 0.0, %v3810
        %v3812 = vpop.f32.mrb[0].mxu0
        %3813 = vmatprep.mubr.f32.mxu0 0.0
        %3814 = vmatmul.mubr.f32.gmra.mrb[0].mxu0 %v3707
        %v3815 = vpop.f32.mrb[0].mxu0
        %v3816 = vadd.f32 0.0, %v3815
        %v3817 = vpop.f32.mrb[0].mxu0
        %3818 = vmatprep.mubr.f32.mxu0 0.0
        %3819 = vmatmul.mubr.f32.gmra.mrb[0].mxu0 %v3709
        %v3820 = vpop.f32.mrb[0].mxu0
        %v3821 = vadd.f32 0.0, %v3820
        %v3822 = vpop.f32.mrb[0].mxu0
        %3823 = vmatprep.mubr.f32.mxu0 0.0
        %3824 = vmatmul.mubr.f32.gmra.mrb[0].mxu0 %v3711
        %v3825 = vpop.f32.mrb[0].mxu0
        %v3826 = vadd.f32 0.0, %v3825
        %v3827 = vpop.f32.mrb[0].mxu0
        %3828 = vmatprep.mubr.f32.mxu0 0.0
        %3829 = vmatmul.mubr.f32.gmra.mrb[0].mxu0 %v3713
        %v3830 = vpop.f32.mrb[0].mxu0
        %v3831 = vadd.f32 0.0, %v3830
        %v3832 = vpop.f32.mrb[0].mxu0
        %3833 = vdwg.mxu0
        %3843 = vrot.lane.b32.xlu0 %v2883, 112
        %v3844 = vpop.permute.xlu0 %3843
        %3845 = vrot.lane.b32.xlu0 %v2899, 112
        %v3846 = vpop.permute.xlu0 %3845
        %3847 = vrot.lane.b32.xlu0 %v2915, 112
        %v3848 = vpop.permute.xlu0 %3847
        %3849 = vrot.lane.b32.xlu0 %v2931, 112
        %v3850 = vpop.permute.xlu0 %3849
        %3851 = vrot.lane.b32.xlu0 %v2947, 112
        %v3852 = vpop.permute.xlu0 %3851
        %3853 = vrot.lane.b32.xlu0 %v2963, 112
        %v3854 = vpop.permute.xlu0 %3853
        %3855 = vrot.lane.b32.xlu0 %v2979, 112
        %v3856 = vpop.permute.xlu0 %3855
        %3857 = vrot.lane.b32.xlu0 %v2995, 112
        %v3858 = vpop.permute.xlu0 %3857
        %3859 = vrot.lane.b32.xlu0 %v3011, 112
        %v3860 = vpop.permute.xlu0 %3859
        %v3861 = vsel %vm1463, %v3844, 0
        %v3863 = vsel %vm1463, %v3846, 0
        %v3865 = vsel %vm1463, %v3848, 0
        %v3867 = vsel %vm1463, %v3850, 0
        %v3869 = vsel %vm1463, %v3852, 0
        %v3871 = vsel %vm1463, %v3854, 0
        %v3873 = vsel %vm1463, %v3856, 0
        %v3875 = vsel %vm1463, %v3858, 0
        %v3877 = vsel %vm1463, %v3860, 0
        %v3880 = vsel %vm1463, %v1740, 0
        %v3883 = vsel %vm1463, %v1745, 0
        %v3886 = vsel %vm1463, %v1748, 0
        %3888 = vmatprep.subr.mxu0 0.0
        %3889 = vmatpush1.xpose.msra.mxu0 %v3880
        %3890 = vmatprep.subr.mxu0 0.0
        %3891 = vmatpush1.xpose.msra.mxu0 %v3883
        %3892 = vmatprep.subr.mxu0 0.0
        %3893 = vmatpush1.xpose.msra.mxu0 %v3886
        %3894 = vmatprep.subr.mxu0 0.0
        %3895 = vmatpush1.xpose.msra.mxu0 0.0
        %3896 = vmatprep.subr.mxu0 0.0
        %3897 = vmatpush1.xpose.msra.mxu0 0.0
        %3898 = vmatprep.subr.mxu0 0.0
        %3899 = vmatpush1.xpose.msra.mxu0 0.0
        %3900 = vmatprep.subr.mxu0 0.0
        %3901 = vmatpush1.xpose.msra.mxu0 0.0
        %3902 = vmatprep.subr.mxu0 0.0
        %3903 = vmatpush1.xpose.msra.mxu0 0.0
        %3904 = vmatprep.subr.mxu0 0.0
        %3905 = vmatpush1.xpose.msra.mxu0 0.0
        %3906 = vmatprep.subr.mxu0 0.0
        %3907 = vmatpush1.xpose.msra.mxu0 0.0
        %3908 = vmatprep.subr.mxu0 0.0
        %3909 = vmatpush1.xpose.msra.mxu0 0.0
        %3910 = vmatprep.subr.mxu0 0.0
        %3911 = vmatpush1.xpose.msra.mxu0 0.0
        %3912 = vmatprep.subr.mxu0 0.0
        %3913 = vmatpush1.xpose.msra.mxu0 0.0
        %3914 = vmatprep.subr.mxu0 0.0
        %3915 = vmatpush1.xpose.msra.mxu0 0.0
        %3916 = vmatprep.subr.mxu0 0.0
        %3917 = vmatpush1.xpose.msra.mxu0 0.0
        %3918 = vmatprep.subr.mxu0 0.0
        %3919 = vmatpush1.xpose.msra.mxu0 0.0
        %3920 = vmatprep.subr.mxu0 0.0
        %3921 = vmatpush1.xpose.msra.mxu0 0.0
        %3922 = vmatprep.subr.mxu0 0.0
        %3923 = vmatpush1.xpose.msra.mxu0 0.0
        %3924 = vmatprep.subr.mxu0 0.0
        %3925 = vmatpush1.xpose.msra.mxu0 0.0
        %3926 = vmatprep.subr.mxu0 0.0
        %3927 = vmatpush1.xpose.msra.mxu0 0.0
        %3928 = vmatprep.subr.mxu0 0.0
        %3929 = vmatpush1.xpose.msra.mxu0 0.0
        %3930 = vmatprep.subr.mxu0 0.0
        %3931 = vmatpush1.xpose.msra.mxu0 0.0
        %3932 = vmatprep.subr.mxu0 0.0
        %3933 = vmatpush1.xpose.msra.mxu0 0.0
        %3934 = vmatprep.subr.mxu0 0.0
        %3935 = vmatpush1.xpose.msra.mxu0 0.0
        %3936 = vmatprep.subr.mxu0 0.0
        %3937 = vmatpush1.xpose.msra.mxu0 0.0
        %3938 = vmatprep.subr.mxu0 0.0
        %3939 = vmatpush1.xpose.msra.mxu0 0.0
        %3940 = vmatprep.subr.mxu0 0.0
        %3941 = vmatpush1.xpose.msra.mxu0 0.0
        %3942 = vmatprep.subr.mxu0 0.0
        %3943 = vmatpush1.xpose.msra.mxu0 0.0
        %3944 = vmatprep.subr.mxu0 0.0
        %3945 = vmatpush1.xpose.msra.mxu0 0.0
        %3946 = vmatprep.subr.mxu0 0.0
        %3947 = vmatpush1.xpose.msra.mxu0 0.0
        %3948 = vmatprep.subr.mxu0 0.0
        %3949 = vmatpush1.xpose.msra.mxu0 0.0
        %3950 = vmatprep.subr.mxu0 0.0
        %3951 = vmatpush1.xpose.msra.mxu0 0.0
        %3952 = vmatprep.mubr.f32.mxu0 0.0
        %3953 = vmatmul.mubr.f32.gmra.mrb[0].mxu0 %v3861
        %v3954 = vpop.f32.mrb[0].mxu0
        %v3955 = vadd.f32 0.0, %v3954
        %v3956 = vpop.f32.mrb[0].mxu0
        %3957 = vmatprep.mubr.f32.mxu0 0.0
        %3958 = vmatmul.mubr.f32.gmra.mrb[0].mxu0 %v3863
        %v3959 = vpop.f32.mrb[0].mxu0
        %v3960 = vadd.f32 0.0, %v3959
        %v3961 = vpop.f32.mrb[0].mxu0
        %3962 = vmatprep.mubr.f32.mxu0 0.0
        %3963 = vmatmul.mubr.f32.gmra.mrb[0].mxu0 %v3865
        %v3964 = vpop.f32.mrb[0].mxu0
        %v3965 = vadd.f32 0.0, %v3964
        %v3966 = vpop.f32.mrb[0].mxu0
        %3967 = vmatprep.mubr.f32.mxu0 0.0
        %3968 = vmatmul.mubr.f32.gmra.mrb[0].mxu0 %v3867
        %v3969 = vpop.f32.mrb[0].mxu0
        %v3970 = vadd.f32 0.0, %v3969
        %v3971 = vpop.f32.mrb[0].mxu0
        %3972 = vmatprep.mubr.f32.mxu0 0.0
        %3973 = vmatmul.mubr.f32.gmra.mrb[0].mxu0 %v3869
        %v3974 = vpop.f32.mrb[0].mxu0
        %v3975 = vadd.f32 0.0, %v3974
        %v3976 = vpop.f32.mrb[0].mxu0
        %3977 = vmatprep.mubr.f32.mxu0 0.0
        %3978 = vmatmul.mubr.f32.gmra.mrb[0].mxu0 %v3871
        %v3979 = vpop.f32.mrb[0].mxu0
        %v3980 = vadd.f32 0.0, %v3979
        %v3981 = vpop.f32.mrb[0].mxu0
        %3982 = vmatprep.mubr.f32.mxu0 0.0
        %3983 = vmatmul.mubr.f32.gmra.mrb[0].mxu0 %v3873
        %v3984 = vpop.f32.mrb[0].mxu0
        %v3985 = vadd.f32 0.0, %v3984
        %v3986 = vpop.f32.mrb[0].mxu0
        %3987 = vmatprep.mubr.f32.mxu0 0.0
        %3988 = vmatmul.mubr.f32.gmra.mrb[0].mxu0 %v3875
        %v3989 = vpop.f32.mrb[0].mxu0
        %v3990 = vadd.f32 0.0, %v3989
        %v3991 = vpop.f32.mrb[0].mxu0
        %3992 = vmatprep.mubr.f32.mxu0 0.0
        %3993 = vmatmul.mubr.f32.gmra.mrb[0].mxu0 %v3877
        %v3994 = vpop.f32.mrb[0].mxu0
        %v3995 = vadd.f32 0.0, %v3994
        %v3996 = vpop.f32.mrb[0].mxu0
        %3997 = vdwg.mxu0
        %4007 = vrot.lane.b32.xlu0 %v2884, 112
        %v4008 = vpop.permute.xlu0 %4007
        %4009 = vrot.lane.b32.xlu0 %v2900, 112
        %v4010 = vpop.permute.xlu0 %4009
        %4011 = vrot.lane.b32.xlu0 %v2916, 112
        %v4012 = vpop.permute.xlu0 %4011
        %4013 = vrot.lane.b32.xlu0 %v2932, 112
        %v4014 = vpop.permute.xlu0 %4013
        %4015 = vrot.lane.b32.xlu0 %v2948, 112
        %v4016 = vpop.permute.xlu0 %4015
        %4017 = vrot.lane.b32.xlu0 %v2964, 112
        %v4018 = vpop.permute.xlu0 %4017
        %4019 = vrot.lane.b32.xlu0 %v2980, 112
        %v4020 = vpop.permute.xlu0 %4019
        %4021 = vrot.lane.b32.xlu0 %v2996, 112
        %v4022 = vpop.permute.xlu0 %4021
        %4023 = vrot.lane.b32.xlu0 %v3012, 112
        %v4024 = vpop.permute.xlu0 %4023
        %v4025 = vsel %vm1463, %v4008, 0
        %v4027 = vsel %vm1463, %v4010, 0
        %v4029 = vsel %vm1463, %v4012, 0
        %v4031 = vsel %vm1463, %v4014, 0
        %v4033 = vsel %vm1463, %v4016, 0
        %v4035 = vsel %vm1463, %v4018, 0
        %v4037 = vsel %vm1463, %v4020, 0
        %v4039 = vsel %vm1463, %v4022, 0
        %v4041 = vsel %vm1463, %v4024, 0
        %v4044 = vsel %vm1463, %v1753, 0
        %v4047 = vsel %vm1463, %v1756, 0
        %v4050 = vsel %vm1463, %v1761, 0
        %4052 = vmatprep.subr.mxu0 0.0
        %4053 = vmatpush1.xpose.msra.mxu0 %v4044
        %4054 = vmatprep.subr.mxu0 0.0
        %4055 = vmatpush1.xpose.msra.mxu0 %v4047
        %4056 = vmatprep.subr.mxu0 0.0
        %4057 = vmatpush1.xpose.msra.mxu0 %v4050
        %4058 = vmatprep.subr.mxu0 0.0
        %4059 = vmatpush1.xpose.msra.mxu0 0.0
        %4060 = vmatprep.subr.mxu0 0.0
        %4061 = vmatpush1.xpose.msra.mxu0 0.0
        %4062 = vmatprep.subr.mxu0 0.0
        %4063 = vmatpush1.xpose.msra.mxu0 0.0
        %4064 = vmatprep.subr.mxu0 0.0
        %4065 = vmatpush1.xpose.msra.mxu0 0.0
        %4066 = vmatprep.subr.mxu0 0.0
        %4067 = vmatpush1.xpose.msra.mxu0 0.0
        %4068 = vmatprep.subr.mxu0 0.0
        %4069 = vmatpush1.xpose.msra.mxu0 0.0
        %4070 = vmatprep.subr.mxu0 0.0
        %4071 = vmatpush1.xpose.msra.mxu0 0.0
        %4072 = vmatprep.subr.mxu0 0.0
        %4073 = vmatpush1.xpose.msra.mxu0 0.0
        %4074 = vmatprep.subr.mxu0 0.0
        %4075 = vmatpush1.xpose.msra.mxu0 0.0
        %4076 = vmatprep.subr.mxu0 0.0
        %4077 = vmatpush1.xpose.msra.mxu0 0.0
        %4078 = vmatprep.subr.mxu0 0.0
        %4079 = vmatpush1.xpose.msra.mxu0 0.0
        %4080 = vmatprep.subr.mxu0 0.0
        %4081 = vmatpush1.xpose.msra.mxu0 0.0
        %4082 = vmatprep.subr.mxu0 0.0
        %4083 = vmatpush1.xpose.msra.mxu0 0.0
        %4084 = vmatprep.subr.mxu0 0.0
        %4085 = vmatpush1.xpose.msra.mxu0 0.0
        %4086 = vmatprep.subr.mxu0 0.0
        %4087 = vmatpush1.xpose.msra.mxu0 0.0
        %4088 = vmatprep.subr.mxu0 0.0
        %4089 = vmatpush1.xpose.msra.mxu0 0.0
        %4090 = vmatprep.subr.mxu0 0.0
        %4091 = vmatpush1.xpose.msra.mxu0 0.0
        %4092 = vmatprep.subr.mxu0 0.0
        %4093 = vmatpush1.xpose.msra.mxu0 0.0
        %4094 = vmatprep.subr.mxu0 0.0
        %4095 = vmatpush1.xpose.msra.mxu0 0.0
        %4096 = vmatprep.subr.mxu0 0.0
        %4097 = vmatpush1.xpose.msra.mxu0 0.0
        %4098 = vmatprep.subr.mxu0 0.0
        %4099 = vmatpush1.xpose.msra.mxu0 0.0
        %4100 = vmatprep.subr.mxu0 0.0
        %4101 = vmatpush1.xpose.msra.mxu0 0.0
        %4102 = vmatprep.subr.mxu0 0.0
        %4103 = vmatpush1.xpose.msra.mxu0 0.0
        %4104 = vmatprep.subr.mxu0 0.0
        %4105 = vmatpush1.xpose.msra.mxu0 0.0
        %4106 = vmatprep.subr.mxu0 0.0
        %4107 = vmatpush1.xpose.msra.mxu0 0.0
        %4108 = vmatprep.subr.mxu0 0.0
        %4109 = vmatpush1.xpose.msra.mxu0 0.0
        %4110 = vmatprep.subr.mxu0 0.0
        %4111 = vmatpush1.xpose.msra.mxu0 0.0
        %4112 = vmatprep.subr.mxu0 0.0
        %4113 = vmatpush1.xpose.msra.mxu0 0.0
        %4114 = vmatprep.subr.mxu0 0.0
        %4115 = vmatpush1.xpose.msra.mxu0 0.0
        %4116 = vmatprep.mubr.f32.mxu0 0.0
        %4117 = vmatmul.mubr.f32.gmra.mrb[0].mxu0 %v4025
        %v4118 = vpop.f32.mrb[0].mxu0
        %v4119 = vadd.f32 0.0, %v4118
        %v4120 = vpop.f32.mrb[0].mxu0
        %4121 = vmatprep.mubr.f32.mxu0 0.0
        %4122 = vmatmul.mubr.f32.gmra.mrb[0].mxu0 %v4027
        %v4123 = vpop.f32.mrb[0].mxu0
        %v4124 = vadd.f32 0.0, %v4123
        %v4125 = vpop.f32.mrb[0].mxu0
        %4126 = vmatprep.mubr.f32.mxu0 0.0
        %4127 = vmatmul.mubr.f32.gmra.mrb[0].mxu0 %v4029
        %v4128 = vpop.f32.mrb[0].mxu0
        %v4129 = vadd.f32 0.0, %v4128
        %v4130 = vpop.f32.mrb[0].mxu0
        %4131 = vmatprep.mubr.f32.mxu0 0.0
        %4132 = vmatmul.mubr.f32.gmra.mrb[0].mxu0 %v4031
        %v4133 = vpop.f32.mrb[0].mxu0
        %v4134 = vadd.f32 0.0, %v4133
        %v4135 = vpop.f32.mrb[0].mxu0
        %4136 = vmatprep.mubr.f32.mxu0 0.0
        %4137 = vmatmul.mubr.f32.gmra.mrb[0].mxu0 %v4033
        %v4138 = vpop.f32.mrb[0].mxu0
        %v4139 = vadd.f32 0.0, %v4138
        %v4140 = vpop.f32.mrb[0].mxu0
        %4141 = vmatprep.mubr.f32.mxu0 0.0
        %4142 = vmatmul.mubr.f32.gmra.mrb[0].mxu0 %v4035
        %v4143 = vpop.f32.mrb[0].mxu0
        %v4144 = vadd.f32 0.0, %v4143
        %v4145 = vpop.f32.mrb[0].mxu0
        %4146 = vmatprep.mubr.f32.mxu0 0.0
        %4147 = vmatmul.mubr.f32.gmra.mrb[0].mxu0 %v4037
        %v4148 = vpop.f32.mrb[0].mxu0
        %v4149 = vadd.f32 0.0, %v4148
        %v4150 = vpop.f32.mrb[0].mxu0
        %4151 = vmatprep.mubr.f32.mxu0 0.0
        %4152 = vmatmul.mubr.f32.gmra.mrb[0].mxu0 %v4039
        %v4153 = vpop.f32.mrb[0].mxu0
        %v4154 = vadd.f32 0.0, %v4153
        %v4155 = vpop.f32.mrb[0].mxu0
        %4156 = vmatprep.mubr.f32.mxu0 0.0
        %4157 = vmatmul.mubr.f32.gmra.mrb[0].mxu0 %v4041
        %v4158 = vpop.f32.mrb[0].mxu0
        %v4159 = vadd.f32 0.0, %v4158
        %v4160 = vpop.f32.mrb[0].mxu0
        %4161 = vdwg.mxu0
        %4171 = vrot.lane.b32.xlu0 %v2885, 112
        %v4172 = vpop.permute.xlu0 %4171
        %4173 = vrot.lane.b32.xlu0 %v2901, 112
        %v4174 = vpop.permute.xlu0 %4173
        %4175 = vrot.lane.b32.xlu0 %v2917, 112
        %v4176 = vpop.permute.xlu0 %4175
        %4177 = vrot.lane.b32.xlu0 %v2933, 112
        %v4178 = vpop.permute.xlu0 %4177
        %4179 = vrot.lane.b32.xlu0 %v2949, 112
        %v4180 = vpop.permute.xlu0 %4179
        %4181 = vrot.lane.b32.xlu0 %v2965, 112
        %v4182 = vpop.permute.xlu0 %4181
        %4183 = vrot.lane.b32.xlu0 %v2981, 112
        %v4184 = vpop.permute.xlu0 %4183
        %4185 = vrot.lane.b32.xlu0 %v2997, 112
        %v4186 = vpop.permute.xlu0 %4185
        %4187 = vrot.lane.b32.xlu0 %v3013, 112
        %v4188 = vpop.permute.xlu0 %4187
        %v4189 = vsel %vm1463, %v4172, 0
        %v4191 = vsel %vm1463, %v4174, 0
        %v4193 = vsel %vm1463, %v4176, 0
        %v4195 = vsel %vm1463, %v4178, 0
        %v4197 = vsel %vm1463, %v4180, 0
        %v4199 = vsel %vm1463, %v4182, 0
        %v4201 = vsel %vm1463, %v4184, 0
        %v4203 = vsel %vm1463, %v4186, 0
        %v4205 = vsel %vm1463, %v4188, 0
        %v4208 = vsel %vm1463, %v1764, 0
        %v4211 = vsel %vm1463, %v1769, 0
        %v4214 = vsel %vm1463, %v1772, 0
        %4216 = vmatprep.subr.mxu0 0.0
        %4217 = vmatpush1.xpose.msra.mxu0 %v4208
        %4218 = vmatprep.subr.mxu0 0.0
        %4219 = vmatpush1.xpose.msra.mxu0 %v4211
        %4220 = vmatprep.subr.mxu0 0.0
        %4221 = vmatpush1.xpose.msra.mxu0 %v4214
        %4222 = vmatprep.subr.mxu0 0.0
        %4223 = vmatpush1.xpose.msra.mxu0 0.0
        %4224 = vmatprep.subr.mxu0 0.0
        %4225 = vmatpush1.xpose.msra.mxu0 0.0
        %4226 = vmatprep.subr.mxu0 0.0
        %4227 = vmatpush1.xpose.msra.mxu0 0.0
        %4228 = vmatprep.subr.mxu0 0.0
        %4229 = vmatpush1.xpose.msra.mxu0 0.0
        %4230 = vmatprep.subr.mxu0 0.0
        %4231 = vmatpush1.xpose.msra.mxu0 0.0
        %4232 = vmatprep.subr.mxu0 0.0
        %4233 = vmatpush1.xpose.msra.mxu0 0.0
        %4234 = vmatprep.subr.mxu0 0.0
        %4235 = vmatpush1.xpose.msra.mxu0 0.0
        %4236 = vmatprep.subr.mxu0 0.0
        %4237 = vmatpush1.xpose.msra.mxu0 0.0
        %4238 = vmatprep.subr.mxu0 0.0
        %4239 = vmatpush1.xpose.msra.mxu0 0.0
        %4240 = vmatprep.subr.mxu0 0.0
        %4241 = vmatpush1.xpose.msra.mxu0 0.0
        %4242 = vmatprep.subr.mxu0 0.0
        %4243 = vmatpush1.xpose.msra.mxu0 0.0
        %4244 = vmatprep.subr.mxu0 0.0
        %4245 = vmatpush1.xpose.msra.mxu0 0.0
        %4246 = vmatprep.subr.mxu0 0.0
        %4247 = vmatpush1.xpose.msra.mxu0 0.0
        %4248 = vmatprep.subr.mxu0 0.0
        %4249 = vmatpush1.xpose.msra.mxu0 0.0
        %4250 = vmatprep.subr.mxu0 0.0
        %4251 = vmatpush1.xpose.msra.mxu0 0.0
        %4252 = vmatprep.subr.mxu0 0.0
        %4253 = vmatpush1.xpose.msra.mxu0 0.0
        %4254 = vmatprep.subr.mxu0 0.0
        %4255 = vmatpush1.xpose.msra.mxu0 0.0
        %4256 = vmatprep.subr.mxu0 0.0
        %4257 = vmatpush1.xpose.msra.mxu0 0.0
        %4258 = vmatprep.subr.mxu0 0.0
        %4259 = vmatpush1.xpose.msra.mxu0 0.0
        %4260 = vmatprep.subr.mxu0 0.0
        %4261 = vmatpush1.xpose.msra.mxu0 0.0
        %4262 = vmatprep.subr.mxu0 0.0
        %4263 = vmatpush1.xpose.msra.mxu0 0.0
        %4264 = vmatprep.subr.mxu0 0.0
        %4265 = vmatpush1.xpose.msra.mxu0 0.0
        %4266 = vmatprep.subr.mxu0 0.0
        %4267 = vmatpush1.xpose.msra.mxu0 0.0
        %4268 = vmatprep.subr.mxu0 0.0
        %4269 = vmatpush1.xpose.msra.mxu0 0.0
        %4270 = vmatprep.subr.mxu0 0.0
        %4271 = vmatpush1.xpose.msra.mxu0 0.0
        %4272 = vmatprep.subr.mxu0 0.0
        %4273 = vmatpush1.xpose.msra.mxu0 0.0
        %4274 = vmatprep.subr.mxu0 0.0
        %4275 = vmatpush1.xpose.msra.mxu0 0.0
        %4276 = vmatprep.subr.mxu0 0.0
        %4277 = vmatpush1.xpose.msra.mxu0 0.0
        %4278 = vmatprep.subr.mxu0 0.0
        %4279 = vmatpush1.xpose.msra.mxu0 0.0
        %4280 = vmatprep.mubr.f32.mxu0 0.0
        %4281 = vmatmul.mubr.f32.gmra.mrb[0].mxu0 %v4189
        %v4282 = vpop.f32.mrb[0].mxu0
        %v4283 = vadd.f32 0.0, %v4282
        %v4284 = vpop.f32.mrb[0].mxu0
        %4285 = vmatprep.mubr.f32.mxu0 0.0
        %4286 = vmatmul.mubr.f32.gmra.mrb[0].mxu0 %v4191
        %v4287 = vpop.f32.mrb[0].mxu0
        %v4288 = vadd.f32 0.0, %v4287
        %v4289 = vpop.f32.mrb[0].mxu0
        %4290 = vmatprep.mubr.f32.mxu0 0.0
        %4291 = vmatmul.mubr.f32.gmra.mrb[0].mxu0 %v4193
        %v4292 = vpop.f32.mrb[0].mxu0
        %v4293 = vadd.f32 0.0, %v4292
        %v4294 = vpop.f32.mrb[0].mxu0
        %4295 = vmatprep.mubr.f32.mxu0 0.0
        %4296 = vmatmul.mubr.f32.gmra.mrb[0].mxu0 %v4195
        %v4297 = vpop.f32.mrb[0].mxu0
        %v4298 = vadd.f32 0.0, %v4297
        %v4299 = vpop.f32.mrb[0].mxu0
        %4300 = vmatprep.mubr.f32.mxu0 0.0
        %4301 = vmatmul.mubr.f32.gmra.mrb[0].mxu0 %v4197
        %v4302 = vpop.f32.mrb[0].mxu0
        %v4303 = vadd.f32 0.0, %v4302
        %v4304 = vpop.f32.mrb[0].mxu0
        %4305 = vmatprep.mubr.f32.mxu0 0.0
        %4306 = vmatmul.mubr.f32.gmra.mrb[0].mxu0 %v4199
        %v4307 = vpop.f32.mrb[0].mxu0
        %v4308 = vadd.f32 0.0, %v4307
        %v4309 = vpop.f32.mrb[0].mxu0
        %4310 = vmatprep.mubr.f32.mxu0 0.0
        %4311 = vmatmul.mubr.f32.gmra.mrb[0].mxu0 %v4201
        %v4312 = vpop.f32.mrb[0].mxu0
        %v4313 = vadd.f32 0.0, %v4312
        %v4314 = vpop.f32.mrb[0].mxu0
        %4315 = vmatprep.mubr.f32.mxu0 0.0
        %4316 = vmatmul.mubr.f32.gmra.mrb[0].mxu0 %v4203
        %v4317 = vpop.f32.mrb[0].mxu0
        %v4318 = vadd.f32 0.0, %v4317
        %v4319 = vpop.f32.mrb[0].mxu0
        %4320 = vmatprep.mubr.f32.mxu0 0.0
        %4321 = vmatmul.mubr.f32.gmra.mrb[0].mxu0 %v4205
        %v4322 = vpop.f32.mrb[0].mxu0
        %v4323 = vadd.f32 0.0, %v4322
        %v4324 = vpop.f32.mrb[0].mxu0
        %4325 = vdwg.mxu0
        %v4326 = vmul.f32 %v3135, %v2860
        %v4327 = vmul.f32 %v3299, %v2861
        %v4328 = vmul.f32 %v3463, %v2862
        %v4329 = vmul.f32 %v3627, %v2863
        %v4330 = vmul.f32 %v3791, %v2864
        %v4331 = vmul.f32 %v3955, %v2865
        %v4332 = vmul.f32 %v4119, %v2866
        %v4333 = vmul.f32 %v4283, %v2867
        %v4334 = vadd.f32 %v4326, 0.0
        %v4335 = vadd.f32 %v4327, 0.0
        %v4336 = vadd.f32 %v4328, 0.0
        %v4337 = vadd.f32 %v4329, 0.0
        %v4338 = vadd.f32 %v4330, 0.0
        %v4339 = vadd.f32 %v4331, 0.0
        %v4340 = vadd.f32 %v4332, 0.0
        %v4341 = vadd.f32 %v4333, 0.0
        %v4342 = vmul.f32 %v3140, %v2860
        %v4343 = vmul.f32 %v3304, %v2861
        %v4344 = vmul.f32 %v3468, %v2862
        %v4345 = vmul.f32 %v3632, %v2863
        %v4346 = vmul.f32 %v3796, %v2864
        %v4347 = vmul.f32 %v3960, %v2865
        %v4348 = vmul.f32 %v4124, %v2866
        %v4349 = vmul.f32 %v4288, %v2867
        %4358 = vrot.lane.b32.xlu0 %v4342, 127
        %v4359 = vpop.permute.xlu0 %4358
        %4360 = vrot.lane.b32.xlu0 %v4343, 127
        %v4361 = vpop.permute.xlu0 %4360
        %4362 = vrot.lane.b32.xlu0 %v4344, 127
        %v4363 = vpop.permute.xlu0 %4362
        %4364 = vrot.lane.b32.xlu0 %v4345, 127
        %v4365 = vpop.permute.xlu0 %4364
        %4366 = vrot.lane.b32.xlu0 %v4346, 127
        %v4367 = vpop.permute.xlu0 %4366
        %4368 = vrot.lane.b32.xlu0 %v4347, 127
        %v4369 = vpop.permute.xlu0 %4368
        %4370 = vrot.lane.b32.xlu0 %v4348, 127
        %v4371 = vpop.permute.xlu0 %4370
        %4372 = vrot.lane.b32.xlu0 %v4349, 127
        %v4373 = vpop.permute.xlu0 %4372
        %v4382 = vadd.f32 %v4334, %v4359
        %v4383 = vadd.f32 %v4335, %v4361
        %v4384 = vadd.f32 %v4336, %v4363
        %v4385 = vadd.f32 %v4337, %v4365
        %v4386 = vadd.f32 %v4338, %v4367
        %v4387 = vadd.f32 %v4339, %v4369
        %v4388 = vadd.f32 %v4340, %v4371
        %v4389 = vadd.f32 %v4341, %v4373
        %v4390 = vmul.f32 %v3145, %v2860
        %v4391 = vmul.f32 %v3309, %v2861
        %v4392 = vmul.f32 %v3473, %v2862
        %v4393 = vmul.f32 %v3637, %v2863
        %v4394 = vmul.f32 %v3801, %v2864
        %v4395 = vmul.f32 %v3965, %v2865
        %v4396 = vmul.f32 %v4129, %v2866
        %v4397 = vmul.f32 %v4293, %v2867
        %4406 = vrot.lane.b32.xlu0 %v4390, 126
        %v4407 = vpop.permute.xlu0 %4406
        %4408 = vrot.lane.b32.xlu0 %v4391, 126
        %v4409 = vpop.permute.xlu0 %4408
        %4410 = vrot.lane.b32.xlu0 %v4392, 126
        %v4411 = vpop.permute.xlu0 %4410
        %4412 = vrot.lane.b32.xlu0 %v4393, 126
        %v4413 = vpop.permute.xlu0 %4412
        %4414 = vrot.lane.b32.xlu0 %v4394, 126
        %v4415 = vpop.permute.xlu0 %4414
        %4416 = vrot.lane.b32.xlu0 %v4395, 126
        %v4417 = vpop.permute.xlu0 %4416
        %4418 = vrot.lane.b32.xlu0 %v4396, 126
        %v4419 = vpop.permute.xlu0 %4418
        %4420 = vrot.lane.b32.xlu0 %v4397, 126
        %v4421 = vpop.permute.xlu0 %4420
        %v4430 = vadd.f32 %v4382, %v4407
        %v4431 = vadd.f32 %v4383, %v4409
        %v4432 = vadd.f32 %v4384, %v4411
        %v4433 = vadd.f32 %v4385, %v4413
        %v4434 = vadd.f32 %v4386, %v4415
        %v4435 = vadd.f32 %v4387, %v4417
        %v4436 = vadd.f32 %v4388, %v4419
        %v4437 = vadd.f32 %v4389, %v4421
        %v4438 = vld [vmem:[%s8 + $0x6] sm:$0x1]
        %4440 = vrot.lane.b32.xlu0 %v4438, 127
        %v4441 = vpop.permute.xlu0 %4440
        %s4442 = vtos %v4441
        %v4443 = vstv %s4442
        %v4445 = vadd.f32 %v4430, %v4443
        %v4446 = vadd.f32 %v4431, %v4443
        %v4447 = vadd.f32 %v4432, %v4443
        %v4448 = vadd.f32 %v4433, %v4443
        %v4449 = vadd.f32 %v4434, %v4443
        %v4450 = vadd.f32 %v4435, %v4443
        %v4451 = vadd.f32 %v4436, %v4443
        %v4452 = vadd.f32 %v4437, %v4443
        %v4453 = vmul.f32 %v3150, %v2860
        %v4454 = vmul.f32 %v3314, %v2861
        %v4455 = vmul.f32 %v3478, %v2862
        %v4456 = vmul.f32 %v3642, %v2863
        %v4457 = vmul.f32 %v3806, %v2864
        %v4458 = vmul.f32 %v3970, %v2865
        %v4459 = vmul.f32 %v4134, %v2866
        %v4460 = vmul.f32 %v4298, %v2867
        %v4461 = vadd.f32 %v4453, 0.0
        %v4462 = vadd.f32 %v4454, 0.0
        %v4463 = vadd.f32 %v4455, 0.0
        %v4464 = vadd.f32 %v4456, 0.0
        %v4465 = vadd.f32 %v4457, 0.0
        %v4466 = vadd.f32 %v4458, 0.0
        %v4467 = vadd.f32 %v4459, 0.0
        %v4468 = vadd.f32 %v4460, 0.0
        %v4469 = vmul.f32 %v3155, %v2860
        %v4470 = vmul.f32 %v3319, %v2861
        %v4471 = vmul.f32 %v3483, %v2862
        %v4472 = vmul.f32 %v3647, %v2863
        %v4473 = vmul.f32 %v3811, %v2864
        %v4474 = vmul.f32 %v3975, %v2865
        %v4475 = vmul.f32 %v4139, %v2866
        %v4476 = vmul.f32 %v4303, %v2867
        %4485 = vrot.lane.b32.xlu0 %v4469, 127
        %v4486 = vpop.permute.xlu0 %4485
        %4487 = vrot.lane.b32.xlu0 %v4470, 127
        %v4488 = vpop.permute.xlu0 %4487
        %4489 = vrot.lane.b32.xlu0 %v4471, 127
        %v4490 = vpop.permute.xlu0 %4489
        %4491 = vrot.lane.b32.xlu0 %v4472, 127
        %v4492 = vpop.permute.xlu0 %4491
        %4493 = vrot.lane.b32.xlu0 %v4473, 127
        %v4494 = vpop.permute.xlu0 %4493
        %4495 = vrot.lane.b32.xlu0 %v4474, 127
        %v4496 = vpop.permute.xlu0 %4495
        %4497 = vrot.lane.b32.xlu0 %v4475, 127
        %v4498 = vpop.permute.xlu0 %4497
        %4499 = vrot.lane.b32.xlu0 %v4476, 127
        %v4500 = vpop.permute.xlu0 %4499
        %v4509 = vadd.f32 %v4461, %v4486
        %v4510 = vadd.f32 %v4462, %v4488
        %v4511 = vadd.f32 %v4463, %v4490
        %v4512 = vadd.f32 %v4464, %v4492
        %v4513 = vadd.f32 %v4465, %v4494
        %v4514 = vadd.f32 %v4466, %v4496
        %v4515 = vadd.f32 %v4467, %v4498
        %v4516 = vadd.f32 %v4468, %v4500
        %v4517 = vmul.f32 %v3160, %v2860
        %v4518 = vmul.f32 %v3324, %v2861
        %v4519 = vmul.f32 %v3488, %v2862
        %v4520 = vmul.f32 %v3652, %v2863
        %v4521 = vmul.f32 %v3816, %v2864
        %v4522 = vmul.f32 %v3980, %v2865
        %v4523 = vmul.f32 %v4144, %v2866
        %v4524 = vmul.f32 %v4308, %v2867
        %4533 = vrot.lane.b32.xlu0 %v4517, 126
        %v4534 = vpop.permute.xlu0 %4533
        %4535 = vrot.lane.b32.xlu0 %v4518, 126
        %v4536 = vpop.permute.xlu0 %4535
        %4537 = vrot.lane.b32.xlu0 %v4519, 126
        %v4538 = vpop.permute.xlu0 %4537
        %4539 = vrot.lane.b32.xlu0 %v4520, 126
        %v4540 = vpop.permute.xlu0 %4539
        %4541 = vrot.lane.b32.xlu0 %v4521, 126
        %v4542 = vpop.permute.xlu0 %4541
        %4543 = vrot.lane.b32.xlu0 %v4522, 126
        %v4544 = vpop.permute.xlu0 %4543
        %4545 = vrot.lane.b32.xlu0 %v4523, 126
        %v4546 = vpop.permute.xlu0 %4545
        %4547 = vrot.lane.b32.xlu0 %v4524, 126
        %v4548 = vpop.permute.xlu0 %4547
        %v4557 = vadd.f32 %v4509, %v4534
        %v4558 = vadd.f32 %v4510, %v4536
        %v4559 = vadd.f32 %v4511, %v4538
        %v4560 = vadd.f32 %v4512, %v4540
        %v4561 = vadd.f32 %v4513, %v4542
        %v4562 = vadd.f32 %v4514, %v4544
        %v4563 = vadd.f32 %v4515, %v4546
        %v4564 = vadd.f32 %v4516, %v4548
        %4565 = vrot.lane.b32.xlu0 %v4438, 126
        %v4566 = vpop.permute.xlu0 %4565
        %s4567 = vtos %v4566
        %v4568 = vstv %s4567
        %v4570 = vadd.f32 %v4557, %v4568
        %v4571 = vadd.f32 %v4558, %v4568
        %v4572 = vadd.f32 %v4559, %v4568
        %v4573 = vadd.f32 %v4560, %v4568
        %v4574 = vadd.f32 %v4561, %v4568
        %v4575 = vadd.f32 %v4562, %v4568
        %v4576 = vadd.f32 %v4563, %v4568
        %v4577 = vadd.f32 %v4564, %v4568
        %v4578 = vmul.f32 %v3165, %v2860
        %v4579 = vmul.f32 %v3329, %v2861
        %v4580 = vmul.f32 %v3493, %v2862
        %v4581 = vmul.f32 %v3657, %v2863
        %v4582 = vmul.f32 %v3821, %v2864
        %v4583 = vmul.f32 %v3985, %v2865
        %v4584 = vmul.f32 %v4149, %v2866
        %v4585 = vmul.f32 %v4313, %v2867
        %v4586 = vadd.f32 %v4578, 0.0
        %v4587 = vadd.f32 %v4579, 0.0
        %v4588 = vadd.f32 %v4580, 0.0
        %v4589 = vadd.f32 %v4581, 0.0
        %v4590 = vadd.f32 %v4582, 0.0
        %v4591 = vadd.f32 %v4583, 0.0
        %v4592 = vadd.f32 %v4584, 0.0
        %v4593 = vadd.f32 %v4585, 0.0
        %v4594 = vmul.f32 %v3170, %v2860
        %v4595 = vmul.f32 %v3334, %v2861
        %v4596 = vmul.f32 %v3498, %v2862
        %v4597 = vmul.f32 %v3662, %v2863
        %v4598 = vmul.f32 %v3826, %v2864
        %v4599 = vmul.f32 %v3990, %v2865
        %v4600 = vmul.f32 %v4154, %v2866
        %v4601 = vmul.f32 %v4318, %v2867
        %4610 = vrot.lane.b32.xlu0 %v4594, 127
        %v4611 = vpop.permute.xlu0 %4610
        %4612 = vrot.lane.b32.xlu0 %v4595, 127
        %v4613 = vpop.permute.xlu0 %4612
        %4614 = vrot.lane.b32.xlu0 %v4596, 127
        %v4615 = vpop.permute.xlu0 %4614
        %4616 = vrot.lane.b32.xlu0 %v4597, 127
        %v4617 = vpop.permute.xlu0 %4616
        %4618 = vrot.lane.b32.xlu0 %v4598, 127
        %v4619 = vpop.permute.xlu0 %4618
        %4620 = vrot.lane.b32.xlu0 %v4599, 127
        %v4621 = vpop.permute.xlu0 %4620
        %4622 = vrot.lane.b32.xlu0 %v4600, 127
        %v4623 = vpop.permute.xlu0 %4622
        %4624 = vrot.lane.b32.xlu0 %v4601, 127
        %v4625 = vpop.permute.xlu0 %4624
        %v4634 = vadd.f32 %v4586, %v4611
        %v4635 = vadd.f32 %v4587, %v4613
        %v4636 = vadd.f32 %v4588, %v4615
        %v4637 = vadd.f32 %v4589, %v4617
        %v4638 = vadd.f32 %v4590, %v4619
        %v4639 = vadd.f32 %v4591, %v4621
        %v4640 = vadd.f32 %v4592, %v4623
        %v4641 = vadd.f32 %v4593, %v4625
        %v4642 = vmul.f32 %v3175, %v2860
        %v4643 = vmul.f32 %v3339, %v2861
        %v4644 = vmul.f32 %v3503, %v2862
        %v4645 = vmul.f32 %v3667, %v2863
        %v4646 = vmul.f32 %v3831, %v2864
        %v4647 = vmul.f32 %v3995, %v2865
        %v4648 = vmul.f32 %v4159, %v2866
        %v4649 = vmul.f32 %v4323, %v2867
        %4658 = vrot.lane.b32.xlu0 %v4642, 126
        %v4659 = vpop.permute.xlu0 %4658
        %4660 = vrot.lane.b32.xlu0 %v4643, 126
        %v4661 = vpop.permute.xlu0 %4660
        %4662 = vrot.lane.b32.xlu0 %v4644, 126
        %v4663 = vpop.permute.xlu0 %4662
        %4664 = vrot.lane.b32.xlu0 %v4645, 126
        %v4665 = vpop.permute.xlu0 %4664
        %4666 = vrot.lane.b32.xlu0 %v4646, 126
        %v4667 = vpop.permute.xlu0 %4666
        %4668 = vrot.lane.b32.xlu0 %v4647, 126
        %v4669 = vpop.permute.xlu0 %4668
        %4670 = vrot.lane.b32.xlu0 %v4648, 126
        %v4671 = vpop.permute.xlu0 %4670
        %4672 = vrot.lane.b32.xlu0 %v4649, 126
        %v4673 = vpop.permute.xlu0 %4672
        %v4682 = vadd.f32 %v4634, %v4659
        %v4683 = vadd.f32 %v4635, %v4661
        %v4684 = vadd.f32 %v4636, %v4663
        %v4685 = vadd.f32 %v4637, %v4665
        %v4686 = vadd.f32 %v4638, %v4667
        %v4687 = vadd.f32 %v4639, %v4669
        %v4688 = vadd.f32 %v4640, %v4671
        %v4689 = vadd.f32 %v4641, %v4673
        %4690 = vrot.lane.b32.xlu0 %v4438, 125
        %v4691 = vpop.permute.xlu0 %4690
        %s4692 = vtos %v4691
        %v4693 = vstv %s4692
        %v4695 = vadd.f32 %v4682, %v4693
        %v4696 = vadd.f32 %v4683, %v4693
        %v4697 = vadd.f32 %v4684, %v4693
        %v4698 = vadd.f32 %v4685, %v4693
        %v4699 = vadd.f32 %v4686, %v4693
        %v4700 = vadd.f32 %v4687, %v4693
        %v4701 = vadd.f32 %v4688, %v4693
        %v4702 = vadd.f32 %v4689, %v4693
        %v4703 = vsel %vm1463, %v4445, -inf
        %4704 = vmax.xlane.f32.xlu0 %v4703
        %v4705 = vpop.xlane.xlu0 %4704
        %v4706 = vsel %vm1463, %v4446, -inf
        %4707 = vmax.xlane.f32.xlu0 %v4706
        %v4708 = vpop.xlane.xlu0 %4707
        %v4709 = vsel %vm1463, %v4447, -inf
        %4710 = vmax.xlane.f32.xlu0 %v4709
        %v4711 = vpop.xlane.xlu0 %4710
        %v4712 = vsel %vm1463, %v4448, -inf
        %4713 = vmax.xlane.f32.xlu0 %v4712
        %v4714 = vpop.xlane.xlu0 %4713
        %v4715 = vsel %vm1463, %v4449, -inf
        %4716 = vmax.xlane.f32.xlu0 %v4715
        %v4717 = vpop.xlane.xlu0 %4716
        %v4718 = vsel %vm1463, %v4450, -inf
        %4719 = vmax.xlane.f32.xlu0 %v4718
        %v4720 = vpop.xlane.xlu0 %4719
        %v4721 = vsel %vm1463, %v4451, -inf
        %4722 = vmax.xlane.f32.xlu0 %v4721
        %v4723 = vpop.xlane.xlu0 %4722
        %v4724 = vsel %vm1463, %v4452, -inf
        %4725 = vmax.xlane.f32.xlu0 %v4724
        %v4726 = vpop.xlane.xlu0 %4725
        %v4727 = vsub.f32 %v4445, %v4705
        %v4728 = vsub.f32 %v4446, %v4708
        %v4729 = vsub.f32 %v4447, %v4711
        %v4730 = vsub.f32 %v4448, %v4714
        %v4731 = vsub.f32 %v4449, %v4717
        %v4732 = vsub.f32 %v4450, %v4720
        %v4733 = vsub.f32 %v4451, %v4723
        %v4734 = vsub.f32 %v4452, %v4726
        %v4735 = vmul.f32 %v4727, 1.442695
        %v4736 = vpow.pop %v4735
        %v4737 = vmul.f32 %v4728, 1.442695
        %v4738 = vpow.pop %v4737
        %v4739 = vmul.f32 %v4729, 1.442695
        %v4740 = vpow.pop %v4739
        %v4741 = vmul.f32 %v4730, 1.442695
        %v4742 = vpow.pop %v4741
        %v4743 = vmul.f32 %v4731, 1.442695
        %v4744 = vpow.pop %v4743
        %v4745 = vmul.f32 %v4732, 1.442695
        %v4746 = vpow.pop %v4745
        %v4747 = vmul.f32 %v4733, 1.442695
        %v4748 = vpow.pop %v4747
        %v4749 = vmul.f32 %v4734, 1.442695
        %v4750 = vpow.pop %v4749
        %v4751 = vsel %vm1463, %v4736, 0.0
        %4752 = vadd.xlane.f32.xlu0 %v4751
        %v4753 = vpop.xlane.xlu0 %4752
        %v4754 = vsel %vm1463, %v4738, 0.0
        %4755 = vadd.xlane.f32.xlu0 %v4754
        %v4756 = vpop.xlane.xlu0 %4755
        %v4757 = vsel %vm1463, %v4740, 0.0
        %4758 = vadd.xlane.f32.xlu0 %v4757
        %v4759 = vpop.xlane.xlu0 %4758
        %v4760 = vsel %vm1463, %v4742, 0.0
        %4761 = vadd.xlane.f32.xlu0 %v4760
        %v4762 = vpop.xlane.xlu0 %4761
        %v4763 = vsel %vm1463, %v4744, 0.0
        %4764 = vadd.xlane.f32.xlu0 %v4763
        %v4765 = vpop.xlane.xlu0 %4764
        %v4766 = vsel %vm1463, %v4746, 0.0
        %4767 = vadd.xlane.f32.xlu0 %v4766
        %v4768 = vpop.xlane.xlu0 %4767
        %v4769 = vsel %vm1463, %v4748, 0.0
        %4770 = vadd.xlane.f32.xlu0 %v4769
        %v4771 = vpop.xlane.xlu0 %4770
        %v4772 = vsel %vm1463, %v4750, 0.0
        %4773 = vadd.xlane.f32.xlu0 %v4772
        %v4774 = vpop.xlane.xlu0 %4773
        %v4775 = vrcp.pop %v4753
        %v4776 = vmul.f32 %v4736, %v4775
        %v4777 = vrcp.pop %v4756
        %v4778 = vmul.f32 %v4738, %v4777
        %v4779 = vrcp.pop %v4759
        %v4780 = vmul.f32 %v4740, %v4779
        %v4781 = vrcp.pop %v4762
        %v4782 = vmul.f32 %v4742, %v4781
        %v4783 = vrcp.pop %v4765
        %v4784 = vmul.f32 %v4744, %v4783
        %v4785 = vrcp.pop %v4768
        %v4786 = vmul.f32 %v4746, %v4785
        %v4787 = vrcp.pop %v4771
        %v4788 = vmul.f32 %v4748, %v4787
        %v4789 = vrcp.pop %v4774
        %v4790 = vmul.f32 %v4750, %v4789
        %v4791 = vsel %vm1463, %v4570, -inf
        %4792 = vmax.xlane.f32.xlu0 %v4791
        %v4793 = vpop.xlane.xlu0 %4792
        %v4794 = vsel %vm1463, %v4571, -inf
        %4795 = vmax.xlane.f32.xlu0 %v4794
        %v4796 = vpop.xlane.xlu0 %4795
        %v4797 = vsel %vm1463, %v4572, -inf
        %4798 = vmax.xlane.f32.xlu0 %v4797
        %v4799 = vpop.xlane.xlu0 %4798
        %v4800 = vsel %vm1463, %v4573, -inf
        %4801 = vmax.xlane.f32.xlu0 %v4800
        %v4802 = vpop.xlane.xlu0 %4801
        %v4803 = vsel %vm1463, %v4574, -inf
        %4804 = vmax.xlane.f32.xlu0 %v4803
        %v4805 = vpop.xlane.xlu0 %4804
        %v4806 = vsel %vm1463, %v4575, -inf
        %4807 = vmax.xlane.f32.xlu0 %v4806
        %v4808 = vpop.xlane.xlu0 %4807
        %v4809 = vsel %vm1463, %v4576, -inf
        %4810 = vmax.xlane.f32.xlu0 %v4809
        %v4811 = vpop.xlane.xlu0 %4810
        %v4812 = vsel %vm1463, %v4577, -inf
        %4813 = vmax.xlane.f32.xlu0 %v4812
        %v4814 = vpop.xlane.xlu0 %4813
        %v4815 = vsub.f32 %v4570, %v4793
        %v4816 = vsub.f32 %v4571, %v4796
        %v4817 = vsub.f32 %v4572, %v4799
        %v4818 = vsub.f32 %v4573, %v4802
        %v4819 = vsub.f32 %v4574, %v4805
        %v4820 = vsub.f32 %v4575, %v4808
        %v4821 = vsub.f32 %v4576, %v4811
        %v4822 = vsub.f32 %v4577, %v4814
        %v4823 = vmul.f32 %v4815, 1.442695
        %v4824 = vpow.pop %v4823
        %v4825 = vmul.f32 %v4816, 1.442695
        %v4826 = vpow.pop %v4825
        %v4827 = vmul.f32 %v4817, 1.442695
        %v4828 = vpow.pop %v4827
        %v4829 = vmul.f32 %v4818, 1.442695
        %v4830 = vpow.pop %v4829
        %v4831 = vmul.f32 %v4819, 1.442695
        %v4832 = vpow.pop %v4831
        %v4833 = vmul.f32 %v4820, 1.442695
        %v4834 = vpow.pop %v4833
        %v4835 = vmul.f32 %v4821, 1.442695
        %v4836 = vpow.pop %v4835
        %v4837 = vmul.f32 %v4822, 1.442695
        %v4838 = vpow.pop %v4837
        %v4839 = vsel %vm1463, %v4824, 0.0
        %4840 = vadd.xlane.f32.xlu0 %v4839
        %v4841 = vpop.xlane.xlu0 %4840
        %v4842 = vsel %vm1463, %v4826, 0.0
        %4843 = vadd.xlane.f32.xlu0 %v4842
        %v4844 = vpop.xlane.xlu0 %4843
        %v4845 = vsel %vm1463, %v4828, 0.0
        %4846 = vadd.xlane.f32.xlu0 %v4845
        %v4847 = vpop.xlane.xlu0 %4846
        %v4848 = vsel %vm1463, %v4830, 0.0
        %4849 = vadd.xlane.f32.xlu0 %v4848
        %v4850 = vpop.xlane.xlu0 %4849
        %v4851 = vsel %vm1463, %v4832, 0.0
        %4852 = vadd.xlane.f32.xlu0 %v4851
        %v4853 = vpop.xlane.xlu0 %4852
        %v4854 = vsel %vm1463, %v4834, 0.0
        %4855 = vadd.xlane.f32.xlu0 %v4854
        %v4856 = vpop.xlane.xlu0 %4855
        %v4857 = vsel %vm1463, %v4836, 0.0
        %4858 = vadd.xlane.f32.xlu0 %v4857
        %v4859 = vpop.xlane.xlu0 %4858
        %v4860 = vsel %vm1463, %v4838, 0.0
        %4861 = vadd.xlane.f32.xlu0 %v4860
        %v4862 = vpop.xlane.xlu0 %4861
        %v4863 = vlog2.pop %v4841
        %v4864 = vmul.f32 %v4863, 0.6931472
        %v4865 = vlog2.pop %v4844
        %v4866 = vmul.f32 %v4865, 0.6931472
        %v4867 = vlog2.pop %v4847
        %v4868 = vmul.f32 %v4867, 0.6931472
        %v4869 = vlog2.pop %v4850
        %v4870 = vmul.f32 %v4869, 0.6931472
        %v4871 = vlog2.pop %v4853
        %v4872 = vmul.f32 %v4871, 0.6931472
        %v4873 = vlog2.pop %v4856
        %v4874 = vmul.f32 %v4873, 0.6931472
        %v4875 = vlog2.pop %v4859
        %v4876 = vmul.f32 %v4875, 0.6931472
        %v4877 = vlog2.pop %v4862
        %v4878 = vmul.f32 %v4877, 0.6931472
        %v4879 = vsub.f32 %v4815, %v4864
        %v4880 = vsub.f32 %v4816, %v4866
        %v4881 = vsub.f32 %v4817, %v4868
        %v4882 = vsub.f32 %v4818, %v4870
        %v4883 = vsub.f32 %v4819, %v4872
        %v4884 = vsub.f32 %v4820, %v4874
        %v4885 = vsub.f32 %v4821, %v4876
        %v4886 = vsub.f32 %v4822, %v4878
        %v4887 = vxor.u32 %v4695, 2147483648
        %v4888 = vxor.u32 %v4696, 2147483648
        %v4889 = vxor.u32 %v4697, 2147483648
        %v4890 = vxor.u32 %v4698, 2147483648
        %v4891 = vxor.u32 %v4699, 2147483648
        %v4892 = vxor.u32 %v4700, 2147483648
        %v4893 = vxor.u32 %v4701, 2147483648
        %v4894 = vxor.u32 %v4702, 2147483648
        %v4895 = vmul.f32 %v4887, 1.442695
        %v4896 = vpow.pop %v4895
        %v4897 = vmul.f32 %v4888, 1.442695
        %v4898 = vpow.pop %v4897
        %v4899 = vmul.f32 %v4889, 1.442695
        %v4900 = vpow.pop %v4899
        %v4901 = vmul.f32 %v4890, 1.442695
        %v4902 = vpow.pop %v4901
        %v4903 = vmul.f32 %v4891, 1.442695
        %v4904 = vpow.pop %v4903
        %v4905 = vmul.f32 %v4892, 1.442695
        %v4906 = vpow.pop %v4905
        %v4907 = vmul.f32 %v4893, 1.442695
        %v4908 = vpow.pop %v4907
        %v4909 = vmul.f32 %v4894, 1.442695
        %v4910 = vpow.pop %v4909
        %v4911 = vadd.f32 %v4896, 1.0
        %v4912 = vadd.f32 %v4898, 1.0
        %v4913 = vadd.f32 %v4900, 1.0
        %v4914 = vadd.f32 %v4902, 1.0
        %v4915 = vadd.f32 %v4904, 1.0
        %v4916 = vadd.f32 %v4906, 1.0
        %v4917 = vadd.f32 %v4908, 1.0
        %v4918 = vadd.f32 %v4910, 1.0
        %v4919 = vrcp.pop %v4911
        %v4920 = vmul.f32 1.0, %v4919
        %v4921 = vrcp.pop %v4912
        %v4922 = vmul.f32 1.0, %v4921
        %v4923 = vrcp.pop %v4913
        %v4924 = vmul.f32 1.0, %v4923
        %v4925 = vrcp.pop %v4914
        %v4926 = vmul.f32 1.0, %v4925
        %v4927 = vrcp.pop %v4915
        %v4928 = vmul.f32 1.0, %v4927
        %v4929 = vrcp.pop %v4916
        %v4930 = vmul.f32 1.0, %v4929
        %v4931 = vrcp.pop %v4917
        %v4932 = vmul.f32 1.0, %v4931
        %v4933 = vrcp.pop %v4918
        %v4934 = vmul.f32 1.0, %v4933
        %v4935 = vsel %vm1463, %v4920, -inf
        %4936 = vmax.xlane.f32.xlu0 %v4935
        %v4937 = vpop.xlane.xlu0 %4936
        %v4938 = vsel %vm1463, %v4922, -inf
        %4939 = vmax.xlane.f32.xlu0 %v4938
        %v4940 = vpop.xlane.xlu0 %4939
        %v4941 = vsel %vm1463, %v4924, -inf
        %4942 = vmax.xlane.f32.xlu0 %v4941
        %v4943 = vpop.xlane.xlu0 %4942
        %v4944 = vsel %vm1463, %v4926, -inf
        %4945 = vmax.xlane.f32.xlu0 %v4944
        %v4946 = vpop.xlane.xlu0 %4945
        %v4947 = vsel %vm1463, %v4928, -inf
        %4948 = vmax.xlane.f32.xlu0 %v4947
        %v4949 = vpop.xlane.xlu0 %4948
        %v4950 = vsel %vm1463, %v4930, -inf
        %4951 = vmax.xlane.f32.xlu0 %v4950
        %v4952 = vpop.xlane.xlu0 %4951
        %v4953 = vsel %vm1463, %v4932, -inf
        %4954 = vmax.xlane.f32.xlu0 %v4953
        %v4955 = vpop.xlane.xlu0 %4954
        %v4956 = vsel %vm1463, %v4934, -inf
        %4957 = vmax.xlane.f32.xlu0 %v4956
        %v4958 = vpop.xlane.xlu0 %4957
        %v4959 = vpack.c.bf16 %v4776, %v4776
        %v4960 = vpack.c.bf16 %v4778, %v4778
        %v4961 = vpack.c.bf16 %v4780, %v4780
        %v4962 = vpack.c.bf16 %v4782, %v4782
        %v4963 = vpack.c.bf16 %v4784, %v4784
        %v4964 = vpack.c.bf16 %v4786, %v4786
        %v4965 = vpack.c.bf16 %v4788, %v4788
        %v4966 = vpack.c.bf16 %v4790, %v4790
        %v4969 = vsel %vm1463, %v4959, 0
        %4971 = vmatprep.subr.bf16.mxu0 0
        %4972 = vmatpush1.bf16.msra.mxu0 %v503
        %4973 = vmatprep.subr.bf16.mxu0 0
        %4974 = vmatpush1.bf16.msra.mxu0 0
        %4975 = vmatprep.subr.bf16.mxu0 0
        %4976 = vmatpush1.bf16.msra.mxu0 0
        %4977 = vmatprep.subr.bf16.mxu0 0
        %4978 = vmatpush1.bf16.msra.mxu0 0
        %4979 = vmatprep.subr.bf16.mxu0 0
        %4980 = vmatpush1.bf16.msra.mxu0 0
        %4981 = vmatprep.subr.bf16.mxu0 0
        %4982 = vmatpush1.bf16.msra.mxu0 0
        %4983 = vmatprep.subr.bf16.mxu0 0
        %4984 = vmatpush1.bf16.msra.mxu0 0
        %4985 = vmatprep.subr.bf16.mxu0 0
        %4986 = vmatpush1.bf16.msra.mxu0 0
        %4987 = vmatprep.subr.bf16.mxu0 0
        %4988 = vmatpush1.bf16.msra.mxu0 0
        %4989 = vmatprep.subr.bf16.mxu0 0
        %4990 = vmatpush1.bf16.msra.mxu0 0
        %4991 = vmatprep.subr.bf16.mxu0 0
        %4992 = vmatpush1.bf16.msra.mxu0 0
        %4993 = vmatprep.subr.bf16.mxu0 0
        %4994 = vmatpush1.bf16.msra.mxu0 0
        %4995 = vmatprep.subr.bf16.mxu0 0
        %4996 = vmatpush1.bf16.msra.mxu0 0
        %4997 = vmatprep.subr.bf16.mxu0 0
        %4998 = vmatpush1.bf16.msra.mxu0 0
        %4999 = vmatprep.subr.bf16.mxu0 0
        %5000 = vmatpush1.bf16.msra.mxu0 0
        %5001 = vmatprep.subr.bf16.mxu0 0
        %5002 = vmatpush1.bf16.msra.mxu0 0
        %5003 = vmatprep.mubr.bf16.mxu0 0
        %5004 = vmatmul.mubr.bf16.gmra.mrb[0].mxu0 %v4969
        %v5005 = vpop.f32.mrb[0].mxu0
        %v5006 = vadd.f32 0.0, %v5005
        %v5007 = vpop.f32.mrb[0].mxu0
        %v5008 = vpop.f32.mrb[0].mxu0
        %v5009 = vpop.f32.mrb[0].mxu0
        %5010 = vdwg.mxu0
        %v5013 = vsel %vm1463, %v4960, 0
        %5015 = vmatprep.subr.bf16.mxu0 0
        %5016 = vmatpush1.bf16.msra.mxu0 %v505
        %5017 = vmatprep.subr.bf16.mxu0 0
        %5018 = vmatpush1.bf16.msra.mxu0 0
        %5019 = vmatprep.subr.bf16.mxu0 0
        %5020 = vmatpush1.bf16.msra.mxu0 0
        %5021 = vmatprep.subr.bf16.mxu0 0
        %5022 = vmatpush1.bf16.msra.mxu0 0
        %5023 = vmatprep.subr.bf16.mxu0 0
        %5024 = vmatpush1.bf16.msra.mxu0 0
        %5025 = vmatprep.subr.bf16.mxu0 0
        %5026 = vmatpush1.bf16.msra.mxu0 0
        %5027 = vmatprep.subr.bf16.mxu0 0
        %5028 = vmatpush1.bf16.msra.mxu0 0
        %5029 = vmatprep.subr.bf16.mxu0 0
        %5030 = vmatpush1.bf16.msra.mxu0 0
        %5031 = vmatprep.subr.bf16.mxu0 0
        %5032 = vmatpush1.bf16.msra.mxu0 0
        %5033 = vmatprep.subr.bf16.mxu0 0
        %5034 = vmatpush1.bf16.msra.mxu0 0
        %5035 = vmatprep.subr.bf16.mxu0 0
        %5036 = vmatpush1.bf16.msra.mxu0 0
        %5037 = vmatprep.subr.bf16.mxu0 0
        %5038 = vmatpush1.bf16.msra.mxu0 0
        %5039 = vmatprep.subr.bf16.mxu0 0
        %5040 = vmatpush1.bf16.msra.mxu0 0
        %5041 = vmatprep.subr.bf16.mxu0 0
        %5042 = vmatpush1.bf16.msra.mxu0 0
        %5043 = vmatprep.subr.bf16.mxu0 0
        %5044 = vmatpush1.bf16.msra.mxu0 0
        %5045 = vmatprep.subr.bf16.mxu0 0
        %5046 = vmatpush1.bf16.msra.mxu0 0
        %5047 = vmatprep.mubr.bf16.mxu0 0
        %5048 = vmatmul.mubr.bf16.gmra.mrb[0].mxu0 %v5013
        %v5049 = vpop.f32.mrb[0].mxu0
        %v5050 = vadd.f32 0.0, %v5049
        %v5051 = vpop.f32.mrb[0].mxu0
        %v5052 = vpop.f32.mrb[0].mxu0
        %v5053 = vpop.f32.mrb[0].mxu0
        %5054 = vdwg.mxu0
        %v5057 = vsel %vm1463, %v4961, 0
        %5059 = vmatprep.subr.bf16.mxu0 0
        %5060 = vmatpush1.bf16.msra.mxu0 %v507
        %5061 = vmatprep.subr.bf16.mxu0 0
        %5062 = vmatpush1.bf16.msra.mxu0 0
        %5063 = vmatprep.subr.bf16.mxu0 0
        %5064 = vmatpush1.bf16.msra.mxu0 0
        %5065 = vmatprep.subr.bf16.mxu0 0
        %5066 = vmatpush1.bf16.msra.mxu0 0
        %5067 = vmatprep.subr.bf16.mxu0 0
        %5068 = vmatpush1.bf16.msra.mxu0 0
        %5069 = vmatprep.subr.bf16.mxu0 0
        %5070 = vmatpush1.bf16.msra.mxu0 0
        %5071 = vmatprep.subr.bf16.mxu0 0
        %5072 = vmatpush1.bf16.msra.mxu0 0
        %5073 = vmatprep.subr.bf16.mxu0 0
        %5074 = vmatpush1.bf16.msra.mxu0 0
        %5075 = vmatprep.subr.bf16.mxu0 0
        %5076 = vmatpush1.bf16.msra.mxu0 0
        %5077 = vmatprep.subr.bf16.mxu0 0
        %5078 = vmatpush1.bf16.msra.mxu0 0
        %5079 = vmatprep.subr.bf16.mxu0 0
        %5080 = vmatpush1.bf16.msra.mxu0 0
        %5081 = vmatprep.subr.bf16.mxu0 0
        %5082 = vmatpush1.bf16.msra.mxu0 0
        %5083 = vmatprep.subr.bf16.mxu0 0
        %5084 = vmatpush1.bf16.msra.mxu0 0
        %5085 = vmatprep.subr.bf16.mxu0 0
        %5086 = vmatpush1.bf16.msra.mxu0 0
        %5087 = vmatprep.subr.bf16.mxu0 0
        %5088 = vmatpush1.bf16.msra.mxu0 0
        %5089 = vmatprep.subr.bf16.mxu0 0
        %5090 = vmatpush1.bf16.msra.mxu0 0
        %5091 = vmatprep.mubr.bf16.mxu0 0
        %5092 = vmatmul.mubr.bf16.gmra.mrb[0].mxu0 %v5057
        %v5093 = vpop.f32.mrb[0].mxu0
        %v5094 = vadd.f32 0.0, %v5093
        %v5095 = vpop.f32.mrb[0].mxu0
        %v5096 = vpop.f32.mrb[0].mxu0
        %v5097 = vpop.f32.mrb[0].mxu0
        %5098 = vdwg.mxu0
        %v5101 = vsel %vm1463, %v4962, 0
        %5103 = vmatprep.subr.bf16.mxu0 0
        %5104 = vmatpush1.bf16.msra.mxu0 %v509
        %5105 = vmatprep.subr.bf16.mxu0 0
        %5106 = vmatpush1.bf16.msra.mxu0 0
        %5107 = vmatprep.subr.bf16.mxu0 0
        %5108 = vmatpush1.bf16.msra.mxu0 0
        %5109 = vmatprep.subr.bf16.mxu0 0
        %5110 = vmatpush1.bf16.msra.mxu0 0
        %5111 = vmatprep.subr.bf16.mxu0 0
        %5112 = vmatpush1.bf16.msra.mxu0 0
        %5113 = vmatprep.subr.bf16.mxu0 0
        %5114 = vmatpush1.bf16.msra.mxu0 0
        %5115 = vmatprep.subr.bf16.mxu0 0
        %5116 = vmatpush1.bf16.msra.mxu0 0
        %5117 = vmatprep.subr.bf16.mxu0 0
        %5118 = vmatpush1.bf16.msra.mxu0 0
        %5119 = vmatprep.subr.bf16.mxu0 0
        %5120 = vmatpush1.bf16.msra.mxu0 0
        %5121 = vmatprep.subr.bf16.mxu0 0
        %5122 = vmatpush1.bf16.msra.mxu0 0
        %5123 = vmatprep.subr.bf16.mxu0 0
        %5124 = vmatpush1.bf16.msra.mxu0 0
        %5125 = vmatprep.subr.bf16.mxu0 0
        %5126 = vmatpush1.bf16.msra.mxu0 0
        %5127 = vmatprep.subr.bf16.mxu0 0
        %5128 = vmatpush1.bf16.msra.mxu0 0
        %5129 = vmatprep.subr.bf16.mxu0 0
        %5130 = vmatpush1.bf16.msra.mxu0 0
        %5131 = vmatprep.subr.bf16.mxu0 0
        %5132 = vmatpush1.bf16.msra.mxu0 0
        %5133 = vmatprep.subr.bf16.mxu0 0
        %5134 = vmatpush1.bf16.msra.mxu0 0
        %5135 = vmatprep.mubr.bf16.mxu0 0
        %5136 = vmatmul.mubr.bf16.gmra.mrb[0].mxu0 %v5101
        %v5137 = vpop.f32.mrb[0].mxu0
        %v5138 = vadd.f32 0.0, %v5137
        %v5139 = vpop.f32.mrb[0].mxu0
        %v5140 = vpop.f32.mrb[0].mxu0
        %v5141 = vpop.f32.mrb[0].mxu0
        %5142 = vdwg.mxu0
        %v5145 = vsel %vm1463, %v4963, 0
        %5147 = vmatprep.subr.bf16.mxu0 0
        %5148 = vmatpush1.bf16.msra.mxu0 %v511
        %5149 = vmatprep.subr.bf16.mxu0 0
        %5150 = vmatpush1.bf16.msra.mxu0 0
        %5151 = vmatprep.subr.bf16.mxu0 0
        %5152 = vmatpush1.bf16.msra.mxu0 0
        %5153 = vmatprep.subr.bf16.mxu0 0
        %5154 = vmatpush1.bf16.msra.mxu0 0
        %5155 = vmatprep.subr.bf16.mxu0 0
        %5156 = vmatpush1.bf16.msra.mxu0 0
        %5157 = vmatprep.subr.bf16.mxu0 0
        %5158 = vmatpush1.bf16.msra.mxu0 0
        %5159 = vmatprep.subr.bf16.mxu0 0
        %5160 = vmatpush1.bf16.msra.mxu0 0
        %5161 = vmatprep.subr.bf16.mxu0 0
        %5162 = vmatpush1.bf16.msra.mxu0 0
        %5163 = vmatprep.subr.bf16.mxu0 0
        %5164 = vmatpush1.bf16.msra.mxu0 0
        %5165 = vmatprep.subr.bf16.mxu0 0
        %5166 = vmatpush1.bf16.msra.mxu0 0
        %5167 = vmatprep.subr.bf16.mxu0 0
        %5168 = vmatpush1.bf16.msra.mxu0 0
        %5169 = vmatprep.subr.bf16.mxu0 0
        %5170 = vmatpush1.bf16.msra.mxu0 0
        %5171 = vmatprep.subr.bf16.mxu0 0
        %5172 = vmatpush1.bf16.msra.mxu0 0
        %5173 = vmatprep.subr.bf16.mxu0 0
        %5174 = vmatpush1.bf16.msra.mxu0 0
        %5175 = vmatprep.subr.bf16.mxu0 0
        %5176 = vmatpush1.bf16.msra.mxu0 0
        %5177 = vmatprep.subr.bf16.mxu0 0
        %5178 = vmatpush1.bf16.msra.mxu0 0
        %5179 = vmatprep.mubr.bf16.mxu0 0
        %5180 = vmatmul.mubr.bf16.gmra.mrb[0].mxu0 %v5145
        %v5181 = vpop.f32.mrb[0].mxu0
        %v5182 = vadd.f32 0.0, %v5181
        %v5183 = vpop.f32.mrb[0].mxu0
        %v5184 = vpop.f32.mrb[0].mxu0
        %v5185 = vpop.f32.mrb[0].mxu0
        %5186 = vdwg.mxu0
        %v5189 = vsel %vm1463, %v4964, 0
        %5191 = vmatprep.subr.bf16.mxu0 0
        %5192 = vmatpush1.bf16.msra.mxu0 %v513
        %5193 = vmatprep.subr.bf16.mxu0 0
        %5194 = vmatpush1.bf16.msra.mxu0 0
        %5195 = vmatprep.subr.bf16.mxu0 0
        %5196 = vmatpush1.bf16.msra.mxu0 0
        %5197 = vmatprep.subr.bf16.mxu0 0
        %5198 = vmatpush1.bf16.msra.mxu0 0
        %5199 = vmatprep.subr.bf16.mxu0 0
        %5200 = vmatpush1.bf16.msra.mxu0 0
        %5201 = vmatprep.subr.bf16.mxu0 0
        %5202 = vmatpush1.bf16.msra.mxu0 0
        %5203 = vmatprep.subr.bf16.mxu0 0
        %5204 = vmatpush1.bf16.msra.mxu0 0
        %5205 = vmatprep.subr.bf16.mxu0 0
        %5206 = vmatpush1.bf16.msra.mxu0 0
        %5207 = vmatprep.subr.bf16.mxu0 0
        %5208 = vmatpush1.bf16.msra.mxu0 0
        %5209 = vmatprep.subr.bf16.mxu0 0
        %5210 = vmatpush1.bf16.msra.mxu0 0
        %5211 = vmatprep.subr.bf16.mxu0 0
        %5212 = vmatpush1.bf16.msra.mxu0 0
        %5213 = vmatprep.subr.bf16.mxu0 0
        %5214 = vmatpush1.bf16.msra.mxu0 0
        %5215 = vmatprep.subr.bf16.mxu0 0
        %5216 = vmatpush1.bf16.msra.mxu0 0
        %5217 = vmatprep.subr.bf16.mxu0 0
        %5218 = vmatpush1.bf16.msra.mxu0 0
        %5219 = vmatprep.subr.bf16.mxu0 0
        %5220 = vmatpush1.bf16.msra.mxu0 0
        %5221 = vmatprep.subr.bf16.mxu0 0
        %5222 = vmatpush1.bf16.msra.mxu0 0
        %5223 = vmatprep.mubr.bf16.mxu0 0
        %5224 = vmatmul.mubr.bf16.gmra.mrb[0].mxu0 %v5189
        %v5225 = vpop.f32.mrb[0].mxu0
        %v5226 = vadd.f32 0.0, %v5225
        %v5227 = vpop.f32.mrb[0].mxu0
        %v5228 = vpop.f32.mrb[0].mxu0
        %v5229 = vpop.f32.mrb[0].mxu0
        %5230 = vdwg.mxu0
        %v5233 = vsel %vm1463, %v4965, 0
        %5235 = vmatprep.subr.bf16.mxu0 0
        %5236 = vmatpush1.bf16.msra.mxu0 %v515
        %5237 = vmatprep.subr.bf16.mxu0 0
        %5238 = vmatpush1.bf16.msra.mxu0 0
        %5239 = vmatprep.subr.bf16.mxu0 0
        %5240 = vmatpush1.bf16.msra.mxu0 0
        %5241 = vmatprep.subr.bf16.mxu0 0
        %5242 = vmatpush1.bf16.msra.mxu0 0
        %5243 = vmatprep.subr.bf16.mxu0 0
        %5244 = vmatpush1.bf16.msra.mxu0 0
        %5245 = vmatprep.subr.bf16.mxu0 0
        %5246 = vmatpush1.bf16.msra.mxu0 0
        %5247 = vmatprep.subr.bf16.mxu0 0
        %5248 = vmatpush1.bf16.msra.mxu0 0
        %5249 = vmatprep.subr.bf16.mxu0 0
        %5250 = vmatpush1.bf16.msra.mxu0 0
        %5251 = vmatprep.subr.bf16.mxu0 0
        %5252 = vmatpush1.bf16.msra.mxu0 0
        %5253 = vmatprep.subr.bf16.mxu0 0
        %5254 = vmatpush1.bf16.msra.mxu0 0
        %5255 = vmatprep.subr.bf16.mxu0 0
        %5256 = vmatpush1.bf16.msra.mxu0 0
        %5257 = vmatprep.subr.bf16.mxu0 0
        %5258 = vmatpush1.bf16.msra.mxu0 0
        %5259 = vmatprep.subr.bf16.mxu0 0
        %5260 = vmatpush1.bf16.msra.mxu0 0
        %5261 = vmatprep.subr.bf16.mxu0 0
        %5262 = vmatpush1.bf16.msra.mxu0 0
        %5263 = vmatprep.subr.bf16.mxu0 0
        %5264 = vmatpush1.bf16.msra.mxu0 0
        %5265 = vmatprep.subr.bf16.mxu0 0
        %5266 = vmatpush1.bf16.msra.mxu0 0
        %5267 = vmatprep.mubr.bf16.mxu0 0
        %5268 = vmatmul.mubr.bf16.gmra.mrb[0].mxu0 %v5233
        %v5269 = vpop.f32.mrb[0].mxu0
        %v5270 = vadd.f32 0.0, %v5269
        %v5271 = vpop.f32.mrb[0].mxu0
        %v5272 = vpop.f32.mrb[0].mxu0
        %v5273 = vpop.f32.mrb[0].mxu0
        %5274 = vdwg.mxu0
        %v5277 = vsel %vm1463, %v4966, 0
        %5279 = vmatprep.subr.bf16.mxu0 0
        %5280 = vmatpush1.bf16.msra.mxu0 %v517
        %5281 = vmatprep.subr.bf16.mxu0 0
        %5282 = vmatpush1.bf16.msra.mxu0 0
        %5283 = vmatprep.subr.bf16.mxu0 0
        %5284 = vmatpush1.bf16.msra.mxu0 0
        %5285 = vmatprep.subr.bf16.mxu0 0
        %5286 = vmatpush1.bf16.msra.mxu0 0
        %5287 = vmatprep.subr.bf16.mxu0 0
        %5288 = vmatpush1.bf16.msra.mxu0 0
        %5289 = vmatprep.subr.bf16.mxu0 0
        %5290 = vmatpush1.bf16.msra.mxu0 0
        %5291 = vmatprep.subr.bf16.mxu0 0
        %5292 = vmatpush1.bf16.msra.mxu0 0
        %5293 = vmatprep.subr.bf16.mxu0 0
        %5294 = vmatpush1.bf16.msra.mxu0 0
        %5295 = vmatprep.subr.bf16.mxu0 0
        %5296 = vmatpush1.bf16.msra.mxu0 0
        %5297 = vmatprep.subr.bf16.mxu0 0
        %5298 = vmatpush1.bf16.msra.mxu0 0
        %5299 = vmatprep.subr.bf16.mxu0 0
        %5300 = vmatpush1.bf16.msra.mxu0 0
        %5301 = vmatprep.subr.bf16.mxu0 0
        %5302 = vmatpush1.bf16.msra.mxu0 0
        %5303 = vmatprep.subr.bf16.mxu0 0
        %5304 = vmatpush1.bf16.msra.mxu0 0
        %5305 = vmatprep.subr.bf16.mxu0 0
        %5306 = vmatpush1.bf16.msra.mxu0 0
        %5307 = vmatprep.subr.bf16.mxu0 0
        %5308 = vmatpush1.bf16.msra.mxu0 0
        %5309 = vmatprep.subr.bf16.mxu0 0
        %5310 = vmatpush1.bf16.msra.mxu0 0
        %5311 = vmatprep.mubr.bf16.mxu0 0
        %5312 = vmatmul.mubr.bf16.gmra.mrb[0].mxu0 %v5277
        %v5313 = vpop.f32.mrb[0].mxu0
        %v5314 = vadd.f32 0.0, %v5313
        %v5315 = vpop.f32.mrb[0].mxu0
        %v5316 = vpop.f32.mrb[0].mxu0
        %v5317 = vpop.f32.mrb[0].mxu0
        %5318 = vdwg.mxu0
        %v5319 = vpack.c.bf16 %v5050, %v5006
        %v5320 = vpack.c.bf16 %v5138, %v5094
        %v5321 = vpack.c.bf16 %v5226, %v5182
        %v5322 = vpack.c.bf16 %v5314, %v5270
        %v5323 = vld [vmem:[%s6] sm:$0xff]
        %v5324 = vld [vmem:[%s6 + $0x8] sm:$0xff]
        %v5325 = vld [vmem:[%s6 + $0x10] sm:$0xff]
        %v5326 = vld [vmem:[%s6 + $0x18] sm:$0xff]
        %v5327 = vld [vmem:[%s7] sm:$0x3]
        %v5329 = vlaneseq
        %v5330 = vshrl.u32 %v5329, 7
        %v5331 = vsub.s32 0, %v5330
        %v5332 = vrot.slane %v5327, %v5331
        %v5333 = vlaneseq
        %v5334 = vshrl.u32 %v5333, 7
        %v5335 = vsub.s32 1, %v5334
        %v5336 = vrot.slane %v5327, %v5335
        %v5343 = vunpack.c.l.b16 %v5323
        %v5344 = vunpack.c.h.b16 %v5323
        %v5345 = vunpack.c.l.b16 %v5324
        %v5346 = vunpack.c.h.b16 %v5324
        %v5347 = vunpack.c.l.b16 %v5325
        %v5348 = vunpack.c.h.b16 %v5325
        %v5349 = vunpack.c.l.b16 %v5326
        %v5350 = vunpack.c.h.b16 %v5326
        %v5351 = vpack.c.b16 %v5345, %v5343
        %v5352 = vpack.c.b16 %v5346, %v5344
        %v5353 = vpack.c.b16 %v5349, %v5347
        %v5354 = vpack.c.b16 %v5350, %v5348
        %v5360 = vsel %vm809, %v5319, 0
        %v5363 = vsel %vm809, %v5320, 0
        %v5366 = vsel %vm809, %v5321, 0
        %v5369 = vsel %vm809, %v5322, 0
        %5371 = vmatprep.subr.bf16.mxu0 %v5352
        %5372 = vmatpush1.bf16.msra.mxu0 %v5351
        %5373 = vmatprep.subr.bf16.mxu0 %v5354
        %5374 = vmatpush1.bf16.msra.mxu0 %v5353
        %5375 = vmatprep.subr.bf16.mxu0 0
        %5376 = vmatpush1.bf16.msra.mxu0 0
        %5377 = vmatprep.subr.bf16.mxu0 0
        %5378 = vmatpush1.bf16.msra.mxu0 0
        %5379 = vmatprep.subr.bf16.mxu0 0
        %5380 = vmatpush1.bf16.msra.mxu0 0
        %5381 = vmatprep.subr.bf16.mxu0 0
        %5382 = vmatpush1.bf16.msra.mxu0 0
        %5383 = vmatprep.subr.bf16.mxu0 0
        %5384 = vmatpush1.bf16.msra.mxu0 0
        %5385 = vmatprep.subr.bf16.mxu0 0
        %5386 = vmatpush1.bf16.msra.mxu0 0
        %5387 = vmatprep.subr.bf16.mxu0 0
        %5388 = vmatpush1.bf16.msra.mxu0 0
        %5389 = vmatprep.subr.bf16.mxu0 0
        %5390 = vmatpush1.bf16.msra.mxu0 0
        %5391 = vmatprep.subr.bf16.mxu0 0
        %5392 = vmatpush1.bf16.msra.mxu0 0
        %5393 = vmatprep.subr.bf16.mxu0 0
        %5394 = vmatpush1.bf16.msra.mxu0 0
        %5395 = vmatprep.subr.bf16.mxu0 0
        %5396 = vmatpush1.bf16.msra.mxu0 0
        %5397 = vmatprep.subr.bf16.mxu0 0
        %5398 = vmatpush1.bf16.msra.mxu0 0
        %5399 = vmatprep.subr.bf16.mxu0 0
        %5400 = vmatpush1.bf16.msra.mxu0 0
        %5401 = vmatprep.subr.bf16.mxu0 0
        %5402 = vmatpush1.bf16.msra.mxu0 0
        %5403 = vmatprep.mubr.bf16.mxu0 0
        %5404 = vmatmul.mubr.bf16.gmra.mrb[0].mxu0 %v5360
        %v5405 = vpop.f32.mrb[0].mxu0
        %v5406 = vadd.f32 %v5332, %v5405
        %v5407 = vpop.f32.mrb[0].mxu0
        %v5408 = vadd.f32 %v5336, %v5407
        %v5409 = vpop.f32.mrb[0].mxu0
        %v5410 = vadd.f32 %v5332, %v5409
        %v5411 = vpop.f32.mrb[0].mxu0
        %v5412 = vadd.f32 %v5336, %v5411
        %5413 = vmatprep.mubr.bf16.mxu0 0
        %5414 = vmatmul.mubr.bf16.gmra.mrb[0].mxu0 %v5363
        %v5415 = vpop.f32.mrb[0].mxu0
        %v5416 = vadd.f32 %v5332, %v5415
        %v5417 = vpop.f32.mrb[0].mxu0
        %v5418 = vadd.f32 %v5336, %v5417
        %v5419 = vpop.f32.mrb[0].mxu0
        %v5420 = vadd.f32 %v5332, %v5419
        %v5421 = vpop.f32.mrb[0].mxu0
        %v5422 = vadd.f32 %v5336, %v5421
        %5423 = vmatprep.mubr.bf16.mxu0 0
        %5424 = vmatmul.mubr.bf16.gmra.mrb[0].mxu0 %v5366
        %v5425 = vpop.f32.mrb[0].mxu0
        %v5426 = vadd.f32 %v5332, %v5425
        %v5427 = vpop.f32.mrb[0].mxu0
        %v5428 = vadd.f32 %v5336, %v5427
        %v5429 = vpop.f32.mrb[0].mxu0
        %v5430 = vadd.f32 %v5332, %v5429
        %v5431 = vpop.f32.mrb[0].mxu0
        %v5432 = vadd.f32 %v5336, %v5431
        %5433 = vmatprep.mubr.bf16.mxu0 0
        %5434 = vmatmul.mubr.bf16.gmra.mrb[0].mxu0 %v5369
        %v5435 = vpop.f32.mrb[0].mxu0
        %v5436 = vadd.f32 %v5332, %v5435
        %v5437 = vpop.f32.mrb[0].mxu0
        %v5438 = vadd.f32 %v5336, %v5437
        %v5439 = vpop.f32.mrb[0].mxu0
        %v5440 = vadd.f32 %v5332, %v5439
        %v5441 = vpop.f32.mrb[0].mxu0
        %v5442 = vadd.f32 %v5336, %v5441
        %5443 = vdwg.mxu0
        %v5444 = vmax.f32 %v5406, %v5408
        %5445 = vmax.xlane.f32.xlu0 %v5444
        %v5446 = vpop.xlane.xlu0 %5445
        %v5447 = vmax.f32 %v5410, %v5412
        %5448 = vmax.xlane.f32.xlu0 %v5447
        %v5449 = vpop.xlane.xlu0 %5448
        %v5450 = vmax.f32 %v5416, %v5418
        %5451 = vmax.xlane.f32.xlu0 %v5450
        %v5452 = vpop.xlane.xlu0 %5451
        %v5453 = vmax.f32 %v5420, %v5422
        %5454 = vmax.xlane.f32.xlu0 %v5453
        %v5455 = vpop.xlane.xlu0 %5454
        %v5456 = vmax.f32 %v5426, %v5428
        %5457 = vmax.xlane.f32.xlu0 %v5456
        %v5458 = vpop.xlane.xlu0 %5457
        %v5459 = vmax.f32 %v5430, %v5432
        %5460 = vmax.xlane.f32.xlu0 %v5459
        %v5461 = vpop.xlane.xlu0 %5460
        %v5462 = vmax.f32 %v5436, %v5438
        %5463 = vmax.xlane.f32.xlu0 %v5462
        %v5464 = vpop.xlane.xlu0 %5463
        %v5465 = vmax.f32 %v5440, %v5442
        %5466 = vmax.xlane.f32.xlu0 %v5465
        %v5467 = vpop.xlane.xlu0 %5466
        %v5468 = vsub.f32 %v5406, %v5446
        %v5469 = vsub.f32 %v5408, %v5446
        %v5470 = vsub.f32 %v5410, %v5449
        %v5471 = vsub.f32 %v5412, %v5449
        %v5472 = vsub.f32 %v5416, %v5452
        %v5473 = vsub.f32 %v5418, %v5452
        %v5474 = vsub.f32 %v5420, %v5455
        %v5475 = vsub.f32 %v5422, %v5455
        %v5476 = vsub.f32 %v5426, %v5458
        %v5477 = vsub.f32 %v5428, %v5458
        %v5478 = vsub.f32 %v5430, %v5461
        %v5479 = vsub.f32 %v5432, %v5461
        %v5480 = vsub.f32 %v5436, %v5464
        %v5481 = vsub.f32 %v5438, %v5464
        %v5482 = vsub.f32 %v5440, %v5467
        %v5483 = vsub.f32 %v5442, %v5467
        %v5484 = vmul.f32 %v5468, 1.442695
        %v5485 = vpow.pop %v5484
        %v5486 = vmul.f32 %v5469, 1.442695
        %v5487 = vpow.pop %v5486
        %v5488 = vmul.f32 %v5470, 1.442695
        %v5489 = vpow.pop %v5488
        %v5490 = vmul.f32 %v5471, 1.442695
        %v5491 = vpow.pop %v5490
        %v5492 = vmul.f32 %v5472, 1.442695
        %v5493 = vpow.pop %v5492
        %v5494 = vmul.f32 %v5473, 1.442695
        %v5495 = vpow.pop %v5494
        %v5496 = vmul.f32 %v5474, 1.442695
        %v5497 = vpow.pop %v5496
        %v5498 = vmul.f32 %v5475, 1.442695
        %v5499 = vpow.pop %v5498
        %v5500 = vmul.f32 %v5476, 1.442695
        %v5501 = vpow.pop %v5500
        %v5502 = vmul.f32 %v5477, 1.442695
        %v5503 = vpow.pop %v5502
        %v5504 = vmul.f32 %v5478, 1.442695
        %v5505 = vpow.pop %v5504
        %v5506 = vmul.f32 %v5479, 1.442695
        %v5507 = vpow.pop %v5506
        %v5508 = vmul.f32 %v5480, 1.442695
        %v5509 = vpow.pop %v5508
        %v5510 = vmul.f32 %v5481, 1.442695
        %v5511 = vpow.pop %v5510
        %v5512 = vmul.f32 %v5482, 1.442695
        %v5513 = vpow.pop %v5512
        %v5514 = vmul.f32 %v5483, 1.442695
        %v5515 = vpow.pop %v5514
        %v5516 = vadd.f32 %v5485, %v5487
        %5517 = vadd.xlane.f32.xlu0 %v5516
        %v5518 = vpop.xlane.xlu0 %5517
        %v5519 = vadd.f32 %v5489, %v5491
        %5520 = vadd.xlane.f32.xlu0 %v5519
        %v5521 = vpop.xlane.xlu0 %5520
        %v5522 = vadd.f32 %v5493, %v5495
        %5523 = vadd.xlane.f32.xlu0 %v5522
        %v5524 = vpop.xlane.xlu0 %5523
        %v5525 = vadd.f32 %v5497, %v5499
        %5526 = vadd.xlane.f32.xlu0 %v5525
        %v5527 = vpop.xlane.xlu0 %5526
        %v5528 = vadd.f32 %v5501, %v5503
        %5529 = vadd.xlane.f32.xlu0 %v5528
        %v5530 = vpop.xlane.xlu0 %5529
        %v5531 = vadd.f32 %v5505, %v5507
        %5532 = vadd.xlane.f32.xlu0 %v5531
        %v5533 = vpop.xlane.xlu0 %5532
        %v5534 = vadd.f32 %v5509, %v5511
        %5535 = vadd.xlane.f32.xlu0 %v5534
        %v5536 = vpop.xlane.xlu0 %5535
        %v5537 = vadd.f32 %v5513, %v5515
        %5538 = vadd.xlane.f32.xlu0 %v5537
        %v5539 = vpop.xlane.xlu0 %5538
        %v5540 = vlog2.pop %v5518
        %v5541 = vmul.f32 %v5540, 0.6931472
        %v5542 = vlog2.pop %v5521
        %v5543 = vmul.f32 %v5542, 0.6931472
        %v5544 = vlog2.pop %v5524
        %v5545 = vmul.f32 %v5544, 0.6931472
        %v5546 = vlog2.pop %v5527
        %v5547 = vmul.f32 %v5546, 0.6931472
        %v5548 = vlog2.pop %v5530
        %v5549 = vmul.f32 %v5548, 0.6931472
        %v5550 = vlog2.pop %v5533
        %v5551 = vmul.f32 %v5550, 0.6931472
        %v5552 = vlog2.pop %v5536
        %v5553 = vmul.f32 %v5552, 0.6931472
        %v5554 = vlog2.pop %v5539
        %v5555 = vmul.f32 %v5554, 0.6931472
        %v5556 = vsub.f32 %v5468, %v5541
        %v5557 = vsub.f32 %v5469, %v5541
        %v5558 = vsub.f32 %v5470, %v5543
        %v5559 = vsub.f32 %v5471, %v5543
        %v5560 = vsub.f32 %v5472, %v5545
        %v5561 = vsub.f32 %v5473, %v5545
        %v5562 = vsub.f32 %v5474, %v5547
        %v5563 = vsub.f32 %v5475, %v5547
        %v5564 = vsub.f32 %v5476, %v5549
        %v5565 = vsub.f32 %v5477, %v5549
        %v5566 = vsub.f32 %v5478, %v5551
        %v5567 = vsub.f32 %v5479, %v5551
        %v5568 = vsub.f32 %v5480, %v5553
        %v5569 = vsub.f32 %v5481, %v5553
        %v5570 = vsub.f32 %v5482, %v5555
        %v5571 = vsub.f32 %v5483, %v5555
        %5572 = vst [vmem:[%s375] sm:$0xff] %v5556
        %5573 = vst [vmem:[%s375 + $0x8] sm:$0xff] %v5557
        %5574 = vst [vmem:[%s375 + $0x10] sm:$0xff] %v5558
        %5575 = vst [vmem:[%s375 + $0x18] sm:$0xff] %v5559
        %5576 = vst [vmem:[%s375 + $0x20] sm:$0xff] %v5560
        %5577 = vst [vmem:[%s375 + $0x28] sm:$0xff] %v5561
        %5578 = vst [vmem:[%s375 + $0x30] sm:$0xff] %v5562
        %5579 = vst [vmem:[%s375 + $0x38] sm:$0xff] %v5563
        %5580 = vst [vmem:[%s375 + $0x40] sm:$0xff] %v5564
        %5581 = vst [vmem:[%s375 + $0x48] sm:$0xff] %v5565
        %5582 = vst [vmem:[%s375 + $0x50] sm:$0xff] %v5566
        %5583 = vst [vmem:[%s375 + $0x58] sm:$0xff] %v5567
        %5584 = vst [vmem:[%s375 + $0x60] sm:$0xff] %v5568
        %5585 = vst [vmem:[%s375 + $0x68] sm:$0xff] %v5569
        %5586 = vst [vmem:[%s375 + $0x70] sm:$0xff] %v5570
        %5587 = vst [vmem:[%s375 + $0x78] sm:$0xff] %v5571
        %v5588 = vsel %vm1463, %v4879, %v4937
        %v5589 = vsel %vm1463, %v4880, %v4940
        %v5590 = vsel %vm1463, %v4881, %v4943
        %v5591 = vsel %vm1463, %v4882, %v4946
        %v5592 = vsel %vm1463, %v4883, %v4949
        %v5593 = vsel %vm1463, %v4884, %v4952
        %v5594 = vsel %vm1463, %v4885, %v4955
        %v5595 = vsel %vm1463, %v4886, %v4958
        %vm5596 = vcmask 138240
        %v5597 = vsel %vm5596, %v5588, 0.0
        %v5598 = vsel %vm5596, %v5589, 0.0
        %v5599 = vsel %vm5596, %v5590, 0.0
        %v5600 = vsel %vm5596, %v5591, 0.0
        %v5601 = vsel %vm5596, %v5592, 0.0
        %v5602 = vsel %vm5596, %v5593, 0.0
        %v5603 = vsel %vm5596, %v5594, 0.0
        %v5604 = vsel %vm5596, %v5595, 0.0
        %5605 = vst [vmem:[%s382] sm:$0xff] %v5597
        %5606 = vst [vmem:[%s382 + $0x8] sm:$0xff] %v5598
        %5607 = vst [vmem:[%s382 + $0x10] sm:$0xff] %v5599
        %5608 = vst [vmem:[%s382 + $0x18] sm:$0xff] %v5600
        %5609 = vst [vmem:[%s382 + $0x20] sm:$0xff] %v5601
        %5610 = vst [vmem:[%s382 + $0x28] sm:$0xff] %v5602
        %5611 = vst [vmem:[%s382 + $0x30] sm:$0xff] %v5603
        %5612 = vst [vmem:[%s382 + $0x38] sm:$0xff] %v5604
        %s5613 = sand.u32 %s235, 1
        %s5614 = scalar_lea.sflag [#allocation3], %s5613
        %s5615 = sand.u32 %s235, 1
        %s5616 = smul.addr %s5615, 128
        %s5617 = scalar_lea.vmem [#allocation2], %s5616
        %s5618 = sand.u32 %s261, 1
        %s5619 = scalar_lea.sflag [#allocation5], %s5618
        %s5620 = sand.u32 %s261, 1
        %s5621 = smul.addr %s5620, 64
        %s5622 = scalar_lea.vmem [#allocation4], %s5621
        // Predicated region
        $region57: #{tpu_custom_call.1} parent=55 // pred_check
          %p5623 = pneg %p245
        $region58: #{tpu_custom_call.1} parent=55 // pred_check_branch
          %5625 = sbr.rel (%p5623) target = $region60
        $region59: #{tpu_custom_call.1} parent=55 // pred_region
          %s5626 = smul.u32 8, %s28
          %s5628 = ssub.s32 2048, 2048
          %5629 = vsyncadd %s5614, %s5628
          %s5630 = smul.addr %s5626, 2
          %s5631 = smul.addr %s5630, 128
          %s5632 = scalar_lea.hbm %s9, %s5631
          %s5633 = sshll.u32 %s5617, 4
          %s5634 = int_to_ptr.vmem [resolvable:$true] %s5633
          %5639 = dma.vmem_to_hbm [thread:$0]  %s5634, 2048, %s5632, %s5614, 256, 256, 16
        $region60: #{tpu_custom_call.1} parent=55 // pred_fallthru
          _
        // Predicated region
        $region61: #{tpu_custom_call.1} parent=55 // pred_check
          %p5640 = pneg %p271
        $region62: #{tpu_custom_call.1} parent=55 // pred_check_branch
          %5642 = sbr.rel (%p5640) target = $region64
        $region63: #{tpu_custom_call.1} parent=55 // pred_region
          %s5643 = smul.u32 8, %s28
          %s5645 = ssub.s32 1024, 1024
          %5646 = vsyncadd %s5619, %s5645
          %s5647 = smul.addr %s5643, 128
          %s5648 = scalar_lea.hbm %s10, %s5647
          %s5649 = sshll.u32 %s5622, 4
          %s5650 = int_to_ptr.vmem [resolvable:$true] %s5649
          %5655 = dma.vmem_to_hbm [thread:$0]  %s5650, 1024, %s5648, %s5619, 128, 128, 8
        $region64: #{tpu_custom_call.1} parent=55 // pred_fallthru
          _
      $region56: #{tpu_custom_call.1} parent=5 // pred_fallthru
        _
      %p5656 = scmp.le.s32.totalorder 2, %s23
      // Predicated region
      $region65: #{tpu_custom_call.1} parent=5 // pred_check
        %p5657 = pneg %p5656
      $region66: #{tpu_custom_call.1} parent=5 // pred_check_branch
        %5659 = sbr.rel (%p5657) target = $region68
      $region67: #{tpu_custom_call.1} parent=5 // pred_region
        %s5660 = ssub.s32 %s23, 2
        // Predicated region
        $region69: #{tpu_custom_call.1} parent=67 // pred_check
          %p5661 = pneg %p251
        $region70: #{tpu_custom_call.1} parent=67 // pred_check_branch
          %5663 = sbr.rel (%p5661) target = $region72
        $region71: #{tpu_custom_call.1} parent=67 // pred_region
          %s5664 = sand.u32 %s236, 1
          %s5665 = scalar_lea.sflag [#allocation3], %s5664
          %s5666 = sand.u32 %s236, 1
          %s5667 = smul.addr %s5666, 128
          %s5668 = scalar_lea.vmem [#allocation2], %s5667
          %5669 = dma.done %s5665, 2048
        $region72: #{tpu_custom_call.1} parent=67 // pred_fallthru
          _
        // Predicated region
        $region73: #{tpu_custom_call.1} parent=67 // pred_check
          %p5670 = pneg %p277
        $region74: #{tpu_custom_call.1} parent=67 // pred_check_branch
          %5672 = sbr.rel (%p5670) target = $region76
        $region75: #{tpu_custom_call.1} parent=67 // pred_region
          %s5673 = sand.u32 %s262, 1
          %s5674 = scalar_lea.sflag [#allocation5], %s5673
          %s5675 = sand.u32 %s262, 1
          %s5676 = smul.addr %s5675, 64
          %s5677 = scalar_lea.vmem [#allocation4], %s5676
          %5678 = dma.done %s5674, 1024
        $region76: #{tpu_custom_call.1} parent=67 // pred_fallthru
          _
      $region68: #{tpu_custom_call.1} parent=5 // pred_fallthru
        _
    $region6: #{tpu_custom_call.1} parent=1 // loop_footer
      %s27 = sadd.s32 1, %s23
    $region7: #{tpu_custom_call.1} parent=1 // loop_footer_branch
      %22 = sbr.rel target = $region3
    $region8: #{tpu_custom_call.1} parent=1 // loop_exit
      _
    %5679 = vsyncpa [#allocation3], 1
    %s5680 = scalar_lea.sflag [#allocation3], 1
    %5681 = vsyncpa %s5680, 1
    %5682 = vsyncpa [#allocation5], 1
    %s5683 = scalar_lea.sflag [#allocation5], 1
    %5684 = vsyncpa %s5683, 1

</llo_original>
